<compile_context>
chip_gen: v5e
topology: v5e:2x2
jax: 0.10.0
libtpu: 0.0.40
codegen_flags: <defaults>
</compile_context>

<pallas_src>
import jax
import jax.numpy as jnp
import numpy as np
from jax import lax
from jax.experimental import pallas as pl
from jax.experimental.pallas import tpu as pltpu

# ---- Model hyper-parameters (from the PyTorch module) -----------------------
N_EMBD = 256
N_HEAD = 4
HEAD_SIZE = N_EMBD // N_HEAD
N_LAYER = 10
VOCAB_SIZE = 256 + 1
VOCAB_PAD = 384            # next multiple of 128 >= 257 (lane-dense kernel output)
BLOCK_SIZE = 1000
LN_EPS = 1e-5              # torch.nn.LayerNorm default
FF_HIDDEN = 4 * N_EMBD


def _pick_tile(t):
    """Largest convenient query-tile size that divides t (falls back to t)."""
    for cand in (512, 256, 128):
        if t % cand == 0:
            return cand
    return t


# ---- in-kernel helpers -------------------------------------------------------
def _layernorm(x, w, b):
    # x: (T, C); w, b: (1, C).  PyTorch LayerNorm uses biased variance.
    mu = jnp.mean(x, axis=-1, keepdims=True)
    var = jnp.mean((x - mu) ** 2, axis=-1, keepdims=True)
    return (x - mu) * lax.rsqrt(var + LN_EPS) * w + b


def _bdot(a, b):
    # bf16 operands on the MXU, f32 accumulation.
    return jnp.dot(a.astype(jnp.bfloat16), b.astype(jnp.bfloat16),
                   preferred_element_type=jnp.float32)


def _bdot_nt(a, b):
    # (M, K) x (N, K) -> (M, N), contracting last dims (avoids explicit .T).
    return lax.dot_general(a.astype(jnp.bfloat16), b.astype(jnp.bfloat16),
                           (((1,), (1,)), ((), ())),
                           preferred_element_type=jnp.float32)


# ---- Fused transformer-stack kernel (grid = (B, N_LAYER)) --------------------
def transformer_stack_kernel(x_ref,
                             ln1w_ref, ln1b_ref,
                             wqkv_ref, wproj_ref, bproj_ref,
                             ln2w_ref, ln2b_ref,
                             w1_ref, b1_ref, w2_ref, b2_ref,
                             out_ref):
    layer = pl.program_id(1)

    @pl.when(layer == 0)
    def _():
        out_ref[...] = x_ref[...]          # seed the resident activation

    x = out_ref[0]                         # (T, C) f32, resident across layers
    T, C = x.shape
    TQ = _pick_tile(T)
    n_qt = T // TQ
    # NOTE: PyTorch code scales by C**-0.5 with C = n_embd (not head_size).
    # C = 256 -> scale = 1/16 is an exact power of two, so folding it into q
    # (before the bf16 cast / score matmul) is bit-exact and cheaper than
    # scaling the (TQ, kv_len) score tile.
    scale = C ** (-0.5)

    # --- self-attention sub-block: x = x + proj(MHA(LN1(x))) ---
    xn = _layernorm(x, ln1w_ref[0], ln1b_ref[0])
    qkv = _bdot(xn, wqkv_ref[0])           # (T, 3C) f32 (fused QKV projection)
    # Cast Q/K/V to bf16 once; reused across all query tiles and heads.
    q = (qkv[:, 0 * C:1 * C] * scale).astype(jnp.bfloat16)
    k = qkv[:, 1 * C:2 * C].astype(jnp.bfloat16)
    v = qkv[:, 2 * C:3 * C].astype(jnp.bfloat16)
    wproj = wproj_ref[0]                   # (C, C) bf16
    bproj = bproj_ref[0]                   # (1, C) f32

    for qt in range(n_qt):                 # static unrolled query-tile loop
        q_lo = qt * TQ
        kv_len = q_lo + TQ                 # causal: keys [0, kv_len) only
        # mask from (TQ,1) x (1,kv_len) iotas (no (T,T) materialization)
        row = q_lo + lax.broadcasted_iota(jnp.int32, (TQ, 1), 0)
        col = lax.broadcasted_iota(jnp.int32, (1, kv_len), 1)
        causal = col <= row                # (TQ, kv_len)

        att_acc = jnp.zeros((TQ, C), jnp.float32)
        for h in range(N_HEAD):            # static, small unrolled head loop
            s = h * HEAD_SIZE
            qh = q[q_lo:q_lo + TQ, s:s + HEAD_SIZE]
            kh = k[:kv_len, s:s + HEAD_SIZE]
            vh = v[:kv_len, s:s + HEAD_SIZE]
            wei = lax.dot_general(qh, kh, (((1,), (1,)), ((), ())),
                                  preferred_element_type=jnp.float32)
            wei = jnp.where(causal, wei, -jnp.inf)
            wei = wei - jnp.max(wei, axis=-1, keepdims=True)
            p = jnp.exp(wei)
            p = p * pl.reciprocal(jnp.sum(p, axis=-1, keepdims=True), approx=True)
            oh = jnp.dot(p.astype(jnp.bfloat16), vh,
                         preferred_element_type=jnp.float32)   # (TQ, HEAD_SIZE)
            # accumulate per-head projection (no lane-axis concat of heads)
            att_acc = att_acc + _bdot(oh, wproj[s:s + HEAD_SIZE, :])
        out_ref[0, q_lo:q_lo + TQ, :] = x[q_lo:q_lo + TQ, :] + att_acc + bproj

    # --- feed-forward sub-block: x = x + W2(relu(W1(LN2(x)))) ---
    x2 = out_ref[0]
    xn2 = _layernorm(x2, ln2w_ref[0], ln2b_ref[0])
    h1 = jnp.maximum(_bdot(xn2, w1_ref[0]) + b1_ref[0], 0.0)
    ff = _bdot(h1, w2_ref[0]) + b2_ref[0]
    out_ref[0] = x2 + ff


def run_blocks(x, blk):
    B, T, C = x.shape
    L, H = N_LAYER, FF_HIDDEN

    def wmap(shape):
        return pl.BlockSpec(shape, lambda b, l: (l, 0, 0))

    in_specs = [
        pl.BlockSpec((1, T, C), lambda b, l: (b, 0, 0)),      # x
        wmap((1, 1, C)), wmap((1, 1, C)),                     # ln1 w, b
        wmap((1, C, 3 * C)),                                  # W_qkv (bf16)
        wmap((1, C, C)), wmap((1, 1, C)),                     # Wproj (bf16), bproj
        wmap((1, 1, C)), wmap((1, 1, C)),                     # ln2 w, b
        wmap((1, C, H)), wmap((1, 1, H)),                     # W1 (bf16), b1
        wmap((1, H, C)), wmap((1, 1, C)),                     # W2 (bf16), b2
    ]

    # Explicit VMEM budget: double-buffered per-layer bf16 weights + resident
    # activation blocks + attention/FFN intermediates, with headroom.
    # Capped at 48 MiB so it fits v7x's 64 MiB/TC VMEM with slack.
    tq = _pick_tile(T)
    wbytes = (C * 3 * C + C * C + C * H + H * C) * 2 + 6 * C * 4
    inter = T * (3 * C + H + 6 * C) * 4 + 4 * tq * T * 4
    vmem_limit = int(min(2 * wbytes + 4 * T * C * 4 + inter + (8 << 20), 48 << 20))

    flops = 2 * B * L * (T * C * 3 * C + T * T * C + T * C * C + 2 * T * C * H)
    cost = pl.CostEstimate(
        flops=flops,
        transcendentals=B * L * N_HEAD * T * T,
        bytes_accessed=B * L * wbytes + 2 * B * T * C * 4,
    )

    # TODO(synk): on v7x (2 TensorCores) a parallel T-tile grid axis would help
    # when B < 2; omitted here because KV must span the full (causal) prefix.
    return pl.pallas_call(
        transformer_stack_kernel,
        out_shape=jax.ShapeDtypeStruct((B, T, C), jnp.float32),
        grid_spec=pltpu.PrefetchScalarGridSpec(
            num_scalar_prefetch=0,
            grid=(B, L),                                      # layer axis innermost
            in_specs=in_specs,
            out_specs=pl.BlockSpec((1, T, C), lambda b, l: (b, 0, 0)),
        ),
        compiler_params=pltpu.CompilerParams(
            dimension_semantics=("parallel", "arbitrary"),
            vmem_limit_bytes=vmem_limit,
        ),
        cost_estimate=cost,
    )(x,
      blk["ln1_w"], blk["ln1_b"],
      blk["w_qkv"], blk["w_proj"], blk["b_proj"],
      blk["ln2_w"], blk["ln2_b"],
      blk["w1"], blk["b1"], blk["w2"], blk["b2"])


# ---- Final LayerNorm + lm_head kernel (tiled over B and T) --------------------
def lm_head_kernel(x_ref, lnw_ref, lnb_ref, w_ref, b_ref, out_ref):
    x = x_ref[0]                                   # (TT, C)
    xn = _layernorm(x, lnw_ref[...], lnb_ref[...])
    out_ref[0] = _bdot(xn, w_ref[...]) + b_ref[...]


def run_lm_head(x, lnw, lnb, w, b):
    B, T, C = x.shape
    V = w.shape[1]
    TT = _pick_tile(T)
    nt = T // TT
    in_specs = [
        pl.BlockSpec((1, TT, C), lambda bi, ti: (bi, ti, 0)),
        pl.BlockSpec((1, C), lambda bi, ti: (0, 0)),
        pl.BlockSpec((1, C), lambda bi, ti: (0, 0)),
        pl.BlockSpec((C, V), lambda bi, ti: (0, 0)),
        pl.BlockSpec((1, V), lambda bi, ti: (0, 0)),
    ]
    vmem_limit = int(min(2 * C * V * 2 + 4 * TT * (C + V) * 4 + (8 << 20), 48 << 20))
    cost = pl.CostEstimate(flops=2 * B * T * C * V, transcendentals=0,
                           bytes_accessed=B * T * (C + V) * 4 + C * V * 2)
    return pl.pallas_call(
        lm_head_kernel,
        out_shape=jax.ShapeDtypeStruct((B, T, V), jnp.float32),
        grid_spec=pltpu.PrefetchScalarGridSpec(
            num_scalar_prefetch=0,
            grid=(B, nt),
            in_specs=in_specs,
            out_specs=pl.BlockSpec((1, TT, V), lambda bi, ti: (bi, ti, 0)),
        ),
        compiler_params=pltpu.CompilerParams(
            dimension_semantics=("parallel", "parallel"),
            vmem_limit_bytes=vmem_limit,
        ),
        cost_estimate=cost,
    )(x, lnw, lnb, w, b)


# ---- deterministic parameter initialization ----------------------------------
def init_params(key):
    counter = [0]

    def randn(shape, scale=0.02, dtype=jnp.float32):
        counter[0] += 1
        k = jax.random.fold_in(key, counter[0])
        return (jax.random.normal(k, shape, dtype=jnp.float32) * scale).astype(dtype)

    L, C, H = N_LAYER, N_EMBD, FF_HIDDEN
    params = {
        "tok_emb": randn((VOCAB_SIZE, C)),
        "pos_emb": randn((BLOCK_SIZE, C)),
        "ln_f_w": jnp.ones((1, C), jnp.float32),
        "ln_f_b": jnp.zeros((1, C), jnp.float32),
    }
    # lm_head padded to VOCAB_PAD zero columns for a lane-dense kernel output.
    w_lm = randn((C, VOCAB_SIZE))
    b_lm = randn((1, VOCAB_SIZE))
    params["lm_w"] = jnp.pad(w_lm, ((0, 0), (0, VOCAB_PAD - VOCAB_SIZE))).astype(jnp.bfloat16)
    params["lm_b"] = jnp.pad(b_lm, ((0, 0), (0, VOCAB_PAD - VOCAB_SIZE)))

    # Per-layer weights stacked on a leading L axis; matmul weights in bf16.
    params["blocks"] = {
        "ln1_w": jnp.ones((L, 1, C), jnp.float32),
        "ln1_b": jnp.zeros((L, 1, C), jnp.float32),
        "w_qkv": randn((L, C, 3 * C), dtype=jnp.bfloat16),   # [Wq | Wk | Wv]
        "w_proj": randn((L, C, C), dtype=jnp.bfloat16),
        "b_proj": randn((L, 1, C)),
        "ln2_w": jnp.ones((L, 1, C), jnp.float32),
        "ln2_b": jnp.zeros((L, 1, C), jnp.float32),
        "w1": randn((L, C, H), dtype=jnp.bfloat16),
        "b1": randn((L, 1, H)),
        "w2": randn((L, H, C), dtype=jnp.bfloat16),
        "b2": randn((L, 1, C)),
    }
    return params


# ---- full forward (Pallas) ----------------------------------------------------
def forward(idx, params):
    B, T = idx.shape
    tok_emb = params["tok_emb"][idx]               # (B, T, C) gather (glue)
    pos_emb = params["pos_emb"][:T]                # (T, C)
    x = (tok_emb + pos_emb).astype(jnp.float32)
    x = run_blocks(x, params["blocks"])            # one fused call for all layers
    logits_pad = run_lm_head(x, params["ln_f_w"], params["ln_f_b"],
                             params["lm_w"], params["lm_b"])
    return logits_pad[..., :VOCAB_SIZE]


# ---- pure-JAX reference (same mixed-precision semantics) ----------------------
def reference_forward(idx, params):
    def ln(x, w, b):
        mu = x.mean(-1, keepdims=True)
        var = ((x - mu) ** 2).mean(-1, keepdims=True)
        return (x - mu) / jnp.sqrt(var + LN_EPS) * w + b

    def bdot(a, w, eq):
        return jnp.einsum(eq, a.astype(jnp.bfloat16), w.astype(jnp.bfloat16),
                          preferred_element_type=jnp.float32)

    B, T = idx.shape
    blk = params["blocks"]
    x = (params["tok_emb"][idx] + params["pos_emb"][:T]).astype(jnp.float32)
    mask = jnp.tril(jnp.ones((T, T), bool))
    for l in range(N_LAYER):
        xn = ln(x, blk["ln1_w"][l], blk["ln1_b"][l])
        qkv = bdot(xn, blk["w_qkv"][l], "btc,cd->btd")
        q, k, v = (qkv[..., :N_EMBD], qkv[..., N_EMBD:2 * N_EMBD],
                   qkv[..., 2 * N_EMBD:])
        outs = []
        for h in range(N_HEAD):
            s = h * HEAD_SIZE
            qh, kh, vh = (q[..., s:s + HEAD_SIZE], k[..., s:s + HEAD_SIZE],
                          v[..., s:s + HEAD_SIZE])
            wei = bdot(qh, kh, "btd,bsd->bts") * (N_EMBD ** -0.5)
            wei = jnp.where(mask, wei, -jnp.inf)
            p = jax.nn.softmax(wei, axis=-1)
            outs.append(bdot(p, vh, "bts,bsd->btd"))
        att = bdot(jnp.concatenate(outs, -1), blk["w_proj"][l],
                   "btc,cd->btd") + blk["b_proj"][l]
        x = x + att
        xn2 = ln(x, blk["ln2_w"][l], blk["ln2_b"][l])
        h1 = jnp.maximum(bdot(xn2, blk["w1"][l], "btc,ch->bth") + blk["b1"][l], 0.0)
        x = x + bdot(h1, blk["w2"][l], "bth,hc->btc") + blk["b2"][l]
    x = ln(x, params["ln_f_w"], params["ln_f_b"])
    logits = bdot(x, params["lm_w"], "btc,cv->btv") + params["lm_b"]
    return logits[..., :VOCAB_SIZE]


if __name__ == "__main__":
    key = jax.random.PRNGKey(0)
    pkey, ikey = jax.random.split(key)
    params = init_params(pkey)

    B, T = 2, 8                                    # small shapes (T <= block_size)
    idx = jax.random.randint(ikey, (B, T), 0, VOCAB_SIZE, dtype=jnp.int32)

    logits = jax.block_until_ready(forward(idx, params))
    assert logits.shape == (B, T, VOCAB_SIZE) and logits.dtype == jnp.float32

    ref = jax.block_until_ready(reference_forward(idx, params))
    np.testing.assert_allclose(np.asarray(logits), np.asarray(ref),
                               atol=2e-2, rtol=2e-2)

    print("KERNEL_OK")
</pallas_src>

<mosaic_0001>
module attributes {stable_mosaic.version = 11 : i64} {
  func.func @transformer_stack_kernel(%arg0: i32, %arg1: i32, %arg2: memref<1x8x256xf32, #tpu.memory_space<vmem>>, %arg3: memref<1x1x256xf32, #tpu.memory_space<vmem>>, %arg4: memref<1x1x256xf32, #tpu.memory_space<vmem>>, %arg5: memref<1x256x768xbf16, #tpu.memory_space<vmem>>, %arg6: memref<1x256x256xbf16, #tpu.memory_space<vmem>>, %arg7: memref<1x1x256xf32, #tpu.memory_space<vmem>>, %arg8: memref<1x1x256xf32, #tpu.memory_space<vmem>>, %arg9: memref<1x1x256xf32, #tpu.memory_space<vmem>>, %arg10: memref<1x256x1024xbf16, #tpu.memory_space<vmem>>, %arg11: memref<1x1x1024xf32, #tpu.memory_space<vmem>>, %arg12: memref<1x1024x256xbf16, #tpu.memory_space<vmem>>, %arg13: memref<1x1x256xf32, #tpu.memory_space<vmem>>, %arg14: memref<1x8x256xf32, #tpu.memory_space<vmem>>) attributes {dimension_semantics = [#tpu.dimension_semantics<parallel>, #tpu.dimension_semantics<arbitrary>], iteration_bounds = array<i64: 2, 10>, scalar_prefetch = 0 : i64, scratch_operands = 0 : i64, tpu.core_type = #tpu.core_type<tc>, window_params = [{transform_indices = @transform_0, window_bounds = array<i64: 1, 8, 256>}, {transform_indices = @transform_1, window_bounds = array<i64: 1, 1, 256>}, {transform_indices = @transform_2, window_bounds = array<i64: 1, 1, 256>}, {transform_indices = @transform_3, window_bounds = array<i64: 1, 256, 768>}, {transform_indices = @transform_4, window_bounds = array<i64: 1, 256, 256>}, {transform_indices = @transform_5, window_bounds = array<i64: 1, 1, 256>}, {transform_indices = @transform_6, window_bounds = array<i64: 1, 1, 256>}, {transform_indices = @transform_7, window_bounds = array<i64: 1, 1, 256>}, {transform_indices = @transform_8, window_bounds = array<i64: 1, 256, 1024>}, {transform_indices = @transform_9, window_bounds = array<i64: 1, 1, 1024>}, {transform_indices = @transform_10, window_bounds = array<i64: 1, 1024, 256>}, {transform_indices = @transform_11, window_bounds = array<i64: 1, 1, 256>}, {transform_indices = @transform_12, window_bounds = array<i64: 1, 8, 256>}]} {
    %c0_i32 = arith.constant 0 : i32
    %0 = arith.cmpi eq, %arg1, %c0_i32 : i32
    %1 = arith.extui %0 : i1 to i32
    %c0_i32_0 = arith.constant 0 : i32
    %2 = arith.cmpi ne, %1, %c0_i32_0 : i32
    scf.if %2 {
      %c0_85 = arith.constant 0 : index
      %c0_86 = arith.constant 0 : index
      %c0_87 = arith.constant 0 : index
      %199 = vector.load %arg2[%c0_85, %c0_86, %c0_87] : memref<1x8x256xf32, #tpu.memory_space<vmem>>, vector<1x8x256xf32>
      %c0_88 = arith.constant 0 : index
      %c0_89 = arith.constant 0 : index
      %c0_90 = arith.constant 0 : index
      %200 = vector.load %arg14[%c0_88, %c0_89, %c0_90] : memref<1x8x256xf32, #tpu.memory_space<vmem>>, vector<1x8x256xf32>
      tpu.vector_store %arg14[%c0_88, %c0_89, %c0_90], %199 {strides = array<i32>} : memref<1x8x256xf32, #tpu.memory_space<vmem>>, vector<1x8x256xf32>,
    } else {
    }
    %c0 = arith.constant 0 : index
    %c0_1 = arith.constant 0 : index
    %c0_2 = arith.constant 0 : index
    %3 = vector.load %arg14[%c0, %c0_1, %c0_2] : memref<1x8x256xf32, #tpu.memory_space<vmem>>, vector<1x8x256xf32>
    %4 = vector.shape_cast %3 : vector<1x8x256xf32> to vector<8x256xf32>
    %c0_3 = arith.constant 0 : index
    %c0_4 = arith.constant 0 : index
    %c0_5 = arith.constant 0 : index
    %5 = vector.load %arg3[%c0_3, %c0_4, %c0_5] : memref<1x1x256xf32, #tpu.memory_space<vmem>>, vector<1x1x256xf32>
    %6 = vector.shape_cast %5 : vector<1x1x256xf32> to vector<1x256xf32>
    %c0_6 = arith.constant 0 : index
    %c0_7 = arith.constant 0 : index
    %c0_8 = arith.constant 0 : index
    %7 = vector.load %arg4[%c0_6, %c0_7, %c0_8] : memref<1x1x256xf32, #tpu.memory_space<vmem>>, vector<1x1x256xf32>
    %8 = vector.shape_cast %7 : vector<1x1x256xf32> to vector<1x256xf32>
    %cst = arith.constant dense<0.000000e+00> : vector<8xf32>
    %9 = vector.multi_reduction <add>, %4, %cst [1] : vector<8x256xf32> to vector<8xf32>
    %10 = vector.shape_cast %9 : vector<8xf32> to vector<8x1xf32>
    %cst_9 = arith.constant 2.560000e+02 : f32
    %11 = vector.broadcast %cst_9 : f32 to vector<8x1xf32>
    %12 = arith.divf %10, %11 : vector<8x1xf32>
    %13 = vector.broadcast %12 : vector<8x1xf32> to vector<8x256xf32>
    %14 = arith.subf %4, %13 : vector<8x256xf32>
    %15 = arith.mulf %14, %14 : vector<8x256xf32>
    %cst_10 = arith.constant dense<0.000000e+00> : vector<8xf32>
    %16 = vector.multi_reduction <add>, %15, %cst_10 [1] : vector<8x256xf32> to vector<8xf32>
    %17 = vector.shape_cast %16 : vector<8xf32> to vector<8x1xf32>
    %cst_11 = arith.constant 2.560000e+02 : f32
    %18 = vector.broadcast %cst_11 : f32 to vector<8x1xf32>
    %19 = arith.divf %17, %18 : vector<8x1xf32>
    %20 = vector.broadcast %12 : vector<8x1xf32> to vector<8x256xf32>
    %21 = arith.subf %4, %20 : vector<8x256xf32>
    %cst_12 = arith.constant 9.99999974E-6 : f32
    %22 = vector.broadcast %cst_12 : f32 to vector<8x1xf32>
    %23 = arith.addf %19, %22 : vector<8x1xf32>
    %24 = math.rsqrt %23 : vector<8x1xf32>
    %25 = vector.broadcast %24 : vector<8x1xf32> to vector<8x256xf32>
    %26 = arith.mulf %21, %25 : vector<8x256xf32>
    %27 = vector.broadcast %6 : vector<1x256xf32> to vector<8x256xf32>
    %28 = arith.mulf %26, %27 : vector<8x256xf32>
    %29 = vector.broadcast %8 : vector<1x256xf32> to vector<8x256xf32>
    %30 = arith.addf %28, %29 : vector<8x256xf32>
    %c0_13 = arith.constant 0 : index
    %c0_14 = arith.constant 0 : index
    %c0_15 = arith.constant 0 : index
    %31 = vector.load %arg5[%c0_13, %c0_14, %c0_15] : memref<1x256x768xbf16, #tpu.memory_space<vmem>>, vector<1x256x768xbf16>
    %32 = vector.shape_cast %31 : vector<1x256x768xbf16> to vector<256x768xbf16>
    %33 = arith.truncf %30 : vector<8x256xf32> to vector<8x256xbf16>
    %cst_16 = arith.constant dense<0.000000e+00> : vector<8x768xf32>
    %34 = tpu.matmul %33, %32, %cst_16 {dimension_numbers = #tpu.dot_dimension_numbers<[1], [0], [0], [1], [0, 0, 1, 1], [], []>} : vector<8x256xbf16>, vector<256x768xbf16>, vector<8x768xf32> -> vector<8x768xf32>
    %35 = vector.extract_strided_slice %34 {offsets = [0, 0], sizes = [8, 256], strides = [1, 1]} : vector<8x768xf32> to vector<8x256xf32>
    %cst_17 = arith.constant 6.250000e-02 : f32
    %36 = vector.broadcast %cst_17 : f32 to vector<8x256xf32>
    %37 = arith.mulf %35, %36 : vector<8x256xf32>
    %38 = arith.truncf %37 : vector<8x256xf32> to vector<8x256xbf16>
    %39 = vector.extract_strided_slice %34 {offsets = [0, 256], sizes = [8, 256], strides = [1, 1]} : vector<8x768xf32> to vector<8x256xf32>
    %40 = arith.truncf %39 : vector<8x256xf32> to vector<8x256xbf16>
    %41 = vector.extract_strided_slice %34 {offsets = [0, 512], sizes = [8, 256], strides = [1, 1]} : vector<8x768xf32> to vector<8x256xf32>
    %42 = arith.truncf %41 : vector<8x256xf32> to vector<8x256xbf16>
    %c0_18 = arith.constant 0 : index
    %c0_19 = arith.constant 0 : index
    %c0_20 = arith.constant 0 : index
    %43 = vector.load %arg6[%c0_18, %c0_19, %c0_20] : memref<1x256x256xbf16, #tpu.memory_space<vmem>>, vector<1x256x256xbf16>
    %44 = vector.shape_cast %43 : vector<1x256x256xbf16> to vector<256x256xbf16>
    %c0_21 = arith.constant 0 : index
    %c0_22 = arith.constant 0 : index
    %c0_23 = arith.constant 0 : index
    %45 = vector.load %arg7[%c0_21, %c0_22, %c0_23] : memref<1x1x256xf32, #tpu.memory_space<vmem>>, vector<1x1x256xf32>
    %46 = vector.shape_cast %45 : vector<1x1x256xf32> to vector<1x256xf32>
    %47 = tpu.iota {dimensions = array<i32: 0>} : vector<8x1xi32>
    %c0_i32_24 = arith.constant 0 : i32
    %48 = vector.broadcast %c0_i32_24 : i32 to vector<8x1xi32>
    %49 = arith.addi %48, %47 : vector<8x1xi32>
    %50 = tpu.iota {dimensions = array<i32: 1>} : vector<1x8xi32>
    %51 = vector.broadcast %50 : vector<1x8xi32> to vector<8x8xi32>
    %52 = vector.broadcast %49 : vector<8x1xi32> to vector<8x8xi32>
    %53 = arith.cmpi sle, %51, %52 : vector<8x8xi32>
    %cst_25 = arith.constant 0.000000e+00 : f32
    %54 = vector.broadcast %cst_25 : f32 to vector<8x256xf32>
    %55 = vector.extract_strided_slice %38 {offsets = [0, 0], sizes = [8, 64], strides = [1, 1]} : vector<8x256xbf16> to vector<8x64xbf16>
    %56 = vector.extract_strided_slice %40 {offsets = [0, 0], sizes = [8, 64], strides = [1, 1]} : vector<8x256xbf16> to vector<8x64xbf16>
    %57 = vector.extract_strided_slice %42 {offsets = [0, 0], sizes = [8, 64], strides = [1, 1]} : vector<8x256xbf16> to vector<8x64xbf16>
    %cst_26 = arith.constant dense<0.000000e+00> : vector<8x8xf32>
    %58 = tpu.matmul %55, %56, %cst_26 {dimension_numbers = #tpu.dot_dimension_numbers<[1], [1], [0], [0], [0, 0, 1, 0], [], []>} : vector<8x64xbf16>, vector<8x64xbf16>, vector<8x8xf32> -> vector<8x8xf32>
    %cst_27 = arith.constant 0xFF800000 : f32
    %59 = vector.broadcast %cst_27 : f32 to vector<8x8xf32>
    %60 = arith.select %53, %58, %59 : vector<8x8xi1>, vector<8x8xf32>
    %cst_28 = arith.constant dense<0xFF800000> : vector<8xf32>
    %61 = vector.multi_reduction <maximumf>, %60, %cst_28 [1] : vector<8x8xf32> to vector<8xf32>
    %62 = vector.shape_cast %61 : vector<8xf32> to vector<8x1xf32>
    %63 = vector.broadcast %62 : vector<8x1xf32> to vector<8x8xf32>
    %64 = arith.subf %60, %63 : vector<8x8xf32>
    %65 = math.exp %64 : vector<8x8xf32>
    %cst_29 = arith.constant dense<0.000000e+00> : vector<8xf32>
    %66 = vector.multi_reduction <add>, %65, %cst_29 [1] : vector<8x8xf32> to vector<8xf32>
    %67 = vector.shape_cast %66 : vector<8xf32> to vector<8x1xf32>
    %68 = tpu.reciprocal %67 {approx = true} : vector<8x1xf32> -> vector<8x1xf32>
    %69 = vector.broadcast %68 : vector<8x1xf32> to vector<8x8xf32>
    %70 = arith.mulf %65, %69 : vector<8x8xf32>
    %71 = arith.truncf %70 : vector<8x8xf32> to vector<8x8xbf16>
    %cst_30 = arith.constant dense<0.000000e+00> : vector<8x64xf32>
    %72 = tpu.matmul %71, %57, %cst_30 {dimension_numbers = #tpu.dot_dimension_numbers<[1], [0], [0], [1], [0, 0, 1, 1], [], []>} : vector<8x8xbf16>, vector<8x64xbf16>, vector<8x64xf32> -> vector<8x64xf32>
    %73 = vector.extract_strided_slice %44 {offsets = [0, 0], sizes = [64, 256], strides = [1, 1]} : vector<256x256xbf16> to vector<64x256xbf16>
    %74 = arith.truncf %72 : vector<8x64xf32> to vector<8x64xbf16>
    %cst_31 = arith.constant dense<0.000000e+00> : vector<8x256xf32>
    %75 = tpu.matmul %74, %73, %cst_31 {dimension_numbers = #tpu.dot_dimension_numbers<[1], [0], [0], [1], [0, 0, 1, 1], [], []>} : vector<8x64xbf16>, vector<64x256xbf16>, vector<8x256xf32> -> vector<8x256xf32>
    %76 = arith.addf %54, %75 : vector<8x256xf32>
    %77 = vector.extract_strided_slice %38 {offsets = [0, 64], sizes = [8, 64], strides = [1, 1]} : vector<8x256xbf16> to vector<8x64xbf16>
    %78 = vector.extract_strided_slice %40 {offsets = [0, 64], sizes = [8, 64], strides = [1, 1]} : vector<8x256xbf16> to vector<8x64xbf16>
    %79 = vector.extract_strided_slice %42 {offsets = [0, 64], sizes = [8, 64], strides = [1, 1]} : vector<8x256xbf16> to vector<8x64xbf16>
    %cst_32 = arith.constant dense<0.000000e+00> : vector<8x8xf32>
    %80 = tpu.matmul %77, %78, %cst_32 {dimension_numbers = #tpu.dot_dimension_numbers<[1], [1], [0], [0], [0, 0, 1, 0], [], []>} : vector<8x64xbf16>, vector<8x64xbf16>, vector<8x8xf32> -> vector<8x8xf32>
    %cst_33 = arith.constant 0xFF800000 : f32
    %81 = vector.broadcast %cst_33 : f32 to vector<8x8xf32>
    %82 = arith.select %53, %80, %81 : vector<8x8xi1>, vector<8x8xf32>
    %cst_34 = arith.constant dense<0xFF800000> : vector<8xf32>
    %83 = vector.multi_reduction <maximumf>, %82, %cst_34 [1] : vector<8x8xf32> to vector<8xf32>
    %84 = vector.shape_cast %83 : vector<8xf32> to vector<8x1xf32>
    %85 = vector.broadcast %84 : vector<8x1xf32> to vector<8x8xf32>
    %86 = arith.subf %82, %85 : vector<8x8xf32>
    %87 = math.exp %86 : vector<8x8xf32>
    %cst_35 = arith.constant dense<0.000000e+00> : vector<8xf32>
    %88 = vector.multi_reduction <add>, %87, %cst_35 [1] : vector<8x8xf32> to vector<8xf32>
    %89 = vector.shape_cast %88 : vector<8xf32> to vector<8x1xf32>
    %90 = tpu.reciprocal %89 {approx = true} : vector<8x1xf32> -> vector<8x1xf32>
    %91 = vector.broadcast %90 : vector<8x1xf32> to vector<8x8xf32>
    %92 = arith.mulf %87, %91 : vector<8x8xf32>
    %93 = arith.truncf %92 : vector<8x8xf32> to vector<8x8xbf16>
    %cst_36 = arith.constant dense<0.000000e+00> : vector<8x64xf32>
    %94 = tpu.matmul %93, %79, %cst_36 {dimension_numbers = #tpu.dot_dimension_numbers<[1], [0], [0], [1], [0, 0, 1, 1], [], []>} : vector<8x8xbf16>, vector<8x64xbf16>, vector<8x64xf32> -> vector<8x64xf32>
    %95 = vector.extract_strided_slice %44 {offsets = [64, 0], sizes = [64, 256], strides = [1, 1]} : vector<256x256xbf16> to vector<64x256xbf16>
    %96 = arith.truncf %94 : vector<8x64xf32> to vector<8x64xbf16>
    %cst_37 = arith.constant dense<0.000000e+00> : vector<8x256xf32>
    %97 = tpu.matmul %96, %95, %cst_37 {dimension_numbers = #tpu.dot_dimension_numbers<[1], [0], [0], [1], [0, 0, 1, 1], [], []>} : vector<8x64xbf16>, vector<64x256xbf16>, vector<8x256xf32> -> vector<8x256xf32>
    %98 = arith.addf %76, %97 : vector<8x256xf32>
    %99 = vector.extract_strided_slice %38 {offsets = [0, 128], sizes = [8, 64], strides = [1, 1]} : vector<8x256xbf16> to vector<8x64xbf16>
    %100 = vector.extract_strided_slice %40 {offsets = [0, 128], sizes = [8, 64], strides = [1, 1]} : vector<8x256xbf16> to vector<8x64xbf16>
    %101 = vector.extract_strided_slice %42 {offsets = [0, 128], sizes = [8, 64], strides = [1, 1]} : vector<8x256xbf16> to vector<8x64xbf16>
    %cst_38 = arith.constant dense<0.000000e+00> : vector<8x8xf32>
    %102 = tpu.matmul %99, %100, %cst_38 {dimension_numbers = #tpu.dot_dimension_numbers<[1], [1], [0], [0], [0, 0, 1, 0], [], []>} : vector<8x64xbf16>, vector<8x64xbf16>, vector<8x8xf32> -> vector<8x8xf32>
    %cst_39 = arith.constant 0xFF800000 : f32
    %103 = vector.broadcast %cst_39 : f32 to vector<8x8xf32>
    %104 = arith.select %53, %102, %103 : vector<8x8xi1>, vector<8x8xf32>
    %cst_40 = arith.constant dense<0xFF800000> : vector<8xf32>
    %105 = vector.multi_reduction <maximumf>, %104, %cst_40 [1] : vector<8x8xf32> to vector<8xf32>
    %106 = vector.shape_cast %105 : vector<8xf32> to vector<8x1xf32>
    %107 = vector.broadcast %106 : vector<8x1xf32> to vector<8x8xf32>
    %108 = arith.subf %104, %107 : vector<8x8xf32>
    %109 = math.exp %108 : vector<8x8xf32>
    %cst_41 = arith.constant dense<0.000000e+00> : vector<8xf32>
    %110 = vector.multi_reduction <add>, %109, %cst_41 [1] : vector<8x8xf32> to vector<8xf32>
    %111 = vector.shape_cast %110 : vector<8xf32> to vector<8x1xf32>
    %112 = tpu.reciprocal %111 {approx = true} : vector<8x1xf32> -> vector<8x1xf32>
    %113 = vector.broadcast %112 : vector<8x1xf32> to vector<8x8xf32>
    %114 = arith.mulf %109, %113 : vector<8x8xf32>
    %115 = arith.truncf %114 : vector<8x8xf32> to vector<8x8xbf16>
    %cst_42 = arith.constant dense<0.000000e+00> : vector<8x64xf32>
    %116 = tpu.matmul %115, %101, %cst_42 {dimension_numbers = #tpu.dot_dimension_numbers<[1], [0], [0], [1], [0, 0, 1, 1], [], []>} : vector<8x8xbf16>, vector<8x64xbf16>, vector<8x64xf32> -> vector<8x64xf32>
    %117 = vector.extract_strided_slice %44 {offsets = [128, 0], sizes = [64, 256], strides = [1, 1]} : vector<256x256xbf16> to vector<64x256xbf16>
    %118 = arith.truncf %116 : vector<8x64xf32> to vector<8x64xbf16>
    %cst_43 = arith.constant dense<0.000000e+00> : vector<8x256xf32>
    %119 = tpu.matmul %118, %117, %cst_43 {dimension_numbers = #tpu.dot_dimension_numbers<[1], [0], [0], [1], [0, 0, 1, 1], [], []>} : vector<8x64xbf16>, vector<64x256xbf16>, vector<8x256xf32> -> vector<8x256xf32>
    %120 = arith.addf %98, %119 : vector<8x256xf32>
    %121 = vector.extract_strided_slice %38 {offsets = [0, 192], sizes = [8, 64], strides = [1, 1]} : vector<8x256xbf16> to vector<8x64xbf16>
    %122 = vector.extract_strided_slice %40 {offsets = [0, 192], sizes = [8, 64], strides = [1, 1]} : vector<8x256xbf16> to vector<8x64xbf16>
    %123 = vector.extract_strided_slice %42 {offsets = [0, 192], sizes = [8, 64], strides = [1, 1]} : vector<8x256xbf16> to vector<8x64xbf16>
    %cst_44 = arith.constant dense<0.000000e+00> : vector<8x8xf32>
    %124 = tpu.matmul %121, %122, %cst_44 {dimension_numbers = #tpu.dot_dimension_numbers<[1], [1], [0], [0], [0, 0, 1, 0], [], []>} : vector<8x64xbf16>, vector<8x64xbf16>, vector<8x8xf32> -> vector<8x8xf32>
    %cst_45 = arith.constant 0xFF800000 : f32
    %125 = vector.broadcast %cst_45 : f32 to vector<8x8xf32>
    %126 = arith.select %53, %124, %125 : vector<8x8xi1>, vector<8x8xf32>
    %cst_46 = arith.constant dense<0xFF800000> : vector<8xf32>
    %127 = vector.multi_reduction <maximumf>, %126, %cst_46 [1] : vector<8x8xf32> to vector<8xf32>
    %128 = vector.shape_cast %127 : vector<8xf32> to vector<8x1xf32>
    %129 = vector.broadcast %128 : vector<8x1xf32> to vector<8x8xf32>
    %130 = arith.subf %126, %129 : vector<8x8xf32>
    %131 = math.exp %130 : vector<8x8xf32>
    %cst_47 = arith.constant dense<0.000000e+00> : vector<8xf32>
    %132 = vector.multi_reduction <add>, %131, %cst_47 [1] : vector<8x8xf32> to vector<8xf32>
    %133 = vector.shape_cast %132 : vector<8xf32> to vector<8x1xf32>
    %134 = tpu.reciprocal %133 {approx = true} : vector<8x1xf32> -> vector<8x1xf32>
    %135 = vector.broadcast %134 : vector<8x1xf32> to vector<8x8xf32>
    %136 = arith.mulf %131, %135 : vector<8x8xf32>
    %137 = arith.truncf %136 : vector<8x8xf32> to vector<8x8xbf16>
    %cst_48 = arith.constant dense<0.000000e+00> : vector<8x64xf32>
    %138 = tpu.matmul %137, %123, %cst_48 {dimension_numbers = #tpu.dot_dimension_numbers<[1], [0], [0], [1], [0, 0, 1, 1], [], []>} : vector<8x8xbf16>, vector<8x64xbf16>, vector<8x64xf32> -> vector<8x64xf32>
    %139 = vector.extract_strided_slice %44 {offsets = [192, 0], sizes = [64, 256], strides = [1, 1]} : vector<256x256xbf16> to vector<64x256xbf16>
    %140 = arith.truncf %138 : vector<8x64xf32> to vector<8x64xbf16>
    %cst_49 = arith.constant dense<0.000000e+00> : vector<8x256xf32>
    %141 = tpu.matmul %140, %139, %cst_49 {dimension_numbers = #tpu.dot_dimension_numbers<[1], [0], [0], [1], [0, 0, 1, 1], [], []>} : vector<8x64xbf16>, vector<64x256xbf16>, vector<8x256xf32> -> vector<8x256xf32>
    %142 = arith.addf %120, %141 : vector<8x256xf32>
    %143 = arith.addf %4, %142 : vector<8x256xf32>
    %144 = vector.broadcast %46 : vector<1x256xf32> to vector<8x256xf32>
    %145 = arith.addf %143, %144 : vector<8x256xf32>
    %c0_50 = arith.constant 0 : index
    %c0_51 = arith.constant 0 : index
    %c0_52 = arith.constant 0 : index
    %146 = vector.load %arg14[%c0_50, %c0_51, %c0_52] : memref<1x8x256xf32, #tpu.memory_space<vmem>>, vector<1x8x256xf32>
    %147 = vector.shape_cast %146 : vector<1x8x256xf32> to vector<8x256xf32>
    %148 = vector.shape_cast %145 : vector<8x256xf32> to vector<1x8x256xf32>
    tpu.vector_store %arg14[%c0_50, %c0_51, %c0_52], %148 {strides = array<i32>} : memref<1x8x256xf32, #tpu.memory_space<vmem>>, vector<1x8x256xf32>,
    %c0_53 = arith.constant 0 : index
    %c0_54 = arith.constant 0 : index
    %c0_55 = arith.constant 0 : index
    %149 = vector.load %arg14[%c0_53, %c0_54, %c0_55] : memref<1x8x256xf32, #tpu.memory_space<vmem>>, vector<1x8x256xf32>
    %150 = vector.shape_cast %149 : vector<1x8x256xf32> to vector<8x256xf32>
    %c0_56 = arith.constant 0 : index
    %c0_57 = arith.constant 0 : index
    %c0_58 = arith.constant 0 : index
    %151 = vector.load %arg8[%c0_56, %c0_57, %c0_58] : memref<1x1x256xf32, #tpu.memory_space<vmem>>, vector<1x1x256xf32>
    %152 = vector.shape_cast %151 : vector<1x1x256xf32> to vector<1x256xf32>
    %c0_59 = arith.constant 0 : index
    %c0_60 = arith.constant 0 : index
    %c0_61 = arith.constant 0 : index
    %153 = vector.load %arg9[%c0_59, %c0_60, %c0_61] : memref<1x1x256xf32, #tpu.memory_space<vmem>>, vector<1x1x256xf32>
    %154 = vector.shape_cast %153 : vector<1x1x256xf32> to vector<1x256xf32>
    %cst_62 = arith.constant dense<0.000000e+00> : vector<8xf32>
    %155 = vector.multi_reduction <add>, %150, %cst_62 [1] : vector<8x256xf32> to vector<8xf32>
    %156 = vector.shape_cast %155 : vector<8xf32> to vector<8x1xf32>
    %cst_63 = arith.constant 2.560000e+02 : f32
    %157 = vector.broadcast %cst_63 : f32 to vector<8x1xf32>
    %158 = arith.divf %156, %157 : vector<8x1xf32>
    %159 = vector.broadcast %158 : vector<8x1xf32> to vector<8x256xf32>
    %160 = arith.subf %150, %159 : vector<8x256xf32>
    %161 = arith.mulf %160, %160 : vector<8x256xf32>
    %cst_64 = arith.constant dense<0.000000e+00> : vector<8xf32>
    %162 = vector.multi_reduction <add>, %161, %cst_64 [1] : vector<8x256xf32> to vector<8xf32>
    %163 = vector.shape_cast %162 : vector<8xf32> to vector<8x1xf32>
    %cst_65 = arith.constant 2.560000e+02 : f32
    %164 = vector.broadcast %cst_65 : f32 to vector<8x1xf32>
    %165 = arith.divf %163, %164 : vector<8x1xf32>
    %166 = vector.broadcast %158 : vector<8x1xf32> to vector<8x256xf32>
    %167 = arith.subf %150, %166 : vector<8x256xf32>
    %cst_66 = arith.constant 9.99999974E-6 : f32
    %168 = vector.broadcast %cst_66 : f32 to vector<8x1xf32>
    %169 = arith.addf %165, %168 : vector<8x1xf32>
    %170 = math.rsqrt %169 : vector<8x1xf32>
    %171 = vector.broadcast %170 : vector<8x1xf32> to vector<8x256xf32>
    %172 = arith.mulf %167, %171 : vector<8x256xf32>
    %173 = vector.broadcast %152 : vector<1x256xf32> to vector<8x256xf32>
    %174 = arith.mulf %172, %173 : vector<8x256xf32>
    %175 = vector.broadcast %154 : vector<1x256xf32> to vector<8x256xf32>
    %176 = arith.addf %174, %175 : vector<8x256xf32>
    %c0_67 = arith.constant 0 : index
    %c0_68 = arith.constant 0 : index
    %c0_69 = arith.constant 0 : index
    %177 = vector.load %arg10[%c0_67, %c0_68, %c0_69] : memref<1x256x1024xbf16, #tpu.memory_space<vmem>>, vector<1x256x1024xbf16>
    %178 = vector.shape_cast %177 : vector<1x256x1024xbf16> to vector<256x1024xbf16>
    %179 = arith.truncf %176 : vector<8x256xf32> to vector<8x256xbf16>
    %cst_70 = arith.constant dense<0.000000e+00> : vector<8x1024xf32>
    %180 = tpu.matmul %179, %178, %cst_70 {dimension_numbers = #tpu.dot_dimension_numbers<[1], [0], [0], [1], [0, 0, 1, 1], [], []>} : vector<8x256xbf16>, vector<256x1024xbf16>, vector<8x1024xf32> -> vector<8x1024xf32>
    %c0_71 = arith.constant 0 : index
    %c0_72 = arith.constant 0 : index
    %c0_73 = arith.constant 0 : index
    %181 = vector.load %arg11[%c0_71, %c0_72, %c0_73] : memref<1x1x1024xf32, #tpu.memory_space<vmem>>, vector<1x1x1024xf32>
    %182 = vector.shape_cast %181 : vector<1x1x1024xf32> to vector<1x1024xf32>
    %183 = vector.broadcast %182 : vector<1x1024xf32> to vector<8x1024xf32>
    %184 = arith.addf %180, %183 : vector<8x1024xf32>
    %cst_74 = arith.constant 0.000000e+00 : f32
    %185 = vector.broadcast %cst_74 : f32 to vector<8x1024xf32>
    %186 = arith.maximumf %184, %185 : vector<8x1024xf32>
    %c0_75 = arith.constant 0 : index
    %c0_76 = arith.constant 0 : index
    %c0_77 = arith.constant 0 : index
    %187 = vector.load %arg12[%c0_75, %c0_76, %c0_77] : memref<1x1024x256xbf16, #tpu.memory_space<vmem>>, vector<1x1024x256xbf16>
    %188 = vector.shape_cast %187 : vector<1x1024x256xbf16> to vector<1024x256xbf16>
    %189 = arith.truncf %186 : vector<8x1024xf32> to vector<8x1024xbf16>
    %cst_78 = arith.constant dense<0.000000e+00> : vector<8x256xf32>
    %190 = tpu.matmul %189, %188, %cst_78 {dimension_numbers = #tpu.dot_dimension_numbers<[1], [0], [0], [1], [0, 0, 1, 1], [], []>} : vector<8x1024xbf16>, vector<1024x256xbf16>, vector<8x256xf32> -> vector<8x256xf32>
    %c0_79 = arith.constant 0 : index
    %c0_80 = arith.constant 0 : index
    %c0_81 = arith.constant 0 : index
    %191 = vector.load %arg13[%c0_79, %c0_80, %c0_81] : memref<1x1x256xf32, #tpu.memory_space<vmem>>, vector<1x1x256xf32>
    %192 = vector.shape_cast %191 : vector<1x1x256xf32> to vector<1x256xf32>
    %193 = vector.broadcast %192 : vector<1x256xf32> to vector<8x256xf32>
    %194 = arith.addf %190, %193 : vector<8x256xf32>
    %195 = arith.addf %150, %194 : vector<8x256xf32>
    %c0_82 = arith.constant 0 : index
    %c0_83 = arith.constant 0 : index
    %c0_84 = arith.constant 0 : index
    %196 = vector.load %arg14[%c0_82, %c0_83, %c0_84] : memref<1x8x256xf32, #tpu.memory_space<vmem>>, vector<1x8x256xf32>
    %197 = vector.shape_cast %196 : vector<1x8x256xf32> to vector<8x256xf32>
    %198 = vector.shape_cast %195 : vector<8x256xf32> to vector<1x8x256xf32>
    tpu.vector_store %arg14[%c0_82, %c0_83, %c0_84], %198 {strides = array<i32>} : memref<1x8x256xf32, #tpu.memory_space<vmem>>, vector<1x8x256xf32>,
    return
  }
  func.func @transform_0(%arg0: i32, %arg1: i32) -> (i32, i32, i32) {
    %c0_i32 = arith.constant 0 : i32
    %c0_i32_0 = arith.constant 0 : i32
    %c0_i32_1 = arith.constant 0 : i32
    return %arg0, %c0_i32, %c0_i32_0 : i32, i32, i32
  }
  func.func @transform_1(%arg0: i32, %arg1: i32) -> (i32, i32, i32) {
    %c0_i32 = arith.constant 0 : i32
    %c0_i32_0 = arith.constant 0 : i32
    %c0_i32_1 = arith.constant 0 : i32
    return %arg1, %c0_i32, %c0_i32_0 : i32, i32, i32
  }
  func.func @transform_2(%arg0: i32, %arg1: i32) -> (i32, i32, i32) {
    %c0_i32 = arith.constant 0 : i32
    %c0_i32_0 = arith.constant 0 : i32
    %c0_i32_1 = arith.constant 0 : i32
    return %arg1, %c0_i32, %c0_i32_0 : i32, i32, i32
  }
  func.func @transform_3(%arg0: i32, %arg1: i32) -> (i32, i32, i32) {
    %c0_i32 = arith.constant 0 : i32
    %c0_i32_0 = arith.constant 0 : i32
    %c0_i32_1 = arith.constant 0 : i32
    return %arg1, %c0_i32, %c0_i32_0 : i32, i32, i32
  }
  func.func @transform_4(%arg0: i32, %arg1: i32) -> (i32, i32, i32) {
    %c0_i32 = arith.constant 0 : i32
    %c0_i32_0 = arith.constant 0 : i32
    %c0_i32_1 = arith.constant 0 : i32
    return %arg1, %c0_i32, %c0_i32_0 : i32, i32, i32
  }
  func.func @transform_5(%arg0: i32, %arg1: i32) -> (i32, i32, i32) {
    %c0_i32 = arith.constant 0 : i32
    %c0_i32_0 = arith.constant 0 : i32
    %c0_i32_1 = arith.constant 0 : i32
    return %arg1, %c0_i32, %c0_i32_0 : i32, i32, i32
  }
  func.func @transform_6(%arg0: i32, %arg1: i32) -> (i32, i32, i32) {
    %c0_i32 = arith.constant 0 : i32
    %c0_i32_0 = arith.constant 0 : i32
    %c0_i32_1 = arith.constant 0 : i32
    return %arg1, %c0_i32, %c0_i32_0 : i32, i32, i32
  }
  func.func @transform_7(%arg0: i32, %arg1: i32) -> (i32, i32, i32) {
    %c0_i32 = arith.constant 0 : i32
    %c0_i32_0 = arith.constant 0 : i32
    %c0_i32_1 = arith.constant 0 : i32
    return %arg1, %c0_i32, %c0_i32_0 : i32, i32, i32
  }
  func.func @transform_8(%arg0: i32, %arg1: i32) -> (i32, i32, i32) {
    %c0_i32 = arith.constant 0 : i32
    %c0_i32_0 = arith.constant 0 : i32
    %c0_i32_1 = arith.constant 0 : i32
    return %arg1, %c0_i32, %c0_i32_0 : i32, i32, i32
  }
  func.func @transform_9(%arg0: i32, %arg1: i32) -> (i32, i32, i32) {
    %c0_i32 = arith.constant 0 : i32
    %c0_i32_0 = arith.constant 0 : i32
    %c0_i32_1 = arith.constant 0 : i32
    return %arg1, %c0_i32, %c0_i32_0 : i32, i32, i32
  }
  func.func @transform_10(%arg0: i32, %arg1: i32) -> (i32, i32, i32) {
    %c0_i32 = arith.constant 0 : i32
    %c0_i32_0 = arith.constant 0 : i32
    %c0_i32_1 = arith.constant 0 : i32
    return %arg1, %c0_i32, %c0_i32_0 : i32, i32, i32
  }
  func.func @transform_11(%arg0: i32, %arg1: i32) -> (i32, i32, i32) {
    %c0_i32 = arith.constant 0 : i32
    %c0_i32_0 = arith.constant 0 : i32
    %c0_i32_1 = arith.constant 0 : i32
    return %arg1, %c0_i32, %c0_i32_0 : i32, i32, i32
  }
  func.func @transform_12(%arg0: i32, %arg1: i32) -> (i32, i32, i32) {
    %c0_i32 = arith.constant 0 : i32
    %c0_i32_0 = arith.constant 0 : i32
    %c0_i32_1 = arith.constant 0 : i32
    return %arg0, %c0_i32, %c0_i32_0 : i32, i32, i32
  }
}

</mosaic_0001>

<llo_original>
// kernel: tpu_custom_call.1
$region0: #{tpu_custom_call.1}
  #allocation0 [shape = 'u32[]', space=smem, size = 0x4, offset = 0x4, fixed_abs, tag = 'smem constant byte address 0x4 - core index']
  #allocation1 [shape = 'u32[72,128]{1,0:T(1,128)}', space=vmem, size = 0x9000, scoped, tag = 'internal scratch']
  %s0 = inlined_call_operand.hbm [shape: f32[2,8,256], index: 0, kind: input, shape index: {}]
  %s1 = inlined_call_operand.hbm [shape: f32[10,1,256], index: 1, kind: input, shape index: {}]
  %s2 = inlined_call_operand.hbm [shape: f32[10,1,256], index: 2, kind: input, shape index: {}]
  %s3 = inlined_call_operand.hbm [shape: bf16[10,256,768], index: 3, kind: input, shape index: {}]
  %s4 = inlined_call_operand.hbm [shape: bf16[10,256,256], index: 4, kind: input, shape index: {}]
  %s5 = inlined_call_operand.hbm [shape: f32[10,1,256], index: 5, kind: input, shape index: {}]
  %s6 = inlined_call_operand.hbm [shape: f32[10,1,256], index: 6, kind: input, shape index: {}]
  %s7 = inlined_call_operand.hbm [shape: f32[10,1,256], index: 7, kind: input, shape index: {}]
  %s8 = inlined_call_operand.hbm [shape: bf16[10,256,1024], index: 8, kind: input, shape index: {}]
  %s9 = inlined_call_operand.hbm [shape: f32[10,1,1024], index: 9, kind: input, shape index: {}]
  %s10 = inlined_call_operand.hbm [shape: bf16[10,1024,256], index: 10, kind: input, shape index: {}]
  %s11 = inlined_call_operand.hbm [shape: f32[10,1,256], index: 11, kind: input, shape index: {}]
  %s12 = inlined_call_operand.hbm [shape: f32[2,8,256], index: 12, kind: output, shape index: {}]
  %s13 = sld [smem:[#allocation0]]
  $region133: #{tpu_custom_call.1} parent=0
    _
  %s15 = ssub.s32 1, %s13
  %s16 = scalar_select 0, %s15, %s13
  $region1: #{tpu_custom_call.1} parent=0
    #allocation2 [shape = 'u8[16384]{0}', space=vmem, size = 0x4000, scoped, tag = 'input window, operand 0']
    #allocation3 [shape = 's32[2]{0}', space=sflag, size = 0x8, scoped, tag = 'scoped memory for tpu_custom_call.1']
    #allocation4 [shape = 's32[2]{0}', space=sflag, size = 0x8, scoped, tag = 'scoped memory for tpu_custom_call.1']
    #allocation5 [shape = 'u8[2048]{0}', space=vmem, size = 0x800, scoped, tag = 'input window, operand 1']
    #allocation6 [shape = 's32[2]{0}', space=sflag, size = 0x8, scoped, tag = 'scoped memory for tpu_custom_call.1']
    #allocation7 [shape = 'u8[2048]{0}', space=vmem, size = 0x800, scoped, tag = 'input window, operand 2']
    #allocation8 [shape = 'u8[786432]{0}', space=vmem, size = 0xc0000, scoped, tag = 'input window, operand 3']
    #allocation9 [shape = 's32[2]{0}', space=sflag, size = 0x8, scoped, tag = 'scoped memory for tpu_custom_call.1']
    #allocation10 [shape = 'u8[262144]{0}', space=vmem, size = 0x40000, scoped, tag = 'input window, operand 4']
    #allocation11 [shape = 'u8[2048]{0}', space=vmem, size = 0x800, scoped, tag = 'input window, operand 5']
    #allocation12 [shape = 's32[2]{0}', space=sflag, size = 0x8, scoped, tag = 'scoped memory for tpu_custom_call.1']
    #allocation13 [shape = 'u8[2048]{0}', space=vmem, size = 0x800, scoped, tag = 'input window, operand 6']
    #allocation14 [shape = 'u8[2048]{0}', space=vmem, size = 0x800, scoped, tag = 'input window, operand 7']
    #allocation15 [shape = 's32[2]{0}', space=sflag, size = 0x8, scoped, tag = 'scoped memory for tpu_custom_call.1']
    #allocation16 [shape = 'u8[1048576]{0}', space=vmem, size = 0x100000, scoped, tag = 'input window, operand 8']
    #allocation17 [shape = 'u8[8192]{0}', space=vmem, size = 0x2000, scoped, tag = 'input window, operand 9']
    #allocation18 [shape = 's32[2]{0}', space=sflag, size = 0x8, scoped, tag = 'scoped memory for tpu_custom_call.1']
    #allocation19 [shape = 'u8[1048576]{0}', space=vmem, size = 0x100000, scoped, tag = 'input window, operand 10']
    #allocation20 [shape = 'u8[2048]{0}', space=vmem, size = 0x800, scoped, tag = 'input window, operand 11']
    #allocation21 [shape = 's32[2]{0}', space=sflag, size = 0x8, scoped, tag = 'scoped memory for tpu_custom_call.1']
    #allocation22 [shape = 'u8[16384]{0}', space=vmem, size = 0x4000, scoped, tag = 'output window, operand 0']
    %17 = vsyncpa [#allocation3], 0
    %s18 = scalar_lea.sflag [#allocation3], 1
    %19 = vsyncpa %s18, 0
    %20 = vsyncpa [#allocation6], 0
    %s21 = scalar_lea.sflag [#allocation6], 1
    %22 = vsyncpa %s21, 0
    %23 = vsyncpa [#allocation9], 0
    %s24 = scalar_lea.sflag [#allocation9], 1
    %25 = vsyncpa %s24, 0
    %26 = vsyncpa [#allocation12], 0
    %s27 = scalar_lea.sflag [#allocation12], 1
    %28 = vsyncpa %s27, 0
    %29 = vsyncpa [#allocation15], 0
    %s30 = scalar_lea.sflag [#allocation15], 1
    %31 = vsyncpa %s30, 0
    %32 = vsyncpa [#allocation18], 0
    %s33 = scalar_lea.sflag [#allocation18], 1
    %34 = vsyncpa %s33, 0
    %35 = vsyncpa [#allocation21], 0
    %s36 = scalar_lea.sflag [#allocation21], 1
    %37 = vsyncpa %s36, 0
    %38 = vsyncpa [#allocation4], 0
    %s39 = scalar_lea.sflag [#allocation4], 1
    %40 = vsyncpa %s39, 0
    loop: start=0, step=1, limit=22
    $region2: #{tpu_custom_call.1} parent=1 // loop_pre_header
      _
    $region3: #{tpu_custom_call.1} parent=1 // loop_header
      %s42 = sphi 0, %s46
      %p43 = scmp.ge.s32.totalorder %s42, 22
      %s49 = sphi 0, %s61
      %s50 = sphi 0, %s57
      %s51 = sphi 0, %s49
      %s52 = sphi 0, %s50
      %s53 = sphi 0, %s51
      %s54 = sphi 0, %s52
      %s64 = sphi 0, %s66
      %s67 = sphi 0, %s64
      %s68 = sphi 0, %s67
      %s84 = sphi 0, %s68
      %s90 = sphi 0, %s92
      %s93 = sphi 0, %s90
      %s94 = sphi 0, %s93
      %s110 = sphi 0, %s94
      %s116 = sphi 0, %s118
      %s119 = sphi 0, %s116
      %s120 = sphi 0, %s119
      %s136 = sphi 0, %s120
      %s142 = sphi 0, %s144
      %s145 = sphi 0, %s142
      %s146 = sphi 0, %s145
      %s162 = sphi 0, %s146
      %s168 = sphi 0, %s170
      %s171 = sphi 0, %s168
      %s172 = sphi 0, %s171
      %s188 = sphi 0, %s172
      %s194 = sphi 0, %s196
      %s197 = sphi 0, %s194
      %s198 = sphi 0, %s197
      %s214 = sphi 0, %s198
      %s220 = sphi 0, %s222
      %s223 = sphi 0, %s220
      %s224 = sphi 0, %s223
      %s240 = sphi 0, %s224
      %s246 = sphi 0, %s248
      %s249 = sphi 0, %s246
      %s250 = sphi 0, %s249
      %s266 = sphi 0, %s250
      %s272 = sphi 0, %s274
      %s275 = sphi 0, %s272
      %s276 = sphi 0, %s275
      %s292 = sphi 0, %s276
      %s298 = sphi 0, %s300
      %s301 = sphi 0, %s298
      %s302 = sphi 0, %s301
      %s318 = sphi 0, %s302
      %s324 = sphi 0, %s326
      %s327 = sphi 0, %s324
      %s328 = sphi 0, %s327
      %s344 = sphi 0, %s328
      %s350 = sphi 0, %s352
      %s353 = sphi 0, %s350
      %s354 = sphi 0, %s353
      %s370 = sphi 0, %s354
      %s376 = sphi 0, %s378
      %s379 = sphi 0, %s376
      %s380 = sphi 0, %s379
      %s396 = sphi 0, %s380
    $region4: #{tpu_custom_call.1} parent=1 // loop_header_branch
      %45 = sbr.rel (%p43) target = $region8
    $region5: #{tpu_custom_call.1} parent=1 // loop_body
      %s47 = ssub.s32 %s42, 1
      %s48 = ssub.s32 %s42, 2
      %s55 = sadd.s32 1, %s50
      %p56 = scmp.ge.s32.totalorder %s55, 10
      %s57 = scalar_select %p56, 0, %s55
      %s58 = sadd.s32 1, %s49
      %s59 = scalar_select %p56, %s58, %s49
      %p60 = scmp.ge.s32.totalorder %s59, 2
      %s61 = scalar_select %p60, 0, %s59
      %s62 = ssub.s32 %s49, %s61
      %p63 = scmp.eq.s32.totalorder %s62, 0
      %s65 = sadd.s32 %s64, 1
      %s66 = scalar_select %p63, %s64, %s65
      %p69 = pneg %p63
      %p70 = scmp.eq.s32.totalorder %s42, 19
      %p71 = por %p69, %p70
      %p72 = scmp.ne.s32.totalorder %s64, %s67
      %p73 = scmp.eq.s32.totalorder %s42, 0
      %p74 = por %p72, %p73
      %p75 = scmp.ne.s32.totalorder %s64, %s67
      %p76 = scmp.eq.s32.totalorder %s47, 19
      %p77 = por %p75, %p76
      %p78 = scmp.ne.s32.totalorder %s67, %s68
      %p79 = scmp.eq.s32.totalorder %s47, 0
      %p80 = por %p78, %p79
      %p81 = scmp.ne.s32.totalorder %s67, %s68
      %p82 = scmp.eq.s32.totalorder %s48, 19
      %p83 = por %p81, %p82
      %p85 = scmp.ne.s32.totalorder %s68, %s84
      %p86 = scmp.eq.s32.totalorder %s48, 0
      %p87 = por %p85, %p86
      %s88 = ssub.s32 %s50, %s57
      %p89 = scmp.eq.s32.totalorder %s88, 0
      %s91 = sadd.s32 %s90, 1
      %s92 = scalar_select %p89, %s90, %s91
      %p95 = pneg %p89
      %p96 = scmp.eq.s32.totalorder %s42, 19
      %p97 = por %p95, %p96
      %p98 = scmp.ne.s32.totalorder %s90, %s93
      %p99 = scmp.eq.s32.totalorder %s42, 0
      %p100 = por %p98, %p99
      %p101 = scmp.ne.s32.totalorder %s90, %s93
      %p102 = scmp.eq.s32.totalorder %s47, 19
      %p103 = por %p101, %p102
      %p104 = scmp.ne.s32.totalorder %s93, %s94
      %p105 = scmp.eq.s32.totalorder %s47, 0
      %p106 = por %p104, %p105
      %p107 = scmp.ne.s32.totalorder %s93, %s94
      %p108 = scmp.eq.s32.totalorder %s48, 19
      %p109 = por %p107, %p108
      %p111 = scmp.ne.s32.totalorder %s94, %s110
      %p112 = scmp.eq.s32.totalorder %s48, 0
      %p113 = por %p111, %p112
      %s114 = ssub.s32 %s50, %s57
      %p115 = scmp.eq.s32.totalorder %s114, 0
      %s117 = sadd.s32 %s116, 1
      %s118 = scalar_select %p115, %s116, %s117
      %p121 = pneg %p115
      %p122 = scmp.eq.s32.totalorder %s42, 19
      %p123 = por %p121, %p122
      %p124 = scmp.ne.s32.totalorder %s116, %s119
      %p125 = scmp.eq.s32.totalorder %s42, 0
      %p126 = por %p124, %p125
      %p127 = scmp.ne.s32.totalorder %s116, %s119
      %p128 = scmp.eq.s32.totalorder %s47, 19
      %p129 = por %p127, %p128
      %p130 = scmp.ne.s32.totalorder %s119, %s120
      %p131 = scmp.eq.s32.totalorder %s47, 0
      %p132 = por %p130, %p131
      %p133 = scmp.ne.s32.totalorder %s119, %s120
      %p134 = scmp.eq.s32.totalorder %s48, 19
      %p135 = por %p133, %p134
      %p137 = scmp.ne.s32.totalorder %s120, %s136
      %p138 = scmp.eq.s32.totalorder %s48, 0
      %p139 = por %p137, %p138
      %s140 = ssub.s32 %s50, %s57
      %p141 = scmp.eq.s32.totalorder %s140, 0
      %s143 = sadd.s32 %s142, 1
      %s144 = scalar_select %p141, %s142, %s143
      %p147 = pneg %p141
      %p148 = scmp.eq.s32.totalorder %s42, 19
      %p149 = por %p147, %p148
      %p150 = scmp.ne.s32.totalorder %s142, %s145
      %p151 = scmp.eq.s32.totalorder %s42, 0
      %p152 = por %p150, %p151
      %p153 = scmp.ne.s32.totalorder %s142, %s145
      %p154 = scmp.eq.s32.totalorder %s47, 19
      %p155 = por %p153, %p154
      %p156 = scmp.ne.s32.totalorder %s145, %s146
      %p157 = scmp.eq.s32.totalorder %s47, 0
      %p158 = por %p156, %p157
      %p159 = scmp.ne.s32.totalorder %s145, %s146
      %p160 = scmp.eq.s32.totalorder %s48, 19
      %p161 = por %p159, %p160
      %p163 = scmp.ne.s32.totalorder %s146, %s162
      %p164 = scmp.eq.s32.totalorder %s48, 0
      %p165 = por %p163, %p164
      %s166 = ssub.s32 %s50, %s57
      %p167 = scmp.eq.s32.totalorder %s166, 0
      %s169 = sadd.s32 %s168, 1
      %s170 = scalar_select %p167, %s168, %s169
      %p173 = pneg %p167
      %p174 = scmp.eq.s32.totalorder %s42, 19
      %p175 = por %p173, %p174
      %p176 = scmp.ne.s32.totalorder %s168, %s171
      %p177 = scmp.eq.s32.totalorder %s42, 0
      %p178 = por %p176, %p177
      %p179 = scmp.ne.s32.totalorder %s168, %s171
      %p180 = scmp.eq.s32.totalorder %s47, 19
      %p181 = por %p179, %p180
      %p182 = scmp.ne.s32.totalorder %s171, %s172
      %p183 = scmp.eq.s32.totalorder %s47, 0
      %p184 = por %p182, %p183
      %p185 = scmp.ne.s32.totalorder %s171, %s172
      %p186 = scmp.eq.s32.totalorder %s48, 19
      %p187 = por %p185, %p186
      %p189 = scmp.ne.s32.totalorder %s172, %s188
      %p190 = scmp.eq.s32.totalorder %s48, 0
      %p191 = por %p189, %p190
      %s192 = ssub.s32 %s50, %s57
      %p193 = scmp.eq.s32.totalorder %s192, 0
      %s195 = sadd.s32 %s194, 1
      %s196 = scalar_select %p193, %s194, %s195
      %p199 = pneg %p193
      %p200 = scmp.eq.s32.totalorder %s42, 19
      %p201 = por %p199, %p200
      %p202 = scmp.ne.s32.totalorder %s194, %s197
      %p203 = scmp.eq.s32.totalorder %s42, 0
      %p204 = por %p202, %p203
      %p205 = scmp.ne.s32.totalorder %s194, %s197
      %p206 = scmp.eq.s32.totalorder %s47, 19
      %p207 = por %p205, %p206
      %p208 = scmp.ne.s32.totalorder %s197, %s198
      %p209 = scmp.eq.s32.totalorder %s47, 0
      %p210 = por %p208, %p209
      %p211 = scmp.ne.s32.totalorder %s197, %s198
      %p212 = scmp.eq.s32.totalorder %s48, 19
      %p213 = por %p211, %p212
      %p215 = scmp.ne.s32.totalorder %s198, %s214
      %p216 = scmp.eq.s32.totalorder %s48, 0
      %p217 = por %p215, %p216
      %s218 = ssub.s32 %s50, %s57
      %p219 = scmp.eq.s32.totalorder %s218, 0
      %s221 = sadd.s32 %s220, 1
      %s222 = scalar_select %p219, %s220, %s221
      %p225 = pneg %p219
      %p226 = scmp.eq.s32.totalorder %s42, 19
      %p227 = por %p225, %p226
      %p228 = scmp.ne.s32.totalorder %s220, %s223
      %p229 = scmp.eq.s32.totalorder %s42, 0
      %p230 = por %p228, %p229
      %p231 = scmp.ne.s32.totalorder %s220, %s223
      %p232 = scmp.eq.s32.totalorder %s47, 19
      %p233 = por %p231, %p232
      %p234 = scmp.ne.s32.totalorder %s223, %s224
      %p235 = scmp.eq.s32.totalorder %s47, 0
      %p236 = por %p234, %p235
      %p237 = scmp.ne.s32.totalorder %s223, %s224
      %p238 = scmp.eq.s32.totalorder %s48, 19
      %p239 = por %p237, %p238
      %p241 = scmp.ne.s32.totalorder %s224, %s240
      %p242 = scmp.eq.s32.totalorder %s48, 0
      %p243 = por %p241, %p242
      %s244 = ssub.s32 %s50, %s57
      %p245 = scmp.eq.s32.totalorder %s244, 0
      %s247 = sadd.s32 %s246, 1
      %s248 = scalar_select %p245, %s246, %s247
      %p251 = pneg %p245
      %p252 = scmp.eq.s32.totalorder %s42, 19
      %p253 = por %p251, %p252
      %p254 = scmp.ne.s32.totalorder %s246, %s249
      %p255 = scmp.eq.s32.totalorder %s42, 0
      %p256 = por %p254, %p255
      %p257 = scmp.ne.s32.totalorder %s246, %s249
      %p258 = scmp.eq.s32.totalorder %s47, 19
      %p259 = por %p257, %p258
      %p260 = scmp.ne.s32.totalorder %s249, %s250
      %p261 = scmp.eq.s32.totalorder %s47, 0
      %p262 = por %p260, %p261
      %p263 = scmp.ne.s32.totalorder %s249, %s250
      %p264 = scmp.eq.s32.totalorder %s48, 19
      %p265 = por %p263, %p264
      %p267 = scmp.ne.s32.totalorder %s250, %s266
      %p268 = scmp.eq.s32.totalorder %s48, 0
      %p269 = por %p267, %p268
      %s270 = ssub.s32 %s50, %s57
      %p271 = scmp.eq.s32.totalorder %s270, 0
      %s273 = sadd.s32 %s272, 1
      %s274 = scalar_select %p271, %s272, %s273
      %p277 = pneg %p271
      %p278 = scmp.eq.s32.totalorder %s42, 19
      %p279 = por %p277, %p278
      %p280 = scmp.ne.s32.totalorder %s272, %s275
      %p281 = scmp.eq.s32.totalorder %s42, 0
      %p282 = por %p280, %p281
      %p283 = scmp.ne.s32.totalorder %s272, %s275
      %p284 = scmp.eq.s32.totalorder %s47, 19
      %p285 = por %p283, %p284
      %p286 = scmp.ne.s32.totalorder %s275, %s276
      %p287 = scmp.eq.s32.totalorder %s47, 0
      %p288 = por %p286, %p287
      %p289 = scmp.ne.s32.totalorder %s275, %s276
      %p290 = scmp.eq.s32.totalorder %s48, 19
      %p291 = por %p289, %p290
      %p293 = scmp.ne.s32.totalorder %s276, %s292
      %p294 = scmp.eq.s32.totalorder %s48, 0
      %p295 = por %p293, %p294
      %s296 = ssub.s32 %s50, %s57
      %p297 = scmp.eq.s32.totalorder %s296, 0
      %s299 = sadd.s32 %s298, 1
      %s300 = scalar_select %p297, %s298, %s299
      %p303 = pneg %p297
      %p304 = scmp.eq.s32.totalorder %s42, 19
      %p305 = por %p303, %p304
      %p306 = scmp.ne.s32.totalorder %s298, %s301
      %p307 = scmp.eq.s32.totalorder %s42, 0
      %p308 = por %p306, %p307
      %p309 = scmp.ne.s32.totalorder %s298, %s301
      %p310 = scmp.eq.s32.totalorder %s47, 19
      %p311 = por %p309, %p310
      %p312 = scmp.ne.s32.totalorder %s301, %s302
      %p313 = scmp.eq.s32.totalorder %s47, 0
      %p314 = por %p312, %p313
      %p315 = scmp.ne.s32.totalorder %s301, %s302
      %p316 = scmp.eq.s32.totalorder %s48, 19
      %p317 = por %p315, %p316
      %p319 = scmp.ne.s32.totalorder %s302, %s318
      %p320 = scmp.eq.s32.totalorder %s48, 0
      %p321 = por %p319, %p320
      %s322 = ssub.s32 %s50, %s57
      %p323 = scmp.eq.s32.totalorder %s322, 0
      %s325 = sadd.s32 %s324, 1
      %s326 = scalar_select %p323, %s324, %s325
      %p329 = pneg %p323
      %p330 = scmp.eq.s32.totalorder %s42, 19
      %p331 = por %p329, %p330
      %p332 = scmp.ne.s32.totalorder %s324, %s327
      %p333 = scmp.eq.s32.totalorder %s42, 0
      %p334 = por %p332, %p333
      %p335 = scmp.ne.s32.totalorder %s324, %s327
      %p336 = scmp.eq.s32.totalorder %s47, 19
      %p337 = por %p335, %p336
      %p338 = scmp.ne.s32.totalorder %s327, %s328
      %p339 = scmp.eq.s32.totalorder %s47, 0
      %p340 = por %p338, %p339
      %p341 = scmp.ne.s32.totalorder %s327, %s328
      %p342 = scmp.eq.s32.totalorder %s48, 19
      %p343 = por %p341, %p342
      %p345 = scmp.ne.s32.totalorder %s328, %s344
      %p346 = scmp.eq.s32.totalorder %s48, 0
      %p347 = por %p345, %p346
      %s348 = ssub.s32 %s50, %s57
      %p349 = scmp.eq.s32.totalorder %s348, 0
      %s351 = sadd.s32 %s350, 1
      %s352 = scalar_select %p349, %s350, %s351
      %p355 = pneg %p349
      %p356 = scmp.eq.s32.totalorder %s42, 19
      %p357 = por %p355, %p356
      %p358 = scmp.ne.s32.totalorder %s350, %s353
      %p359 = scmp.eq.s32.totalorder %s42, 0
      %p360 = por %p358, %p359
      %p361 = scmp.ne.s32.totalorder %s350, %s353
      %p362 = scmp.eq.s32.totalorder %s47, 19
      %p363 = por %p361, %p362
      %p364 = scmp.ne.s32.totalorder %s353, %s354
      %p365 = scmp.eq.s32.totalorder %s47, 0
      %p366 = por %p364, %p365
      %p367 = scmp.ne.s32.totalorder %s353, %s354
      %p368 = scmp.eq.s32.totalorder %s48, 19
      %p369 = por %p367, %p368
      %p371 = scmp.ne.s32.totalorder %s354, %s370
      %p372 = scmp.eq.s32.totalorder %s48, 0
      %p373 = por %p371, %p372
      %s374 = ssub.s32 %s49, %s61
      %p375 = scmp.eq.s32.totalorder %s374, 0
      %s377 = sadd.s32 %s376, 1
      %s378 = scalar_select %p375, %s376, %s377
      %p381 = pneg %p375
      %p382 = scmp.eq.s32.totalorder %s42, 19
      %p383 = por %p381, %p382
      %p384 = scmp.ne.s32.totalorder %s376, %s379
      %p385 = scmp.eq.s32.totalorder %s42, 0
      %p386 = por %p384, %p385
      %p387 = scmp.ne.s32.totalorder %s376, %s379
      %p388 = scmp.eq.s32.totalorder %s47, 19
      %p389 = por %p387, %p388
      %p390 = scmp.ne.s32.totalorder %s379, %s380
      %p391 = scmp.eq.s32.totalorder %s47, 0
      %p392 = por %p390, %p391
      %p393 = scmp.ne.s32.totalorder %s379, %s380
      %p394 = scmp.eq.s32.totalorder %s48, 19
      %p395 = por %p393, %p394
      %p397 = scmp.ne.s32.totalorder %s380, %s396
      %p398 = scmp.eq.s32.totalorder %s48, 0
      %p399 = por %p397, %p398
      %p400 = scmp.le.s32.totalorder 1, %s42
      %p401 = scmp.lt.s32.totalorder %s42, 21
      %p402 = pnand %p400, %p401
      %p403 = pneg %p402
      // Predicated region
      $region9: #{tpu_custom_call.1} parent=5 // pred_check
        _
      $region10: #{tpu_custom_call.1} parent=5 // pred_check_branch
        %405 = sbr.rel (%p402) target = $region12
      $region11: #{tpu_custom_call.1} parent=5 // pred_region
        %s406 = ssub.s32 %s42, 1
      $region12: #{tpu_custom_call.1} parent=5 // pred_fallthru
        _
      %p407 = scmp.lt.s32.totalorder %s42, 20
      // Predicated region
      $region13: #{tpu_custom_call.1} parent=5 // pred_check
        %p408 = pneg %p407
      $region14: #{tpu_custom_call.1} parent=5 // pred_check_branch
        %410 = sbr.rel (%p408) target = $region16
      $region15: #{tpu_custom_call.1} parent=5 // pred_region
        // Predicated region
        $region17: #{tpu_custom_call.1} parent=15 // pred_check
          %p411 = pneg %p74
        $region18: #{tpu_custom_call.1} parent=15 // pred_check_branch
          %413 = sbr.rel (%p411) target = $region20
        $region19: #{tpu_custom_call.1} parent=15 // pred_region
          %s414 = sand.u32 %s64, 1
          %s415 = scalar_lea.sflag [#allocation3], %s414
          %s416 = sand.u32 %s64, 1
          %s417 = smul.addr %s416, 16
          %s418 = scalar_lea.vmem [#allocation2], %s417
          %420 = vsyncadd %s415, 0
          %s421 = smul.addr %s49, 2
          %s422 = smul.addr %s421, 8
          %s423 = scalar_lea.hbm %s0, %s422
          %s425 = sshll.u32 %s423, 4
          %s426 = int_to_ptr.hbm [resolvable:$true] %s425
          %s427 = sshll.u32 %s418, 4
          %s428 = int_to_ptr.vmem [resolvable:$true] %s427
          %430 = dma.hbm_to_vmem [thread:$0]  %s426, 256, %s428, %s415
        $region20: #{tpu_custom_call.1} parent=15 // pred_fallthru
          _
        // Predicated region
        $region21: #{tpu_custom_call.1} parent=15 // pred_check
          %p431 = pneg %p100
        $region22: #{tpu_custom_call.1} parent=15 // pred_check_branch
          %433 = sbr.rel (%p431) target = $region24
        $region23: #{tpu_custom_call.1} parent=15 // pred_region
          %s434 = sand.u32 %s42, 1
          %s435 = scalar_lea.sflag [#allocation6], %s434
          %s436 = sand.u32 %s90, 1
          %s437 = smul.addr %s436, 2
          %s438 = scalar_lea.vmem [#allocation5], %s437
          %440 = vsyncadd %s435, 0
          %s441 = smul.addr %s50, 2
          %s442 = scalar_lea.hbm %s1, %s441
          %s444 = sshll.u32 %s442, 4
          %s445 = int_to_ptr.hbm [resolvable:$true] %s444
          %s446 = sshll.u32 %s438, 4
          %s447 = int_to_ptr.vmem [resolvable:$true] %s446
          %449 = dma.hbm_to_vmem [thread:$0]  %s445, 32, %s447, %s435
        $region24: #{tpu_custom_call.1} parent=15 // pred_fallthru
          _
        // Predicated region
        $region25: #{tpu_custom_call.1} parent=15 // pred_check
          %p450 = pneg %p126
        $region26: #{tpu_custom_call.1} parent=15 // pred_check_branch
          %452 = sbr.rel (%p450) target = $region28
        $region27: #{tpu_custom_call.1} parent=15 // pred_region
          %s453 = sand.u32 %s42, 1
          %s454 = scalar_lea.sflag [#allocation6], %s453
          %s455 = sand.u32 %s116, 1
          %s456 = smul.addr %s455, 2
          %s457 = scalar_lea.vmem [#allocation7], %s456
          %459 = vsyncadd %s454, 0
          %s460 = smul.addr %s50, 2
          %s461 = scalar_lea.hbm %s2, %s460
          %s463 = sshll.u32 %s461, 4
          %s464 = int_to_ptr.hbm [resolvable:$true] %s463
          %s465 = sshll.u32 %s457, 4
          %s466 = int_to_ptr.vmem [resolvable:$true] %s465
          %468 = dma.hbm_to_vmem [thread:$0]  %s464, 32, %s466, %s454
        $region28: #{tpu_custom_call.1} parent=15 // pred_fallthru
          _
        // Predicated region
        $region29: #{tpu_custom_call.1} parent=15 // pred_check
          %p469 = pneg %p152
        $region30: #{tpu_custom_call.1} parent=15 // pred_check_branch
          %471 = sbr.rel (%p469) target = $region32
        $region31: #{tpu_custom_call.1} parent=15 // pred_region
          %s472 = sand.u32 %s42, 1
          %s473 = scalar_lea.sflag [#allocation9], %s472
          %s474 = sand.u32 %s142, 1
          %s475 = smul.addr %s474, 768
          %s476 = scalar_lea.vmem [#allocation8], %s475
          %478 = vsyncadd %s473, 0
          %s479 = smul.addr %s50, 192
          %s480 = smul.addr %s479, 4
          %s481 = scalar_lea.hbm %s3, %s480
          %s482 = sshll.u32 %s481, 4
          %s483 = int_to_ptr.hbm [resolvable:$true] %s482
          %s484 = sshll.u32 %s476, 4
          %s485 = int_to_ptr.vmem [resolvable:$true] %s484
          %490 = dma.hbm_to_vmem [thread:$0]  %s483, 12288, %s485, %s473, 384, 384, 24
        $region32: #{tpu_custom_call.1} parent=15 // pred_fallthru
          _
        // Predicated region
        $region33: #{tpu_custom_call.1} parent=15 // pred_check
          %p491 = pneg %p178
        $region34: #{tpu_custom_call.1} parent=15 // pred_check_branch
          %493 = sbr.rel (%p491) target = $region36
        $region35: #{tpu_custom_call.1} parent=15 // pred_region
          %s494 = sand.u32 %s42, 1
          %s495 = scalar_lea.sflag [#allocation9], %s494
          %s496 = sand.u32 %s168, 1
          %s497 = smul.addr %s496, 256
          %s498 = scalar_lea.vmem [#allocation10], %s497
          %500 = vsyncadd %s495, 0
          %s501 = smul.addr %s50, 64
          %s502 = smul.addr %s501, 4
          %s503 = scalar_lea.hbm %s4, %s502
          %s504 = sshll.u32 %s503, 4
          %s505 = int_to_ptr.hbm [resolvable:$true] %s504
          %s506 = sshll.u32 %s498, 4
          %s507 = int_to_ptr.vmem [resolvable:$true] %s506
          %512 = dma.hbm_to_vmem [thread:$0]  %s505, 4096, %s507, %s495, 128, 128, 8
        $region36: #{tpu_custom_call.1} parent=15 // pred_fallthru
          _
        // Predicated region
        $region37: #{tpu_custom_call.1} parent=15 // pred_check
          %p513 = pneg %p204
        $region38: #{tpu_custom_call.1} parent=15 // pred_check_branch
          %515 = sbr.rel (%p513) target = $region40
        $region39: #{tpu_custom_call.1} parent=15 // pred_region
          %s516 = sand.u32 %s42, 1
          %s517 = scalar_lea.sflag [#allocation12], %s516
          %s518 = sand.u32 %s194, 1
          %s519 = smul.addr %s518, 2
          %s520 = scalar_lea.vmem [#allocation11], %s519
          %522 = vsyncadd %s517, 0
          %s523 = smul.addr %s50, 2
          %s524 = scalar_lea.hbm %s5, %s523
          %s526 = sshll.u32 %s524, 4
          %s527 = int_to_ptr.hbm [resolvable:$true] %s526
          %s528 = sshll.u32 %s520, 4
          %s529 = int_to_ptr.vmem [resolvable:$true] %s528
          %531 = dma.hbm_to_vmem [thread:$0]  %s527, 32, %s529, %s517
        $region40: #{tpu_custom_call.1} parent=15 // pred_fallthru
          _
        // Predicated region
        $region41: #{tpu_custom_call.1} parent=15 // pred_check
          %p532 = pneg %p230
        $region42: #{tpu_custom_call.1} parent=15 // pred_check_branch
          %534 = sbr.rel (%p532) target = $region44
        $region43: #{tpu_custom_call.1} parent=15 // pred_region
          %s535 = sand.u32 %s42, 1
          %s536 = scalar_lea.sflag [#allocation12], %s535
          %s537 = sand.u32 %s220, 1
          %s538 = smul.addr %s537, 2
          %s539 = scalar_lea.vmem [#allocation13], %s538
          %541 = vsyncadd %s536, 0
          %s542 = smul.addr %s50, 2
          %s543 = scalar_lea.hbm %s6, %s542
          %s545 = sshll.u32 %s543, 4
          %s546 = int_to_ptr.hbm [resolvable:$true] %s545
          %s547 = sshll.u32 %s539, 4
          %s548 = int_to_ptr.vmem [resolvable:$true] %s547
          %550 = dma.hbm_to_vmem [thread:$0]  %s546, 32, %s548, %s536
        $region44: #{tpu_custom_call.1} parent=15 // pred_fallthru
          _
        // Predicated region
        $region45: #{tpu_custom_call.1} parent=15 // pred_check
          %p551 = pneg %p256
        $region46: #{tpu_custom_call.1} parent=15 // pred_check_branch
          %553 = sbr.rel (%p551) target = $region48
        $region47: #{tpu_custom_call.1} parent=15 // pred_region
          %s554 = sand.u32 %s42, 1
          %s555 = scalar_lea.sflag [#allocation15], %s554
          %s556 = sand.u32 %s246, 1
          %s557 = smul.addr %s556, 2
          %s558 = scalar_lea.vmem [#allocation14], %s557
          %560 = vsyncadd %s555, 0
          %s561 = smul.addr %s50, 2
          %s562 = scalar_lea.hbm %s7, %s561
          %s564 = sshll.u32 %s562, 4
          %s565 = int_to_ptr.hbm [resolvable:$true] %s564
          %s566 = sshll.u32 %s558, 4
          %s567 = int_to_ptr.vmem [resolvable:$true] %s566
          %569 = dma.hbm_to_vmem [thread:$0]  %s565, 32, %s567, %s555
        $region48: #{tpu_custom_call.1} parent=15 // pred_fallthru
          _
        // Predicated region
        $region49: #{tpu_custom_call.1} parent=15 // pred_check
          %p570 = pneg %p282
        $region50: #{tpu_custom_call.1} parent=15 // pred_check_branch
          %572 = sbr.rel (%p570) target = $region52
        $region51: #{tpu_custom_call.1} parent=15 // pred_region
          %s573 = sand.u32 %s42, 1
          %s574 = scalar_lea.sflag [#allocation15], %s573
          %s575 = sand.u32 %s272, 1
          %s576 = smul.addr %s575, 1024
          %s577 = scalar_lea.vmem [#allocation16], %s576
          %579 = vsyncadd %s574, 0
          %s580 = smul.addr %s50, 256
          %s581 = smul.addr %s580, 4
          %s582 = scalar_lea.hbm %s8, %s581
          %s583 = sshll.u32 %s582, 4
          %s584 = int_to_ptr.hbm [resolvable:$true] %s583
          %s585 = sshll.u32 %s577, 4
          %s586 = int_to_ptr.vmem [resolvable:$true] %s585
          %591 = dma.hbm_to_vmem [thread:$0]  %s584, 16384, %s586, %s574, 512, 512, 32
        $region52: #{tpu_custom_call.1} parent=15 // pred_fallthru
          _
        // Predicated region
        $region53: #{tpu_custom_call.1} parent=15 // pred_check
          %p592 = pneg %p308
        $region54: #{tpu_custom_call.1} parent=15 // pred_check_branch
          %594 = sbr.rel (%p592) target = $region56
        $region55: #{tpu_custom_call.1} parent=15 // pred_region
          %s595 = sand.u32 %s42, 1
          %s596 = scalar_lea.sflag [#allocation18], %s595
          %s597 = sand.u32 %s298, 1
          %s598 = smul.addr %s597, 8
          %s599 = scalar_lea.vmem [#allocation17], %s598
          %601 = vsyncadd %s596, 0
          %s602 = smul.addr %s50, 8
          %s603 = scalar_lea.hbm %s9, %s602
          %s605 = sshll.u32 %s603, 4
          %s606 = int_to_ptr.hbm [resolvable:$true] %s605
          %s607 = sshll.u32 %s599, 4
          %s608 = int_to_ptr.vmem [resolvable:$true] %s607
          %610 = dma.hbm_to_vmem [thread:$0]  %s606, 128, %s608, %s596
        $region56: #{tpu_custom_call.1} parent=15 // pred_fallthru
          _
        // Predicated region
        $region57: #{tpu_custom_call.1} parent=15 // pred_check
          %p611 = pneg %p334
        $region58: #{tpu_custom_call.1} parent=15 // pred_check_branch
          %613 = sbr.rel (%p611) target = $region60
        $region59: #{tpu_custom_call.1} parent=15 // pred_region
          %s614 = sand.u32 %s42, 1
          %s615 = scalar_lea.sflag [#allocation18], %s614
          %s616 = sand.u32 %s324, 1
          %s617 = smul.addr %s616, 1024
          %s618 = scalar_lea.vmem [#allocation19], %s617
          %620 = vsyncadd %s615, 0
          %s621 = smul.addr %s50, 256
          %s622 = smul.addr %s621, 4
          %s623 = scalar_lea.hbm %s10, %s622
          %s624 = sshll.u32 %s623, 4
          %s625 = int_to_ptr.hbm [resolvable:$true] %s624
          %s626 = sshll.u32 %s618, 4
          %s627 = int_to_ptr.vmem [resolvable:$true] %s626
          %632 = dma.hbm_to_vmem [thread:$0]  %s625, 16384, %s627, %s615, 128, 128, 8
        $region60: #{tpu_custom_call.1} parent=15 // pred_fallthru
          _
        // Predicated region
        $region61: #{tpu_custom_call.1} parent=15 // pred_check
          %p633 = pneg %p360
        $region62: #{tpu_custom_call.1} parent=15 // pred_check_branch
          %635 = sbr.rel (%p633) target = $region64
        $region63: #{tpu_custom_call.1} parent=15 // pred_region
          %s636 = sand.u32 %s350, 1
          %s637 = scalar_lea.sflag [#allocation21], %s636
          %s638 = sand.u32 %s350, 1
          %s639 = smul.addr %s638, 2
          %s640 = scalar_lea.vmem [#allocation20], %s639
          %642 = vsyncadd %s637, 0
          %s643 = smul.addr %s50, 2
          %s644 = scalar_lea.hbm %s11, %s643
          %s646 = sshll.u32 %s644, 4
          %s647 = int_to_ptr.hbm [resolvable:$true] %s646
          %s648 = sshll.u32 %s640, 4
          %s649 = int_to_ptr.vmem [resolvable:$true] %s648
          %651 = dma.hbm_to_vmem [thread:$0]  %s647, 32, %s649, %s637
        $region64: #{tpu_custom_call.1} parent=15 // pred_fallthru
          _
      $region16: #{tpu_custom_call.1} parent=5 // pred_fallthru
        _
      %p652 = scmp.le.s32.totalorder 1, %s42
      %p653 = scmp.lt.s32.totalorder %s42, 21
      %p654 = pnand %p652, %p653
      %p655 = pneg %p654
      // Predicated region
      $region65: #{tpu_custom_call.1} parent=5 // pred_check
        _
      $region66: #{tpu_custom_call.1} parent=5 // pred_check_branch
        %657 = sbr.rel (%p654) target = $region68
      $region67: #{tpu_custom_call.1} parent=5 // pred_region
        %s658 = ssub.s32 %s42, 1
        %s659 = sand.u32 %s67, 1
        %s660 = scalar_lea.sflag [#allocation3], %s659
        %s661 = sand.u32 %s67, 1
        %s662 = smul.addr %s661, 16
        %s663 = scalar_lea.vmem [#allocation2], %s662
        // Predicated region
        $region69: #{tpu_custom_call.1} parent=67 // pred_check
          %p664 = pneg %p80
        $region70: #{tpu_custom_call.1} parent=67 // pred_check_branch
          %666 = sbr.rel (%p664) target = $region72
        $region71: #{tpu_custom_call.1} parent=67 // pred_region
          %668 = dma.done %s660, 256
        $region72: #{tpu_custom_call.1} parent=67 // pred_fallthru
          _
        %s669 = sand.u32 %s47, 1
        %s670 = scalar_lea.sflag [#allocation6], %s669
        %s671 = sand.u32 %s93, 1
        %s672 = smul.addr %s671, 2
        %s673 = scalar_lea.vmem [#allocation5], %s672
        // Predicated region
        $region73: #{tpu_custom_call.1} parent=67 // pred_check
          %p674 = pneg %p106
        $region74: #{tpu_custom_call.1} parent=67 // pred_check_branch
          %676 = sbr.rel (%p674) target = $region76
        $region75: #{tpu_custom_call.1} parent=67 // pred_region
          %678 = dma.done %s670, 32
        $region76: #{tpu_custom_call.1} parent=67 // pred_fallthru
          _
        %s679 = sand.u32 %s47, 1
        %s680 = scalar_lea.sflag [#allocation6], %s679
        %s681 = sand.u32 %s119, 1
        %s682 = smul.addr %s681, 2
        %s683 = scalar_lea.vmem [#allocation7], %s682
        // Predicated region
        $region77: #{tpu_custom_call.1} parent=67 // pred_check
          %p684 = pneg %p132
        $region78: #{tpu_custom_call.1} parent=67 // pred_check_branch
          %686 = sbr.rel (%p684) target = $region80
        $region79: #{tpu_custom_call.1} parent=67 // pred_region
          %688 = dma.done %s680, 32
        $region80: #{tpu_custom_call.1} parent=67 // pred_fallthru
          _
        %s689 = sand.u32 %s47, 1
        %s690 = scalar_lea.sflag [#allocation9], %s689
        %s691 = sand.u32 %s145, 1
        %s692 = smul.addr %s691, 768
        %s693 = scalar_lea.vmem [#allocation8], %s692
        // Predicated region
        $region81: #{tpu_custom_call.1} parent=67 // pred_check
          %p694 = pneg %p158
        $region82: #{tpu_custom_call.1} parent=67 // pred_check_branch
          %696 = sbr.rel (%p694) target = $region84
        $region83: #{tpu_custom_call.1} parent=67 // pred_region
          %698 = dma.done %s690, 12288
        $region84: #{tpu_custom_call.1} parent=67 // pred_fallthru
          _
        %s699 = sand.u32 %s47, 1
        %s700 = scalar_lea.sflag [#allocation9], %s699
        %s701 = sand.u32 %s171, 1
        %s702 = smul.addr %s701, 256
        %s703 = scalar_lea.vmem [#allocation10], %s702
        // Predicated region
        $region85: #{tpu_custom_call.1} parent=67 // pred_check
          %p704 = pneg %p184
        $region86: #{tpu_custom_call.1} parent=67 // pred_check_branch
          %706 = sbr.rel (%p704) target = $region88
        $region87: #{tpu_custom_call.1} parent=67 // pred_region
          %708 = dma.done %s700, 4096
        $region88: #{tpu_custom_call.1} parent=67 // pred_fallthru
          _
        %s709 = sand.u32 %s47, 1
        %s710 = scalar_lea.sflag [#allocation12], %s709
        %s711 = sand.u32 %s197, 1
        %s712 = smul.addr %s711, 2
        %s713 = scalar_lea.vmem [#allocation11], %s712
        // Predicated region
        $region89: #{tpu_custom_call.1} parent=67 // pred_check
          %p714 = pneg %p210
        $region90: #{tpu_custom_call.1} parent=67 // pred_check_branch
          %716 = sbr.rel (%p714) target = $region92
        $region91: #{tpu_custom_call.1} parent=67 // pred_region
          %718 = dma.done %s710, 32
        $region92: #{tpu_custom_call.1} parent=67 // pred_fallthru
          _
        %s719 = sand.u32 %s47, 1
        %s720 = scalar_lea.sflag [#allocation12], %s719
        %s721 = sand.u32 %s223, 1
        %s722 = smul.addr %s721, 2
        %s723 = scalar_lea.vmem [#allocation13], %s722
        // Predicated region
        $region93: #{tpu_custom_call.1} parent=67 // pred_check
          %p724 = pneg %p236
        $region94: #{tpu_custom_call.1} parent=67 // pred_check_branch
          %726 = sbr.rel (%p724) target = $region96
        $region95: #{tpu_custom_call.1} parent=67 // pred_region
          %728 = dma.done %s720, 32
        $region96: #{tpu_custom_call.1} parent=67 // pred_fallthru
          _
        %s729 = sand.u32 %s47, 1
        %s730 = scalar_lea.sflag [#allocation15], %s729
        %s731 = sand.u32 %s249, 1
        %s732 = smul.addr %s731, 2
        %s733 = scalar_lea.vmem [#allocation14], %s732
        // Predicated region
        $region97: #{tpu_custom_call.1} parent=67 // pred_check
          %p734 = pneg %p262
        $region98: #{tpu_custom_call.1} parent=67 // pred_check_branch
          %736 = sbr.rel (%p734) target = $region100
        $region99: #{tpu_custom_call.1} parent=67 // pred_region
          %738 = dma.done %s730, 32
        $region100: #{tpu_custom_call.1} parent=67 // pred_fallthru
          _
        %s739 = sand.u32 %s47, 1
        %s740 = scalar_lea.sflag [#allocation15], %s739
        %s741 = sand.u32 %s275, 1
        %s742 = smul.addr %s741, 1024
        %s743 = scalar_lea.vmem [#allocation16], %s742
        // Predicated region
        $region101: #{tpu_custom_call.1} parent=67 // pred_check
          %p744 = pneg %p288
        $region102: #{tpu_custom_call.1} parent=67 // pred_check_branch
          %746 = sbr.rel (%p744) target = $region104
        $region103: #{tpu_custom_call.1} parent=67 // pred_region
          %748 = dma.done %s740, 16384
        $region104: #{tpu_custom_call.1} parent=67 // pred_fallthru
          _
        %s749 = sand.u32 %s47, 1
        %s750 = scalar_lea.sflag [#allocation18], %s749
        %s751 = sand.u32 %s301, 1
        %s752 = smul.addr %s751, 8
        %s753 = scalar_lea.vmem [#allocation17], %s752
        // Predicated region
        $region105: #{tpu_custom_call.1} parent=67 // pred_check
          %p754 = pneg %p314
        $region106: #{tpu_custom_call.1} parent=67 // pred_check_branch
          %756 = sbr.rel (%p754) target = $region108
        $region107: #{tpu_custom_call.1} parent=67 // pred_region
          %758 = dma.done %s750, 128
        $region108: #{tpu_custom_call.1} parent=67 // pred_fallthru
          _
        %s759 = sand.u32 %s47, 1
        %s760 = scalar_lea.sflag [#allocation18], %s759
        %s761 = sand.u32 %s327, 1
        %s762 = smul.addr %s761, 1024
        %s763 = scalar_lea.vmem [#allocation19], %s762
        // Predicated region
        $region109: #{tpu_custom_call.1} parent=67 // pred_check
          %p764 = pneg %p340
        $region110: #{tpu_custom_call.1} parent=67 // pred_check_branch
          %766 = sbr.rel (%p764) target = $region112
        $region111: #{tpu_custom_call.1} parent=67 // pred_region
          %768 = dma.done %s760, 16384
        $region112: #{tpu_custom_call.1} parent=67 // pred_fallthru
          _
        %s769 = sand.u32 %s353, 1
        %s770 = scalar_lea.sflag [#allocation21], %s769
        %s771 = sand.u32 %s353, 1
        %s772 = smul.addr %s771, 2
        %s773 = scalar_lea.vmem [#allocation20], %s772
        // Predicated region
        $region113: #{tpu_custom_call.1} parent=67 // pred_check
          %p774 = pneg %p366
        $region114: #{tpu_custom_call.1} parent=67 // pred_check_branch
          %776 = sbr.rel (%p774) target = $region116
        $region115: #{tpu_custom_call.1} parent=67 // pred_region
          %778 = dma.done %s770, 32
        $region116: #{tpu_custom_call.1} parent=67 // pred_fallthru
          _
        %s779 = sand.u32 %s67, 1
        %s780 = scalar_lea.sflag [#allocation3], %s779
        %s781 = sand.u32 %s67, 1
        %s782 = smul.addr %s781, 16
        %s783 = scalar_lea.vmem [#allocation2], %s782
        %p784 = pneg %p80
        %p785 = pneg %p77
        %s786 = sand.u32 %s47, 1
        %s787 = scalar_lea.sflag [#allocation6], %s786
        %s788 = sand.u32 %s93, 1
        %s789 = smul.addr %s788, 2
        %s790 = scalar_lea.vmem [#allocation5], %s789
        %p791 = pneg %p106
        %p792 = pneg %p103
        %s793 = sand.u32 %s47, 1
        %s794 = scalar_lea.sflag [#allocation6], %s793
        %s795 = sand.u32 %s119, 1
        %s796 = smul.addr %s795, 2
        %s797 = scalar_lea.vmem [#allocation7], %s796
        %p798 = pneg %p132
        %p799 = pneg %p129
        %s800 = sand.u32 %s47, 1
        %s801 = scalar_lea.sflag [#allocation9], %s800
        %s802 = sand.u32 %s145, 1
        %s803 = smul.addr %s802, 768
        %s804 = scalar_lea.vmem [#allocation8], %s803
        %p805 = pneg %p158
        %p806 = pneg %p155
        %s807 = sand.u32 %s47, 1
        %s808 = scalar_lea.sflag [#allocation9], %s807
        %s809 = sand.u32 %s171, 1
        %s810 = smul.addr %s809, 256
        %s811 = scalar_lea.vmem [#allocation10], %s810
        %p812 = pneg %p184
        %p813 = pneg %p181
        %s814 = sand.u32 %s47, 1
        %s815 = scalar_lea.sflag [#allocation12], %s814
        %s816 = sand.u32 %s197, 1
        %s817 = smul.addr %s816, 2
        %s818 = scalar_lea.vmem [#allocation11], %s817
        %p819 = pneg %p210
        %p820 = pneg %p207
        %s821 = sand.u32 %s47, 1
        %s822 = scalar_lea.sflag [#allocation12], %s821
        %s823 = sand.u32 %s223, 1
        %s824 = smul.addr %s823, 2
        %s825 = scalar_lea.vmem [#allocation13], %s824
        %p826 = pneg %p236
        %p827 = pneg %p233
        %s828 = sand.u32 %s47, 1
        %s829 = scalar_lea.sflag [#allocation15], %s828
        %s830 = sand.u32 %s249, 1
        %s831 = smul.addr %s830, 2
        %s832 = scalar_lea.vmem [#allocation14], %s831
        %p833 = pneg %p262
        %p834 = pneg %p259
        %s835 = sand.u32 %s47, 1
        %s836 = scalar_lea.sflag [#allocation15], %s835
        %s837 = sand.u32 %s275, 1
        %s838 = smul.addr %s837, 1024
        %s839 = scalar_lea.vmem [#allocation16], %s838
        %p840 = pneg %p288
        %p841 = pneg %p285
        %s842 = sand.u32 %s47, 1
        %s843 = scalar_lea.sflag [#allocation18], %s842
        %s844 = sand.u32 %s301, 1
        %s845 = smul.addr %s844, 8
        %s846 = scalar_lea.vmem [#allocation17], %s845
        %p847 = pneg %p314
        %p848 = pneg %p311
        %s849 = sand.u32 %s47, 1
        %s850 = scalar_lea.sflag [#allocation18], %s849
        %s851 = sand.u32 %s327, 1
        %s852 = smul.addr %s851, 1024
        %s853 = scalar_lea.vmem [#allocation19], %s852
        %p854 = pneg %p340
        %p855 = pneg %p337
        %s856 = sand.u32 %s353, 1
        %s857 = scalar_lea.sflag [#allocation21], %s856
        %s858 = sand.u32 %s353, 1
        %s859 = smul.addr %s858, 2
        %s860 = scalar_lea.vmem [#allocation20], %s859
        %p861 = pneg %p366
        %p862 = pneg %p363
        %p863 = pneg %p392
        %p864 = pneg %p389
        %s865 = sand.u32 %s379, 1
        %s866 = scalar_lea.sflag [#allocation4], %s865
        %s867 = sand.u32 %s379, 1
        %s868 = smul.addr %s867, 16
        %s869 = scalar_lea.vmem [#allocation22], %s868
        %p871 = scmp.eq.s32.totalorder %s52, 0
        // Predicated region
        $region117: #{tpu_custom_call.1} parent=67 // pred_check
          %p872 = pneg %p871
        $region118: #{tpu_custom_call.1} parent=67 // pred_check_branch
          %874 = sbr.rel (%p872) target = $region120
        $region119: #{tpu_custom_call.1} parent=67 // pred_region
          %v875 = vld [vmem:[%s663] sm:$0xff]
          %v876 = vld [vmem:[%s663 + $0x8] sm:$0xff]
          %877 = vst [vmem:[%s869] sm:$0xff] %v875
          %878 = vst [vmem:[%s869 + $0x8] sm:$0xff] %v876
        $region120: #{tpu_custom_call.1} parent=67 // pred_fallthru
          _
        %v879 = vld [vmem:[%s869] sm:$0xff]
        %v880 = vld [vmem:[%s869 + $0x8] sm:$0xff]
        %v881 = vld [vmem:[%s673] sm:$0x3]
        %v882 = vld [vmem:[%s683] sm:$0x3]
        %v883 = vadd.f32 %v879, %v880
        %884 = vadd.xlane.f32.xlu0 %v883
        %v885 = vpop.xlane.xlu0 %884
        %v886 = vrcp.pop 256.0
        %v887 = vmul.f32 256.0, %v886
        %v888 = vsub.f32 1.0, %v887
        %v889 = vmul.f32 %v886, %v888
        %v890 = vadd.f32 %v886, %v889
        %vm891 = vweird.f32 %v886
        %v892 = vsel %vm891, %v886, %v890
        %v893 = vmul.f32 %v885, %v892
        %v894 = vsub.f32 %v879, %v893
        %v895 = vsub.f32 %v880, %v893
        %v896 = vmul.f32 %v894, %v894
        %v897 = vmul.f32 %v895, %v895
        %v898 = vadd.f32 %v896, %v897
        %899 = vadd.xlane.f32.xlu0 %v898
        %v900 = vpop.xlane.xlu0 %899
        %v901 = vmul.f32 %v900, %v892
        %v902 = vadd.f32 %v901, 1e-05
        %v903 = vrsqrt.pop %v902
        %v904 = vmul.f32 %v903, %v902
        %v905 = vmul.f32 %v904, %v903
        %v906 = vmul.f32 0.5, %v905
        %v907 = vsub.f32 1.5, %v906
        %v908 = vmul.f32 %v903, %v907
        %vm909 = vweird.f32 %v902
        %vm910 = vweird.f32 %v903
        %vm911 = vmor %vm909, %vm910
        %v912 = vsel %vm911, %v903, %v908
        %v913 = vmul.f32 %v894, %v912
        %v914 = vmul.f32 %v895, %v912
        %v916 = vperm.slane %v881, 0
        %v917 = vperm.slane %v881, 1
        %v920 = vmul.f32 %v913, %v916
        %v921 = vmul.f32 %v914, %v917
        %v923 = vperm.slane %v882, 0
        %v924 = vperm.slane %v882, 1
        %v927 = vadd.f32 %v920, %v923
        %v928 = vadd.f32 %v921, %v924
        %v929 = vld [vmem:[%s693] sm:$0xff]
        %v930 = vld [vmem:[%s693 + $0x8] sm:$0xff]
        %v931 = vld [vmem:[%s693 + $0x10] sm:$0xff]
        %v932 = vld [vmem:[%s693 + $0x18] sm:$0xff]
        %v933 = vld [vmem:[%s693 + $0x20] sm:$0xff]
        %v934 = vld [vmem:[%s693 + $0x28] sm:$0xff]
        %v935 = vld [vmem:[%s693 + $0x30] sm:$0xff]
        %v936 = vld [vmem:[%s693 + $0x38] sm:$0xff]
        %v937 = vld [vmem:[%s693 + $0x40] sm:$0xff]
        %v938 = vld [vmem:[%s693 + $0x48] sm:$0xff]
        %v939 = vld [vmem:[%s693 + $0x50] sm:$0xff]
        %v940 = vld [vmem:[%s693 + $0x58] sm:$0xff]
        %v941 = vld [vmem:[%s693 + $0x60] sm:$0xff]
        %v942 = vld [vmem:[%s693 + $0x68] sm:$0xff]
        %v943 = vld [vmem:[%s693 + $0x70] sm:$0xff]
        %v944 = vld [vmem:[%s693 + $0x78] sm:$0xff]
        %v945 = vld [vmem:[%s693 + $0x80] sm:$0xff]
        %v946 = vld [vmem:[%s693 + $0x88] sm:$0xff]
        %v947 = vld [vmem:[%s693 + $0x90] sm:$0xff]
        %v948 = vld [vmem:[%s693 + $0x98] sm:$0xff]
        %v949 = vld [vmem:[%s693 + $0xa0] sm:$0xff]
        %v950 = vld [vmem:[%s693 + $0xa8] sm:$0xff]
        %v951 = vld [vmem:[%s693 + $0xb0] sm:$0xff]
        %v952 = vld [vmem:[%s693 + $0xb8] sm:$0xff]
        %v953 = vld [vmem:[%s693 + $0xc0] sm:$0xff]
        %v954 = vld [vmem:[%s693 + $0xc8] sm:$0xff]
        %v955 = vld [vmem:[%s693 + $0xd0] sm:$0xff]
        %v956 = vld [vmem:[%s693 + $0xd8] sm:$0xff]
        %v957 = vld [vmem:[%s693 + $0xe0] sm:$0xff]
        %v958 = vld [vmem:[%s693 + $0xe8] sm:$0xff]
        %v959 = vld [vmem:[%s693 + $0xf0] sm:$0xff]
        %v960 = vld [vmem:[%s693 + $0xf8] sm:$0xff]
        %v961 = vld [vmem:[%s693 + $0x100] sm:$0xff]
        %v962 = vld [vmem:[%s693 + $0x108] sm:$0xff]
        %v963 = vld [vmem:[%s693 + $0x110] sm:$0xff]
        %v964 = vld [vmem:[%s693 + $0x118] sm:$0xff]
        %v965 = vld [vmem:[%s693 + $0x120] sm:$0xff]
        %v966 = vld [vmem:[%s693 + $0x128] sm:$0xff]
        %v967 = vld [vmem:[%s693 + $0x130] sm:$0xff]
        %v968 = vld [vmem:[%s693 + $0x138] sm:$0xff]
        %v969 = vld [vmem:[%s693 + $0x140] sm:$0xff]
        %v970 = vld [vmem:[%s693 + $0x148] sm:$0xff]
        %v971 = vld [vmem:[%s693 + $0x150] sm:$0xff]
        %v972 = vld [vmem:[%s693 + $0x158] sm:$0xff]
        %v973 = vld [vmem:[%s693 + $0x160] sm:$0xff]
        %v974 = vld [vmem:[%s693 + $0x168] sm:$0xff]
        %v975 = vld [vmem:[%s693 + $0x170] sm:$0xff]
        %v976 = vld [vmem:[%s693 + $0x178] sm:$0xff]
        %v977 = vld [vmem:[%s693 + $0x180] sm:$0xff]
        %v978 = vld [vmem:[%s693 + $0x188] sm:$0xff]
        %v979 = vld [vmem:[%s693 + $0x190] sm:$0xff]
        %v980 = vld [vmem:[%s693 + $0x198] sm:$0xff]
        %v981 = vld [vmem:[%s693 + $0x1a0] sm:$0xff]
        %v982 = vld [vmem:[%s693 + $0x1a8] sm:$0xff]
        %v983 = vld [vmem:[%s693 + $0x1b0] sm:$0xff]
        %v984 = vld [vmem:[%s693 + $0x1b8] sm:$0xff]
        %v985 = vld [vmem:[%s693 + $0x1c0] sm:$0xff]
        %v986 = vld [vmem:[%s693 + $0x1c8] sm:$0xff]
        %v987 = vld [vmem:[%s693 + $0x1d0] sm:$0xff]
        %v988 = vld [vmem:[%s693 + $0x1d8] sm:$0xff]
        %v989 = vld [vmem:[%s693 + $0x1e0] sm:$0xff]
        %v990 = vld [vmem:[%s693 + $0x1e8] sm:$0xff]
        %v991 = vld [vmem:[%s693 + $0x1f0] sm:$0xff]
        %v992 = vld [vmem:[%s693 + $0x1f8] sm:$0xff]
        %v993 = vld [vmem:[%s693 + $0x200] sm:$0xff]
        %v994 = vld [vmem:[%s693 + $0x208] sm:$0xff]
        %v995 = vld [vmem:[%s693 + $0x210] sm:$0xff]
        %v996 = vld [vmem:[%s693 + $0x218] sm:$0xff]
        %v997 = vld [vmem:[%s693 + $0x220] sm:$0xff]
        %v998 = vld [vmem:[%s693 + $0x228] sm:$0xff]
        %v999 = vld [vmem:[%s693 + $0x230] sm:$0xff]
        %v1000 = vld [vmem:[%s693 + $0x238] sm:$0xff]
        %v1001 = vld [vmem:[%s693 + $0x240] sm:$0xff]
        %v1002 = vld [vmem:[%s693 + $0x248] sm:$0xff]
        %v1003 = vld [vmem:[%s693 + $0x250] sm:$0xff]
        %v1004 = vld [vmem:[%s693 + $0x258] sm:$0xff]
        %v1005 = vld [vmem:[%s693 + $0x260] sm:$0xff]
        %v1006 = vld [vmem:[%s693 + $0x268] sm:$0xff]
        %v1007 = vld [vmem:[%s693 + $0x270] sm:$0xff]
        %v1008 = vld [vmem:[%s693 + $0x278] sm:$0xff]
        %v1009 = vld [vmem:[%s693 + $0x280] sm:$0xff]
        %v1010 = vld [vmem:[%s693 + $0x288] sm:$0xff]
        %v1011 = vld [vmem:[%s693 + $0x290] sm:$0xff]
        %v1012 = vld [vmem:[%s693 + $0x298] sm:$0xff]
        %v1013 = vld [vmem:[%s693 + $0x2a0] sm:$0xff]
        %v1014 = vld [vmem:[%s693 + $0x2a8] sm:$0xff]
        %v1015 = vld [vmem:[%s693 + $0x2b0] sm:$0xff]
        %v1016 = vld [vmem:[%s693 + $0x2b8] sm:$0xff]
        %v1017 = vld [vmem:[%s693 + $0x2c0] sm:$0xff]
        %v1018 = vld [vmem:[%s693 + $0x2c8] sm:$0xff]
        %v1019 = vld [vmem:[%s693 + $0x2d0] sm:$0xff]
        %v1020 = vld [vmem:[%s693 + $0x2d8] sm:$0xff]
        %v1021 = vld [vmem:[%s693 + $0x2e0] sm:$0xff]
        %v1022 = vld [vmem:[%s693 + $0x2e8] sm:$0xff]
        %v1023 = vld [vmem:[%s693 + $0x2f0] sm:$0xff]
        %v1024 = vld [vmem:[%s693 + $0x2f8] sm:$0xff]
        %v1025 = vpack.c.bf16 %v927, %v927
        %v1026 = vpack.c.bf16 %v928, %v928
        %v1123 = vunpack.c.l.b16 %v929
        %v1124 = vunpack.c.h.b16 %v929
        %v1125 = vunpack.c.l.b16 %v930
        %v1126 = vunpack.c.h.b16 %v930
        %v1127 = vunpack.c.l.b16 %v931
        %v1128 = vunpack.c.h.b16 %v931
        %v1129 = vunpack.c.l.b16 %v932
        %v1130 = vunpack.c.h.b16 %v932
        %v1131 = vunpack.c.l.b16 %v933
        %v1132 = vunpack.c.h.b16 %v933
        %v1133 = vunpack.c.l.b16 %v934
        %v1134 = vunpack.c.h.b16 %v934
        %v1135 = vunpack.c.l.b16 %v935
        %v1136 = vunpack.c.h.b16 %v935
        %v1137 = vunpack.c.l.b16 %v936
        %v1138 = vunpack.c.h.b16 %v936
        %v1139 = vunpack.c.l.b16 %v937
        %v1140 = vunpack.c.h.b16 %v937
        %v1141 = vunpack.c.l.b16 %v938
        %v1142 = vunpack.c.h.b16 %v938
        %v1143 = vunpack.c.l.b16 %v939
        %v1144 = vunpack.c.h.b16 %v939
        %v1145 = vunpack.c.l.b16 %v940
        %v1146 = vunpack.c.h.b16 %v940
        %v1147 = vunpack.c.l.b16 %v941
        %v1148 = vunpack.c.h.b16 %v941
        %v1149 = vunpack.c.l.b16 %v942
        %v1150 = vunpack.c.h.b16 %v942
        %v1151 = vunpack.c.l.b16 %v943
        %v1152 = vunpack.c.h.b16 %v943
        %v1153 = vunpack.c.l.b16 %v944
        %v1154 = vunpack.c.h.b16 %v944
        %v1155 = vunpack.c.l.b16 %v945
        %v1156 = vunpack.c.h.b16 %v945
        %v1157 = vunpack.c.l.b16 %v946
        %v1158 = vunpack.c.h.b16 %v946
        %v1159 = vunpack.c.l.b16 %v947
        %v1160 = vunpack.c.h.b16 %v947
        %v1161 = vunpack.c.l.b16 %v948
        %v1162 = vunpack.c.h.b16 %v948
        %v1163 = vunpack.c.l.b16 %v949
        %v1164 = vunpack.c.h.b16 %v949
        %v1165 = vunpack.c.l.b16 %v950
        %v1166 = vunpack.c.h.b16 %v950
        %v1167 = vunpack.c.l.b16 %v951
        %v1168 = vunpack.c.h.b16 %v951
        %v1169 = vunpack.c.l.b16 %v952
        %v1170 = vunpack.c.h.b16 %v952
        %v1171 = vunpack.c.l.b16 %v953
        %v1172 = vunpack.c.h.b16 %v953
        %v1173 = vunpack.c.l.b16 %v954
        %v1174 = vunpack.c.h.b16 %v954
        %v1175 = vunpack.c.l.b16 %v955
        %v1176 = vunpack.c.h.b16 %v955
        %v1177 = vunpack.c.l.b16 %v956
        %v1178 = vunpack.c.h.b16 %v956
        %v1179 = vunpack.c.l.b16 %v957
        %v1180 = vunpack.c.h.b16 %v957
        %v1181 = vunpack.c.l.b16 %v958
        %v1182 = vunpack.c.h.b16 %v958
        %v1183 = vunpack.c.l.b16 %v959
        %v1184 = vunpack.c.h.b16 %v959
        %v1185 = vunpack.c.l.b16 %v960
        %v1186 = vunpack.c.h.b16 %v960
        %v1187 = vunpack.c.l.b16 %v961
        %v1188 = vunpack.c.h.b16 %v961
        %v1189 = vunpack.c.l.b16 %v962
        %v1190 = vunpack.c.h.b16 %v962
        %v1191 = vunpack.c.l.b16 %v963
        %v1192 = vunpack.c.h.b16 %v963
        %v1193 = vunpack.c.l.b16 %v964
        %v1194 = vunpack.c.h.b16 %v964
        %v1195 = vunpack.c.l.b16 %v965
        %v1196 = vunpack.c.h.b16 %v965
        %v1197 = vunpack.c.l.b16 %v966
        %v1198 = vunpack.c.h.b16 %v966
        %v1199 = vunpack.c.l.b16 %v967
        %v1200 = vunpack.c.h.b16 %v967
        %v1201 = vunpack.c.l.b16 %v968
        %v1202 = vunpack.c.h.b16 %v968
        %v1203 = vunpack.c.l.b16 %v969
        %v1204 = vunpack.c.h.b16 %v969
        %v1205 = vunpack.c.l.b16 %v970
        %v1206 = vunpack.c.h.b16 %v970
        %v1207 = vunpack.c.l.b16 %v971
        %v1208 = vunpack.c.h.b16 %v971
        %v1209 = vunpack.c.l.b16 %v972
        %v1210 = vunpack.c.h.b16 %v972
        %v1211 = vunpack.c.l.b16 %v973
        %v1212 = vunpack.c.h.b16 %v973
        %v1213 = vunpack.c.l.b16 %v974
        %v1214 = vunpack.c.h.b16 %v974
        %v1215 = vunpack.c.l.b16 %v975
        %v1216 = vunpack.c.h.b16 %v975
        %v1217 = vunpack.c.l.b16 %v976
        %v1218 = vunpack.c.h.b16 %v976
        %v1219 = vunpack.c.l.b16 %v977
        %v1220 = vunpack.c.h.b16 %v977
        %v1221 = vunpack.c.l.b16 %v978
        %v1222 = vunpack.c.h.b16 %v978
        %v1223 = vunpack.c.l.b16 %v979
        %v1224 = vunpack.c.h.b16 %v979
        %v1225 = vunpack.c.l.b16 %v980
        %v1226 = vunpack.c.h.b16 %v980
        %v1227 = vunpack.c.l.b16 %v981
        %v1228 = vunpack.c.h.b16 %v981
        %v1229 = vunpack.c.l.b16 %v982
        %v1230 = vunpack.c.h.b16 %v982
        %v1231 = vunpack.c.l.b16 %v983
        %v1232 = vunpack.c.h.b16 %v983
        %v1233 = vunpack.c.l.b16 %v984
        %v1234 = vunpack.c.h.b16 %v984
        %v1235 = vunpack.c.l.b16 %v985
        %v1236 = vunpack.c.h.b16 %v985
        %v1237 = vunpack.c.l.b16 %v986
        %v1238 = vunpack.c.h.b16 %v986
        %v1239 = vunpack.c.l.b16 %v987
        %v1240 = vunpack.c.h.b16 %v987
        %v1241 = vunpack.c.l.b16 %v988
        %v1242 = vunpack.c.h.b16 %v988
        %v1243 = vunpack.c.l.b16 %v989
        %v1244 = vunpack.c.h.b16 %v989
        %v1245 = vunpack.c.l.b16 %v990
        %v1246 = vunpack.c.h.b16 %v990
        %v1247 = vunpack.c.l.b16 %v991
        %v1248 = vunpack.c.h.b16 %v991
        %v1249 = vunpack.c.l.b16 %v992
        %v1250 = vunpack.c.h.b16 %v992
        %v1251 = vunpack.c.l.b16 %v993
        %v1252 = vunpack.c.h.b16 %v993
        %v1253 = vunpack.c.l.b16 %v994
        %v1254 = vunpack.c.h.b16 %v994
        %v1255 = vunpack.c.l.b16 %v995
        %v1256 = vunpack.c.h.b16 %v995
        %v1257 = vunpack.c.l.b16 %v996
        %v1258 = vunpack.c.h.b16 %v996
        %v1259 = vunpack.c.l.b16 %v997
        %v1260 = vunpack.c.h.b16 %v997
        %v1261 = vunpack.c.l.b16 %v998
        %v1262 = vunpack.c.h.b16 %v998
        %v1263 = vunpack.c.l.b16 %v999
        %v1264 = vunpack.c.h.b16 %v999
        %v1265 = vunpack.c.l.b16 %v1000
        %v1266 = vunpack.c.h.b16 %v1000
        %v1267 = vunpack.c.l.b16 %v1001
        %v1268 = vunpack.c.h.b16 %v1001
        %v1269 = vunpack.c.l.b16 %v1002
        %v1270 = vunpack.c.h.b16 %v1002
        %v1271 = vunpack.c.l.b16 %v1003
        %v1272 = vunpack.c.h.b16 %v1003
        %v1273 = vunpack.c.l.b16 %v1004
        %v1274 = vunpack.c.h.b16 %v1004
        %v1275 = vunpack.c.l.b16 %v1005
        %v1276 = vunpack.c.h.b16 %v1005
        %v1277 = vunpack.c.l.b16 %v1006
        %v1278 = vunpack.c.h.b16 %v1006
        %v1279 = vunpack.c.l.b16 %v1007
        %v1280 = vunpack.c.h.b16 %v1007
        %v1281 = vunpack.c.l.b16 %v1008
        %v1282 = vunpack.c.h.b16 %v1008
        %v1283 = vunpack.c.l.b16 %v1009
        %v1284 = vunpack.c.h.b16 %v1009
        %v1285 = vunpack.c.l.b16 %v1010
        %v1286 = vunpack.c.h.b16 %v1010
        %v1287 = vunpack.c.l.b16 %v1011
        %v1288 = vunpack.c.h.b16 %v1011
        %v1289 = vunpack.c.l.b16 %v1012
        %v1290 = vunpack.c.h.b16 %v1012
        %v1291 = vunpack.c.l.b16 %v1013
        %v1292 = vunpack.c.h.b16 %v1013
        %v1293 = vunpack.c.l.b16 %v1014
        %v1294 = vunpack.c.h.b16 %v1014
        %v1295 = vunpack.c.l.b16 %v1015
        %v1296 = vunpack.c.h.b16 %v1015
        %v1297 = vunpack.c.l.b16 %v1016
        %v1298 = vunpack.c.h.b16 %v1016
        %v1299 = vunpack.c.l.b16 %v1017
        %v1300 = vunpack.c.h.b16 %v1017
        %v1301 = vunpack.c.l.b16 %v1018
        %v1302 = vunpack.c.h.b16 %v1018
        %v1303 = vunpack.c.l.b16 %v1019
        %v1304 = vunpack.c.h.b16 %v1019
        %v1305 = vunpack.c.l.b16 %v1020
        %v1306 = vunpack.c.h.b16 %v1020
        %v1307 = vunpack.c.l.b16 %v1021
        %v1308 = vunpack.c.h.b16 %v1021
        %v1309 = vunpack.c.l.b16 %v1022
        %v1310 = vunpack.c.h.b16 %v1022
        %v1311 = vunpack.c.l.b16 %v1023
        %v1312 = vunpack.c.h.b16 %v1023
        %v1313 = vunpack.c.l.b16 %v1024
        %v1314 = vunpack.c.h.b16 %v1024
        %v1315 = vpack.c.b16 %v1129, %v1123
        %v1316 = vpack.c.b16 %v1130, %v1124
        %v1317 = vpack.c.b16 %v1131, %v1125
        %v1318 = vpack.c.b16 %v1132, %v1126
        %v1319 = vpack.c.b16 %v1133, %v1127
        %v1320 = vpack.c.b16 %v1134, %v1128
        %v1321 = vpack.c.b16 %v1141, %v1135
        %v1322 = vpack.c.b16 %v1142, %v1136
        %v1323 = vpack.c.b16 %v1143, %v1137
        %v1324 = vpack.c.b16 %v1144, %v1138
        %v1325 = vpack.c.b16 %v1145, %v1139
        %v1326 = vpack.c.b16 %v1146, %v1140
        %v1327 = vpack.c.b16 %v1153, %v1147
        %v1328 = vpack.c.b16 %v1154, %v1148
        %v1329 = vpack.c.b16 %v1155, %v1149
        %v1330 = vpack.c.b16 %v1156, %v1150
        %v1331 = vpack.c.b16 %v1157, %v1151
        %v1332 = vpack.c.b16 %v1158, %v1152
        %v1333 = vpack.c.b16 %v1165, %v1159
        %v1334 = vpack.c.b16 %v1166, %v1160
        %v1335 = vpack.c.b16 %v1167, %v1161
        %v1336 = vpack.c.b16 %v1168, %v1162
        %v1337 = vpack.c.b16 %v1169, %v1163
        %v1338 = vpack.c.b16 %v1170, %v1164
        %v1339 = vpack.c.b16 %v1177, %v1171
        %v1340 = vpack.c.b16 %v1178, %v1172
        %v1341 = vpack.c.b16 %v1179, %v1173
        %v1342 = vpack.c.b16 %v1180, %v1174
        %v1343 = vpack.c.b16 %v1181, %v1175
        %v1344 = vpack.c.b16 %v1182, %v1176
        %v1345 = vpack.c.b16 %v1189, %v1183
        %v1346 = vpack.c.b16 %v1190, %v1184
        %v1347 = vpack.c.b16 %v1191, %v1185
        %v1348 = vpack.c.b16 %v1192, %v1186
        %v1349 = vpack.c.b16 %v1193, %v1187
        %v1350 = vpack.c.b16 %v1194, %v1188
        %v1351 = vpack.c.b16 %v1201, %v1195
        %v1352 = vpack.c.b16 %v1202, %v1196
        %v1353 = vpack.c.b16 %v1203, %v1197
        %v1354 = vpack.c.b16 %v1204, %v1198
        %v1355 = vpack.c.b16 %v1205, %v1199
        %v1356 = vpack.c.b16 %v1206, %v1200
        %v1357 = vpack.c.b16 %v1213, %v1207
        %v1358 = vpack.c.b16 %v1214, %v1208
        %v1359 = vpack.c.b16 %v1215, %v1209
        %v1360 = vpack.c.b16 %v1216, %v1210
        %v1361 = vpack.c.b16 %v1217, %v1211
        %v1362 = vpack.c.b16 %v1218, %v1212
        %v1363 = vpack.c.b16 %v1225, %v1219
        %v1364 = vpack.c.b16 %v1226, %v1220
        %v1365 = vpack.c.b16 %v1227, %v1221
        %v1366 = vpack.c.b16 %v1228, %v1222
        %v1367 = vpack.c.b16 %v1229, %v1223
        %v1368 = vpack.c.b16 %v1230, %v1224
        %v1369 = vpack.c.b16 %v1237, %v1231
        %v1370 = vpack.c.b16 %v1238, %v1232
        %v1371 = vpack.c.b16 %v1239, %v1233
        %v1372 = vpack.c.b16 %v1240, %v1234
        %v1373 = vpack.c.b16 %v1241, %v1235
        %v1374 = vpack.c.b16 %v1242, %v1236
        %v1375 = vpack.c.b16 %v1249, %v1243
        %v1376 = vpack.c.b16 %v1250, %v1244
        %v1377 = vpack.c.b16 %v1251, %v1245
        %v1378 = vpack.c.b16 %v1252, %v1246
        %v1379 = vpack.c.b16 %v1253, %v1247
        %v1380 = vpack.c.b16 %v1254, %v1248
        %v1381 = vpack.c.b16 %v1261, %v1255
        %v1382 = vpack.c.b16 %v1262, %v1256
        %v1383 = vpack.c.b16 %v1263, %v1257
        %v1384 = vpack.c.b16 %v1264, %v1258
        %v1385 = vpack.c.b16 %v1265, %v1259
        %v1386 = vpack.c.b16 %v1266, %v1260
        %v1387 = vpack.c.b16 %v1273, %v1267
        %v1388 = vpack.c.b16 %v1274, %v1268
        %v1389 = vpack.c.b16 %v1275, %v1269
        %v1390 = vpack.c.b16 %v1276, %v1270
        %v1391 = vpack.c.b16 %v1277, %v1271
        %v1392 = vpack.c.b16 %v1278, %v1272
        %v1393 = vpack.c.b16 %v1285, %v1279
        %v1394 = vpack.c.b16 %v1286, %v1280
        %v1395 = vpack.c.b16 %v1287, %v1281
        %v1396 = vpack.c.b16 %v1288, %v1282
        %v1397 = vpack.c.b16 %v1289, %v1283
        %v1398 = vpack.c.b16 %v1290, %v1284
        %v1399 = vpack.c.b16 %v1297, %v1291
        %v1400 = vpack.c.b16 %v1298, %v1292
        %v1401 = vpack.c.b16 %v1299, %v1293
        %v1402 = vpack.c.b16 %v1300, %v1294
        %v1403 = vpack.c.b16 %v1301, %v1295
        %v1404 = vpack.c.b16 %v1302, %v1296
        %v1405 = vpack.c.b16 %v1309, %v1303
        %v1406 = vpack.c.b16 %v1310, %v1304
        %v1407 = vpack.c.b16 %v1311, %v1305
        %v1408 = vpack.c.b16 %v1312, %v1306
        %v1409 = vpack.c.b16 %v1313, %v1307
        %v1410 = vpack.c.b16 %v1314, %v1308
        %1507 = vmatpush.bf16.msra.mxu0 %v1357
        %1508 = vmatpush.bf16.msra.mxu0 %v1351
        %1509 = vmatpush.bf16.msra.mxu0 %v1345
        %1510 = vmatpush.bf16.msra.mxu0 %v1339
        %1511 = vmatpush.bf16.msra.mxu0 %v1333
        %1512 = vmatpush.bf16.msra.mxu0 %v1327
        %1513 = vmatpush.bf16.msra.mxu0 %v1321
        %1514 = vmatpush.bf16.msra.mxu0 %v1315
        %1515 = vmatmul.bf16.gmra.mxu0 %v1025
        %v1516 = vpop.f32.mrf.mxu0
        %v1517 = vadd.f32 0.0, %v1516
        %v1518 = vpop.f32.mrf.mxu0
        %1519 = vdwg.mxu0
        %1520 = vmatpush.bf16.msra.mxu0 %v1405
        %1521 = vmatpush.bf16.msra.mxu0 %v1399
        %1522 = vmatpush.bf16.msra.mxu0 %v1393
        %1523 = vmatpush.bf16.msra.mxu0 %v1387
        %1524 = vmatpush.bf16.msra.mxu0 %v1381
        %1525 = vmatpush.bf16.msra.mxu0 %v1375
        %1526 = vmatpush.bf16.msra.mxu0 %v1369
        %1527 = vmatpush.bf16.msra.mxu0 %v1363
        %1528 = vmatmul.bf16.gmra.mxu0 %v1026
        %v1529 = vpop.f32.mrf.mxu0
        %v1530 = vadd.f32 %v1517, %v1529
        %v1531 = vpop.f32.mrf.mxu0
        %1532 = vdwg.mxu0
        %1533 = vmatpush.bf16.msra.mxu0 %v1358
        %1534 = vmatpush.bf16.msra.mxu0 %v1352
        %1535 = vmatpush.bf16.msra.mxu0 %v1346
        %1536 = vmatpush.bf16.msra.mxu0 %v1340
        %1537 = vmatpush.bf16.msra.mxu0 %v1334
        %1538 = vmatpush.bf16.msra.mxu0 %v1328
        %1539 = vmatpush.bf16.msra.mxu0 %v1322
        %1540 = vmatpush.bf16.msra.mxu0 %v1316
        %1541 = vmatmul.bf16.gmra.mxu0 %v1025
        %v1542 = vpop.f32.mrf.mxu0
        %v1543 = vadd.f32 0.0, %v1542
        %v1544 = vpop.f32.mrf.mxu0
        %1545 = vdwg.mxu0
        %1546 = vmatpush.bf16.msra.mxu0 %v1406
        %1547 = vmatpush.bf16.msra.mxu0 %v1400
        %1548 = vmatpush.bf16.msra.mxu0 %v1394
        %1549 = vmatpush.bf16.msra.mxu0 %v1388
        %1550 = vmatpush.bf16.msra.mxu0 %v1382
        %1551 = vmatpush.bf16.msra.mxu0 %v1376
        %1552 = vmatpush.bf16.msra.mxu0 %v1370
        %1553 = vmatpush.bf16.msra.mxu0 %v1364
        %1554 = vmatmul.bf16.gmra.mxu0 %v1026
        %v1555 = vpop.f32.mrf.mxu0
        %v1556 = vadd.f32 %v1543, %v1555
        %v1557 = vpop.f32.mrf.mxu0
        %1558 = vdwg.mxu0
        %1559 = vmatpush.bf16.msra.mxu0 %v1359
        %1560 = vmatpush.bf16.msra.mxu0 %v1353
        %1561 = vmatpush.bf16.msra.mxu0 %v1347
        %1562 = vmatpush.bf16.msra.mxu0 %v1341
        %1563 = vmatpush.bf16.msra.mxu0 %v1335
        %1564 = vmatpush.bf16.msra.mxu0 %v1329
        %1565 = vmatpush.bf16.msra.mxu0 %v1323
        %1566 = vmatpush.bf16.msra.mxu0 %v1317
        %1567 = vmatmul.bf16.gmra.mxu0 %v1025
        %v1568 = vpop.f32.mrf.mxu0
        %v1569 = vadd.f32 0.0, %v1568
        %v1570 = vpop.f32.mrf.mxu0
        %1571 = vdwg.mxu0
        %1572 = vmatpush.bf16.msra.mxu0 %v1407
        %1573 = vmatpush.bf16.msra.mxu0 %v1401
        %1574 = vmatpush.bf16.msra.mxu0 %v1395
        %1575 = vmatpush.bf16.msra.mxu0 %v1389
        %1576 = vmatpush.bf16.msra.mxu0 %v1383
        %1577 = vmatpush.bf16.msra.mxu0 %v1377
        %1578 = vmatpush.bf16.msra.mxu0 %v1371
        %1579 = vmatpush.bf16.msra.mxu0 %v1365
        %1580 = vmatmul.bf16.gmra.mxu0 %v1026
        %v1581 = vpop.f32.mrf.mxu0
        %v1582 = vadd.f32 %v1569, %v1581
        %v1583 = vpop.f32.mrf.mxu0
        %1584 = vdwg.mxu0
        %1585 = vmatpush.bf16.msra.mxu0 %v1360
        %1586 = vmatpush.bf16.msra.mxu0 %v1354
        %1587 = vmatpush.bf16.msra.mxu0 %v1348
        %1588 = vmatpush.bf16.msra.mxu0 %v1342
        %1589 = vmatpush.bf16.msra.mxu0 %v1336
        %1590 = vmatpush.bf16.msra.mxu0 %v1330
        %1591 = vmatpush.bf16.msra.mxu0 %v1324
        %1592 = vmatpush.bf16.msra.mxu0 %v1318
        %1593 = vmatmul.bf16.gmra.mxu0 %v1025
        %v1594 = vpop.f32.mrf.mxu0
        %v1595 = vadd.f32 0.0, %v1594
        %v1596 = vpop.f32.mrf.mxu0
        %1597 = vdwg.mxu0
        %1598 = vmatpush.bf16.msra.mxu0 %v1408
        %1599 = vmatpush.bf16.msra.mxu0 %v1402
        %1600 = vmatpush.bf16.msra.mxu0 %v1396
        %1601 = vmatpush.bf16.msra.mxu0 %v1390
        %1602 = vmatpush.bf16.msra.mxu0 %v1384
        %1603 = vmatpush.bf16.msra.mxu0 %v1378
        %1604 = vmatpush.bf16.msra.mxu0 %v1372
        %1605 = vmatpush.bf16.msra.mxu0 %v1366
        %1606 = vmatmul.bf16.gmra.mxu0 %v1026
        %v1607 = vpop.f32.mrf.mxu0
        %v1608 = vadd.f32 %v1595, %v1607
        %v1609 = vpop.f32.mrf.mxu0
        %1610 = vdwg.mxu0
        %1611 = vmatpush.bf16.msra.mxu0 %v1361
        %1612 = vmatpush.bf16.msra.mxu0 %v1355
        %1613 = vmatpush.bf16.msra.mxu0 %v1349
        %1614 = vmatpush.bf16.msra.mxu0 %v1343
        %1615 = vmatpush.bf16.msra.mxu0 %v1337
        %1616 = vmatpush.bf16.msra.mxu0 %v1331
        %1617 = vmatpush.bf16.msra.mxu0 %v1325
        %1618 = vmatpush.bf16.msra.mxu0 %v1319
        %1619 = vmatmul.bf16.gmra.mxu0 %v1025
        %v1620 = vpop.f32.mrf.mxu0
        %v1621 = vadd.f32 0.0, %v1620
        %v1622 = vpop.f32.mrf.mxu0
        %1623 = vdwg.mxu0
        %1624 = vmatpush.bf16.msra.mxu0 %v1409
        %1625 = vmatpush.bf16.msra.mxu0 %v1403
        %1626 = vmatpush.bf16.msra.mxu0 %v1397
        %1627 = vmatpush.bf16.msra.mxu0 %v1391
        %1628 = vmatpush.bf16.msra.mxu0 %v1385
        %1629 = vmatpush.bf16.msra.mxu0 %v1379
        %1630 = vmatpush.bf16.msra.mxu0 %v1373
        %1631 = vmatpush.bf16.msra.mxu0 %v1367
        %1632 = vmatmul.bf16.gmra.mxu0 %v1026
        %v1633 = vpop.f32.mrf.mxu0
        %v1634 = vadd.f32 %v1621, %v1633
        %v1635 = vpop.f32.mrf.mxu0
        %1636 = vdwg.mxu0
        %1637 = vmatpush.bf16.msra.mxu0 %v1362
        %1638 = vmatpush.bf16.msra.mxu0 %v1356
        %1639 = vmatpush.bf16.msra.mxu0 %v1350
        %1640 = vmatpush.bf16.msra.mxu0 %v1344
        %1641 = vmatpush.bf16.msra.mxu0 %v1338
        %1642 = vmatpush.bf16.msra.mxu0 %v1332
        %1643 = vmatpush.bf16.msra.mxu0 %v1326
        %1644 = vmatpush.bf16.msra.mxu0 %v1320
        %1645 = vmatmul.bf16.gmra.mxu0 %v1025
        %v1646 = vpop.f32.mrf.mxu0
        %v1647 = vadd.f32 0.0, %v1646
        %v1648 = vpop.f32.mrf.mxu0
        %1649 = vdwg.mxu0
        %1650 = vmatpush.bf16.msra.mxu0 %v1410
        %1651 = vmatpush.bf16.msra.mxu0 %v1404
        %1652 = vmatpush.bf16.msra.mxu0 %v1398
        %1653 = vmatpush.bf16.msra.mxu0 %v1392
        %1654 = vmatpush.bf16.msra.mxu0 %v1386
        %1655 = vmatpush.bf16.msra.mxu0 %v1380
        %1656 = vmatpush.bf16.msra.mxu0 %v1374
        %1657 = vmatpush.bf16.msra.mxu0 %v1368
        %1658 = vmatmul.bf16.gmra.mxu0 %v1026
        %v1659 = vpop.f32.mrf.mxu0
        %v1660 = vadd.f32 %v1647, %v1659
        %v1661 = vpop.f32.mrf.mxu0
        %1662 = vdwg.mxu0
        %v1663 = vmul.f32 %v1530, 0.0625
        %v1664 = vmul.f32 %v1556, 0.0625
        %v1665 = vpack.c.bf16 %v1664, %v1663
        %v1666 = vpack.c.bf16 %v1608, %v1582
        %v1667 = vpack.c.bf16 %v1660, %v1634
        %v1668 = vld [vmem:[%s703] sm:$0xff]
        %v1669 = vld [vmem:[%s703 + $0x8] sm:$0xff]
        %v1670 = vld [vmem:[%s703 + $0x10] sm:$0xff]
        %v1671 = vld [vmem:[%s703 + $0x18] sm:$0xff]
        %v1672 = vld [vmem:[%s703 + $0x20] sm:$0xff]
        %v1673 = vld [vmem:[%s703 + $0x28] sm:$0xff]
        %v1674 = vld [vmem:[%s703 + $0x30] sm:$0xff]
        %v1675 = vld [vmem:[%s703 + $0x38] sm:$0xff]
        %v1676 = vld [vmem:[%s703 + $0x40] sm:$0xff]
        %v1677 = vld [vmem:[%s703 + $0x48] sm:$0xff]
        %v1678 = vld [vmem:[%s703 + $0x50] sm:$0xff]
        %v1679 = vld [vmem:[%s703 + $0x58] sm:$0xff]
        %v1680 = vld [vmem:[%s703 + $0x60] sm:$0xff]
        %v1681 = vld [vmem:[%s703 + $0x68] sm:$0xff]
        %v1682 = vld [vmem:[%s703 + $0x70] sm:$0xff]
        %v1683 = vld [vmem:[%s703 + $0x78] sm:$0xff]
        %v1684 = vld [vmem:[%s703 + $0x80] sm:$0xff]
        %v1685 = vld [vmem:[%s703 + $0x88] sm:$0xff]
        %v1686 = vld [vmem:[%s703 + $0x90] sm:$0xff]
        %v1687 = vld [vmem:[%s703 + $0x98] sm:$0xff]
        %v1688 = vld [vmem:[%s703 + $0xa0] sm:$0xff]
        %v1689 = vld [vmem:[%s703 + $0xa8] sm:$0xff]
        %v1690 = vld [vmem:[%s703 + $0xb0] sm:$0xff]
        %v1691 = vld [vmem:[%s703 + $0xb8] sm:$0xff]
        %v1692 = vld [vmem:[%s703 + $0xc0] sm:$0xff]
        %v1693 = vld [vmem:[%s703 + $0xc8] sm:$0xff]
        %v1694 = vld [vmem:[%s703 + $0xd0] sm:$0xff]
        %v1695 = vld [vmem:[%s703 + $0xd8] sm:$0xff]
        %v1696 = vld [vmem:[%s703 + $0xe0] sm:$0xff]
        %v1697 = vld [vmem:[%s703 + $0xe8] sm:$0xff]
        %v1698 = vld [vmem:[%s703 + $0xf0] sm:$0xff]
        %v1699 = vld [vmem:[%s703 + $0xf8] sm:$0xff]
        %v1700 = vld [vmem:[%s713] sm:$0x3]
        %v1701 = vlaneseq
        %v1702 = vshrl.u32 %v1701, 7
        %v1703 = vlaneseq
        %v1704 = vand.u32 %v1703, 127
        %vm1705 = vcmp.le.s32.totalorder %v1704, %v1702
        %vm1706 = vcmask 523264
        %v1708 = vsel %vm1706, %v1665, 0
        %v1711 = vsel %vm1706, %v1666, 0
        %1713 = vmatpush.bf16.xpose.msra.mxu0 0
        %1714 = vmatpush.bf16.xpose.msra.mxu0 0
        %1715 = vmatpush.bf16.xpose.msra.mxu0 0
        %1716 = vmatpush.bf16.xpose.msra.mxu0 0
        %1717 = vmatpush.bf16.xpose.msra.mxu0 0
        %1718 = vmatpush.bf16.xpose.msra.mxu0 0
        %1719 = vmatpush.bf16.xpose.msra.mxu0 0
        %1720 = vmatpush.bf16.xpose.msra.mxu0 %v1711
        %1721 = vmatmul.bf16.gmra.mxu0 %v1708
        %v1722 = vpop.f32.mrf.mxu0
        %v1723 = vadd.f32 0.0, %v1722
        %v1724 = vpop.f32.mrf.mxu0
        %1725 = vdwg.mxu0
        %v1726 = vsel %vm1705, %v1723, -inf
        %vm1727 = vcmask 64512
        %v1728 = vsel %vm1727, %v1726, -inf
        %1729 = vmax.xlane.f32.xlu0 %v1728
        %v1730 = vpop.xlane.xlu0 %1729
        %v1731 = vsub.f32 %v1726, %v1730
        %v1732 = vmul.f32 %v1731, 1.442695
        %v1733 = vpow.pop %v1732
        %v1734 = vsel %vm1727, %v1733, 0.0
        %1735 = vadd.xlane.f32.xlu0 %v1734
        %v1736 = vpop.xlane.xlu0 %1735
        %v1737 = vrcp.pop %v1736
        %v1738 = vmul.f32 %v1733, %v1737
        %v1739 = vpack.c.bf16 %v1738, %v1738
        %v1741 = vsel %vm1727, %v1739, 0
        %vm1743 = vcmask 1043456
        %v1745 = vsel %vm1743, %v1667, 0
        %1747 = vmatpush.bf16.msra.mxu0 0
        %1748 = vmatpush.bf16.msra.mxu0 0
        %1749 = vmatpush.bf16.msra.mxu0 0
        %1750 = vmatpush.bf16.msra.mxu0 0
        %1751 = vmatpush.bf16.msra.mxu0 0
        %1752 = vmatpush.bf16.msra.mxu0 0
        %1753 = vmatpush.bf16.msra.mxu0 0
        %1754 = vmatpush.bf16.msra.mxu0 %v1745
        %1755 = vmatmul.bf16.gmra.mxu0 %v1741
        %v1756 = vpop.f32.mrf.mxu0
        %v1757 = vadd.f32 0.0, %v1756
        %v1758 = vpop.f32.mrf.mxu0
        %1759 = vdwg.mxu0
        %v1760 = vpack.c.bf16 %v1757, %v1757
        %v1762 = vunpack.c.l.b16 %v1665
        %v1763 = vpack.c.b16 %v1762, %v1762
        %1764 = vrot.lane.b32.xlu0 %v1763, 64
        %v1765 = vpop.permute.xlu0 %1764
        %v1767 = vunpack.c.l.b16 %v1666
        %v1768 = vpack.c.b16 %v1767, %v1767
        %1769 = vrot.lane.b32.xlu0 %v1768, 64
        %v1770 = vpop.permute.xlu0 %1769
        %v1772 = vsel %vm1706, %v1765, 0
        %v1775 = vsel %vm1706, %v1770, 0
        %1777 = vmatpush.bf16.xpose.msra.mxu0 0
        %1778 = vmatpush.bf16.xpose.msra.mxu0 0
        %1779 = vmatpush.bf16.xpose.msra.mxu0 0
        %1780 = vmatpush.bf16.xpose.msra.mxu0 0
        %1781 = vmatpush.bf16.xpose.msra.mxu0 0
        %1782 = vmatpush.bf16.xpose.msra.mxu0 0
        %1783 = vmatpush.bf16.xpose.msra.mxu0 0
        %1784 = vmatpush.bf16.xpose.msra.mxu0 %v1775
        %1785 = vmatmul.bf16.gmra.mxu0 %v1772
        %v1786 = vpop.f32.mrf.mxu0
        %v1787 = vadd.f32 0.0, %v1786
        %v1788 = vpop.f32.mrf.mxu0
        %1789 = vdwg.mxu0
        %v1790 = vsel %vm1705, %v1787, -inf
        %v1791 = vsel %vm1727, %v1790, -inf
        %1792 = vmax.xlane.f32.xlu0 %v1791
        %v1793 = vpop.xlane.xlu0 %1792
        %v1794 = vsub.f32 %v1790, %v1793
        %v1795 = vmul.f32 %v1794, 1.442695
        %v1796 = vpow.pop %v1795
        %v1797 = vsel %vm1727, %v1796, 0.0
        %1798 = vadd.xlane.f32.xlu0 %v1797
        %v1799 = vpop.xlane.xlu0 %1798
        %v1800 = vrcp.pop %v1799
        %v1801 = vmul.f32 %v1796, %v1800
        %v1802 = vpack.c.bf16 %v1801, %v1801
        %v1804 = vunpack.c.l.b16 %v1667
        %v1805 = vpack.c.b16 %v1804, %v1804
        %1806 = vrot.lane.b32.xlu0 %v1805, 64
        %v1807 = vpop.permute.xlu0 %1806
        %v1809 = vsel %vm1727, %v1802, 0
        %v1812 = vsel %vm1743, %v1807, 0
        %1814 = vmatpush.bf16.msra.mxu0 0
        %1815 = vmatpush.bf16.msra.mxu0 0
        %1816 = vmatpush.bf16.msra.mxu0 0
        %1817 = vmatpush.bf16.msra.mxu0 0
        %1818 = vmatpush.bf16.msra.mxu0 0
        %1819 = vmatpush.bf16.msra.mxu0 0
        %1820 = vmatpush.bf16.msra.mxu0 0
        %1821 = vmatpush.bf16.msra.mxu0 %v1812
        %1822 = vmatmul.bf16.gmra.mxu0 %v1809
        %v1823 = vpop.f32.mrf.mxu0
        %v1824 = vadd.f32 0.0, %v1823
        %v1825 = vpop.f32.mrf.mxu0
        %1826 = vdwg.mxu0
        %v1827 = vpack.c.bf16 %v1824, %v1824
        %v1836 = vunpack.c.l.b16 %v1676
        %v1837 = vunpack.c.h.b16 %v1676
        %v1838 = vunpack.c.l.b16 %v1677
        %v1839 = vunpack.c.h.b16 %v1677
        %v1840 = vunpack.c.l.b16 %v1678
        %v1841 = vunpack.c.h.b16 %v1678
        %v1842 = vunpack.c.l.b16 %v1679
        %v1843 = vunpack.c.h.b16 %v1679
        %v1844 = vunpack.c.l.b16 %v1680
        %v1845 = vunpack.c.h.b16 %v1680
        %v1846 = vunpack.c.l.b16 %v1681
        %v1847 = vunpack.c.h.b16 %v1681
        %v1848 = vunpack.c.l.b16 %v1682
        %v1849 = vunpack.c.h.b16 %v1682
        %v1850 = vunpack.c.l.b16 %v1683
        %v1851 = vunpack.c.h.b16 %v1683
        %v1852 = vpack.c.b16 %v1838, %v1836
        %v1853 = vpack.c.b16 %v1839, %v1837
        %v1854 = vpack.c.b16 %v1842, %v1840
        %v1855 = vpack.c.b16 %v1843, %v1841
        %v1856 = vpack.c.b16 %v1846, %v1844
        %v1857 = vpack.c.b16 %v1847, %v1845
        %v1858 = vpack.c.b16 %v1850, %v1848
        %v1859 = vpack.c.b16 %v1851, %v1849
        %v1869 = vsel %vm1706, %v1827, 0
        %1871 = vmatpush.bf16.msra.mxu0 0
        %1872 = vmatpush.bf16.msra.mxu0 0
        %1873 = vmatpush.bf16.msra.mxu0 0
        %1874 = vmatpush.bf16.msra.mxu0 0
        %1875 = vmatpush.bf16.msra.mxu0 %v1858
        %1876 = vmatpush.bf16.msra.mxu0 %v1856
        %1877 = vmatpush.bf16.msra.mxu0 %v1854
        %1878 = vmatpush.bf16.msra.mxu0 %v1852
        %1879 = vmatmul.bf16.gmra.mxu0 %v1869
        %v1880 = vpop.f32.mrf.mxu0
        %v1881 = vadd.f32 0.0, %v1880
        %v1882 = vpop.f32.mrf.mxu0
        %1883 = vdwg.mxu0
        %1884 = vmatpush.bf16.msra.mxu0 0
        %1885 = vmatpush.bf16.msra.mxu0 0
        %1886 = vmatpush.bf16.msra.mxu0 0
        %1887 = vmatpush.bf16.msra.mxu0 0
        %1888 = vmatpush.bf16.msra.mxu0 %v1859
        %1889 = vmatpush.bf16.msra.mxu0 %v1857
        %1890 = vmatpush.bf16.msra.mxu0 %v1855
        %1891 = vmatpush.bf16.msra.mxu0 %v1853
        %1892 = vmatmul.bf16.gmra.mxu0 %v1869
        %v1893 = vpop.f32.mrf.mxu0
        %v1894 = vadd.f32 0.0, %v1893
        %v1895 = vpop.f32.mrf.mxu0
        %1896 = vdwg.mxu0
        %v1905 = vunpack.c.l.b16 %v1668
        %v1906 = vunpack.c.h.b16 %v1668
        %v1907 = vunpack.c.l.b16 %v1669
        %v1908 = vunpack.c.h.b16 %v1669
        %v1909 = vunpack.c.l.b16 %v1670
        %v1910 = vunpack.c.h.b16 %v1670
        %v1911 = vunpack.c.l.b16 %v1671
        %v1912 = vunpack.c.h.b16 %v1671
        %v1913 = vunpack.c.l.b16 %v1672
        %v1914 = vunpack.c.h.b16 %v1672
        %v1915 = vunpack.c.l.b16 %v1673
        %v1916 = vunpack.c.h.b16 %v1673
        %v1917 = vunpack.c.l.b16 %v1674
        %v1918 = vunpack.c.h.b16 %v1674
        %v1919 = vunpack.c.l.b16 %v1675
        %v1920 = vunpack.c.h.b16 %v1675
        %v1921 = vpack.c.b16 %v1907, %v1905
        %v1922 = vpack.c.b16 %v1908, %v1906
        %v1923 = vpack.c.b16 %v1911, %v1909
        %v1924 = vpack.c.b16 %v1912, %v1910
        %v1925 = vpack.c.b16 %v1915, %v1913
        %v1926 = vpack.c.b16 %v1916, %v1914
        %v1927 = vpack.c.b16 %v1919, %v1917
        %v1928 = vpack.c.b16 %v1920, %v1918
        %v1938 = vsel %vm1706, %v1760, 0
        %1940 = vmatpush.bf16.msra.mxu0 0
        %1941 = vmatpush.bf16.msra.mxu0 0
        %1942 = vmatpush.bf16.msra.mxu0 0
        %1943 = vmatpush.bf16.msra.mxu0 0
        %1944 = vmatpush.bf16.msra.mxu0 %v1927
        %1945 = vmatpush.bf16.msra.mxu0 %v1925
        %1946 = vmatpush.bf16.msra.mxu0 %v1923
        %1947 = vmatpush.bf16.msra.mxu0 %v1921
        %1948 = vmatmul.bf16.gmra.mxu0 %v1938
        %v1949 = vpop.f32.mrf.mxu0
        %v1950 = vadd.f32 %v1881, %v1949
        %v1951 = vpop.f32.mrf.mxu0
        %1952 = vdwg.mxu0
        %1953 = vmatpush.bf16.msra.mxu0 0
        %1954 = vmatpush.bf16.msra.mxu0 0
        %1955 = vmatpush.bf16.msra.mxu0 0
        %1956 = vmatpush.bf16.msra.mxu0 0
        %1957 = vmatpush.bf16.msra.mxu0 %v1928
        %1958 = vmatpush.bf16.msra.mxu0 %v1926
        %1959 = vmatpush.bf16.msra.mxu0 %v1924
        %1960 = vmatpush.bf16.msra.mxu0 %v1922
        %1961 = vmatmul.bf16.gmra.mxu0 %v1938
        %v1962 = vpop.f32.mrf.mxu0
        %v1963 = vadd.f32 %v1894, %v1962
        %v1964 = vpop.f32.mrf.mxu0
        %1965 = vdwg.mxu0
        %v1966 = vunpack.c.h.b16 %v1665
        %v1967 = vpack.c.b16 %v1966, %v1966
        %v1968 = vunpack.c.h.b16 %v1666
        %v1969 = vpack.c.b16 %v1968, %v1968
        %v1971 = vsel %vm1706, %v1967, 0
        %v1974 = vsel %vm1706, %v1969, 0
        %1976 = vmatpush.bf16.xpose.msra.mxu0 0
        %1977 = vmatpush.bf16.xpose.msra.mxu0 0
        %1978 = vmatpush.bf16.xpose.msra.mxu0 0
        %1979 = vmatpush.bf16.xpose.msra.mxu0 0
        %1980 = vmatpush.bf16.xpose.msra.mxu0 0
        %1981 = vmatpush.bf16.xpose.msra.mxu0 0
        %1982 = vmatpush.bf16.xpose.msra.mxu0 0
        %1983 = vmatpush.bf16.xpose.msra.mxu0 %v1974
        %1984 = vmatmul.bf16.gmra.mxu0 %v1971
        %v1985 = vpop.f32.mrf.mxu0
        %v1986 = vadd.f32 0.0, %v1985
        %v1987 = vpop.f32.mrf.mxu0
        %1988 = vdwg.mxu0
        %v1989 = vsel %vm1705, %v1986, -inf
        %v1990 = vsel %vm1727, %v1989, -inf
        %1991 = vmax.xlane.f32.xlu0 %v1990
        %v1992 = vpop.xlane.xlu0 %1991
        %v1993 = vsub.f32 %v1989, %v1992
        %v1994 = vmul.f32 %v1993, 1.442695
        %v1995 = vpow.pop %v1994
        %v1996 = vsel %vm1727, %v1995, 0.0
        %1997 = vadd.xlane.f32.xlu0 %v1996
        %v1998 = vpop.xlane.xlu0 %1997
        %v1999 = vrcp.pop %v1998
        %v2000 = vmul.f32 %v1995, %v1999
        %v2001 = vpack.c.bf16 %v2000, %v2000
        %v2002 = vunpack.c.h.b16 %v1667
        %v2003 = vpack.c.b16 %v2002, %v2002
        %v2005 = vsel %vm1727, %v2001, 0
        %v2008 = vsel %vm1743, %v2003, 0
        %2010 = vmatpush.bf16.msra.mxu0 0
        %2011 = vmatpush.bf16.msra.mxu0 0
        %2012 = vmatpush.bf16.msra.mxu0 0
        %2013 = vmatpush.bf16.msra.mxu0 0
        %2014 = vmatpush.bf16.msra.mxu0 0
        %2015 = vmatpush.bf16.msra.mxu0 0
        %2016 = vmatpush.bf16.msra.mxu0 0
        %2017 = vmatpush.bf16.msra.mxu0 %v2008
        %2018 = vmatmul.bf16.gmra.mxu0 %v2005
        %v2019 = vpop.f32.mrf.mxu0
        %v2020 = vadd.f32 0.0, %v2019
        %v2021 = vpop.f32.mrf.mxu0
        %2022 = vdwg.mxu0
        %v2023 = vpack.c.bf16 %v2020, %v2020
        %v2032 = vunpack.c.l.b16 %v1684
        %v2033 = vunpack.c.h.b16 %v1684
        %v2034 = vunpack.c.l.b16 %v1685
        %v2035 = vunpack.c.h.b16 %v1685
        %v2036 = vunpack.c.l.b16 %v1686
        %v2037 = vunpack.c.h.b16 %v1686
        %v2038 = vunpack.c.l.b16 %v1687
        %v2039 = vunpack.c.h.b16 %v1687
        %v2040 = vunpack.c.l.b16 %v1688
        %v2041 = vunpack.c.h.b16 %v1688
        %v2042 = vunpack.c.l.b16 %v1689
        %v2043 = vunpack.c.h.b16 %v1689
        %v2044 = vunpack.c.l.b16 %v1690
        %v2045 = vunpack.c.h.b16 %v1690
        %v2046 = vunpack.c.l.b16 %v1691
        %v2047 = vunpack.c.h.b16 %v1691
        %v2048 = vpack.c.b16 %v2034, %v2032
        %v2049 = vpack.c.b16 %v2035, %v2033
        %v2050 = vpack.c.b16 %v2038, %v2036
        %v2051 = vpack.c.b16 %v2039, %v2037
        %v2052 = vpack.c.b16 %v2042, %v2040
        %v2053 = vpack.c.b16 %v2043, %v2041
        %v2054 = vpack.c.b16 %v2046, %v2044
        %v2055 = vpack.c.b16 %v2047, %v2045
        %v2065 = vsel %vm1706, %v2023, 0
        %2067 = vmatpush.bf16.msra.mxu0 0
        %2068 = vmatpush.bf16.msra.mxu0 0
        %2069 = vmatpush.bf16.msra.mxu0 0
        %2070 = vmatpush.bf16.msra.mxu0 0
        %2071 = vmatpush.bf16.msra.mxu0 %v2054
        %2072 = vmatpush.bf16.msra.mxu0 %v2052
        %2073 = vmatpush.bf16.msra.mxu0 %v2050
        %2074 = vmatpush.bf16.msra.mxu0 %v2048
        %2075 = vmatmul.bf16.gmra.mxu0 %v2065
        %v2076 = vpop.f32.mrf.mxu0
        %v2077 = vadd.f32 0.0, %v2076
        %v2078 = vpop.f32.mrf.mxu0
        %2079 = vdwg.mxu0
        %2080 = vmatpush.bf16.msra.mxu0 0
        %2081 = vmatpush.bf16.msra.mxu0 0
        %2082 = vmatpush.bf16.msra.mxu0 0
        %2083 = vmatpush.bf16.msra.mxu0 0
        %2084 = vmatpush.bf16.msra.mxu0 %v2055
        %2085 = vmatpush.bf16.msra.mxu0 %v2053
        %2086 = vmatpush.bf16.msra.mxu0 %v2051
        %2087 = vmatpush.bf16.msra.mxu0 %v2049
        %2088 = vmatmul.bf16.gmra.mxu0 %v2065
        %v2089 = vpop.f32.mrf.mxu0
        %v2090 = vadd.f32 0.0, %v2089
        %v2091 = vpop.f32.mrf.mxu0
        %2092 = vdwg.mxu0
        %v2093 = vadd.f32 %v1950, %v2077
        %v2094 = vadd.f32 %v1963, %v2090
        %2095 = vrot.lane.b32.xlu0 %v1967, 64
        %v2096 = vpop.permute.xlu0 %2095
        %2097 = vrot.lane.b32.xlu0 %v1969, 64
        %v2098 = vpop.permute.xlu0 %2097
        %v2100 = vsel %vm1706, %v2096, 0
        %v2103 = vsel %vm1706, %v2098, 0
        %2105 = vmatpush.bf16.xpose.msra.mxu0 0
        %2106 = vmatpush.bf16.xpose.msra.mxu0 0
        %2107 = vmatpush.bf16.xpose.msra.mxu0 0
        %2108 = vmatpush.bf16.xpose.msra.mxu0 0
        %2109 = vmatpush.bf16.xpose.msra.mxu0 0
        %2110 = vmatpush.bf16.xpose.msra.mxu0 0
        %2111 = vmatpush.bf16.xpose.msra.mxu0 0
        %2112 = vmatpush.bf16.xpose.msra.mxu0 %v2103
        %2113 = vmatmul.bf16.gmra.mxu0 %v2100
        %v2114 = vpop.f32.mrf.mxu0
        %v2115 = vadd.f32 0.0, %v2114
        %v2116 = vpop.f32.mrf.mxu0
        %2117 = vdwg.mxu0
        %v2118 = vsel %vm1705, %v2115, -inf
        %v2119 = vsel %vm1727, %v2118, -inf
        %2120 = vmax.xlane.f32.xlu0 %v2119
        %v2121 = vpop.xlane.xlu0 %2120
        %v2122 = vsub.f32 %v2118, %v2121
        %v2123 = vmul.f32 %v2122, 1.442695
        %v2124 = vpow.pop %v2123
        %v2125 = vsel %vm1727, %v2124, 0.0
        %2126 = vadd.xlane.f32.xlu0 %v2125
        %v2127 = vpop.xlane.xlu0 %2126
        %v2128 = vrcp.pop %v2127
        %v2129 = vmul.f32 %v2124, %v2128
        %v2130 = vpack.c.bf16 %v2129, %v2129
        %2131 = vrot.lane.b32.xlu0 %v2003, 64
        %v2132 = vpop.permute.xlu0 %2131
        %v2134 = vsel %vm1727, %v2130, 0
        %v2137 = vsel %vm1743, %v2132, 0
        %2139 = vmatpush.bf16.msra.mxu0 0
        %2140 = vmatpush.bf16.msra.mxu0 0
        %2141 = vmatpush.bf16.msra.mxu0 0
        %2142 = vmatpush.bf16.msra.mxu0 0
        %2143 = vmatpush.bf16.msra.mxu0 0
        %2144 = vmatpush.bf16.msra.mxu0 0
        %2145 = vmatpush.bf16.msra.mxu0 0
        %2146 = vmatpush.bf16.msra.mxu0 %v2137
        %2147 = vmatmul.bf16.gmra.mxu0 %v2134
        %v2148 = vpop.f32.mrf.mxu0
        %v2149 = vadd.f32 0.0, %v2148
        %v2150 = vpop.f32.mrf.mxu0
        %2151 = vdwg.mxu0
        %v2152 = vpack.c.bf16 %v2149, %v2149
        %v2161 = vunpack.c.l.b16 %v1692
        %v2162 = vunpack.c.h.b16 %v1692
        %v2163 = vunpack.c.l.b16 %v1693
        %v2164 = vunpack.c.h.b16 %v1693
        %v2165 = vunpack.c.l.b16 %v1694
        %v2166 = vunpack.c.h.b16 %v1694
        %v2167 = vunpack.c.l.b16 %v1695
        %v2168 = vunpack.c.h.b16 %v1695
        %v2169 = vunpack.c.l.b16 %v1696
        %v2170 = vunpack.c.h.b16 %v1696
        %v2171 = vunpack.c.l.b16 %v1697
        %v2172 = vunpack.c.h.b16 %v1697
        %v2173 = vunpack.c.l.b16 %v1698
        %v2174 = vunpack.c.h.b16 %v1698
        %v2175 = vunpack.c.l.b16 %v1699
        %v2176 = vunpack.c.h.b16 %v1699
        %v2177 = vpack.c.b16 %v2163, %v2161
        %v2178 = vpack.c.b16 %v2164, %v2162
        %v2179 = vpack.c.b16 %v2167, %v2165
        %v2180 = vpack.c.b16 %v2168, %v2166
        %v2181 = vpack.c.b16 %v2171, %v2169
        %v2182 = vpack.c.b16 %v2172, %v2170
        %v2183 = vpack.c.b16 %v2175, %v2173
        %v2184 = vpack.c.b16 %v2176, %v2174
        %v2194 = vsel %vm1706, %v2152, 0
        %2196 = vmatpush.bf16.msra.mxu0 0
        %2197 = vmatpush.bf16.msra.mxu0 0
        %2198 = vmatpush.bf16.msra.mxu0 0
        %2199 = vmatpush.bf16.msra.mxu0 0
        %2200 = vmatpush.bf16.msra.mxu0 %v2183
        %2201 = vmatpush.bf16.msra.mxu0 %v2181
        %2202 = vmatpush.bf16.msra.mxu0 %v2179
        %2203 = vmatpush.bf16.msra.mxu0 %v2177
        %2204 = vmatmul.bf16.gmra.mxu0 %v2194
        %v2205 = vpop.f32.mrf.mxu0
        %v2206 = vadd.f32 0.0, %v2205
        %v2207 = vpop.f32.mrf.mxu0
        %2208 = vdwg.mxu0
        %2209 = vmatpush.bf16.msra.mxu0 0
        %2210 = vmatpush.bf16.msra.mxu0 0
        %2211 = vmatpush.bf16.msra.mxu0 0
        %2212 = vmatpush.bf16.msra.mxu0 0
        %2213 = vmatpush.bf16.msra.mxu0 %v2184
        %2214 = vmatpush.bf16.msra.mxu0 %v2182
        %2215 = vmatpush.bf16.msra.mxu0 %v2180
        %2216 = vmatpush.bf16.msra.mxu0 %v2178
        %2217 = vmatmul.bf16.gmra.mxu0 %v2194
        %v2218 = vpop.f32.mrf.mxu0
        %v2219 = vadd.f32 0.0, %v2218
        %v2220 = vpop.f32.mrf.mxu0
        %2221 = vdwg.mxu0
        %v2222 = vadd.f32 %v2093, %v2206
        %v2223 = vadd.f32 %v2094, %v2219
        %v2224 = vadd.f32 %v879, %v2222
        %v2225 = vadd.f32 %v880, %v2223
        %v2227 = vperm.slane %v1700, 0
        %v2228 = vperm.slane %v1700, 1
        %v2231 = vadd.f32 %v2224, %v2227
        %v2232 = vadd.f32 %v2225, %v2228
        %2233 = vst [vmem:[%s869] sm:$0xff] %v2231
        %2234 = vst [vmem:[%s869 + $0x8] sm:$0xff] %v2232
        %v2235 = vld [vmem:[%s869] sm:$0xff]
        %v2236 = vld [vmem:[%s869 + $0x8] sm:$0xff]
        %v2237 = vld [vmem:[%s723] sm:$0x3]
        %v2238 = vld [vmem:[%s733] sm:$0x3]
        %v2239 = vadd.f32 %v2235, %v2236
        %2240 = vadd.xlane.f32.xlu0 %v2239
        %v2241 = vpop.xlane.xlu0 %2240
        %v2242 = vmul.f32 %v2241, %v892
        %v2243 = vsub.f32 %v2235, %v2242
        %v2244 = vsub.f32 %v2236, %v2242
        %v2245 = vmul.f32 %v2243, %v2243
        %v2246 = vmul.f32 %v2244, %v2244
        %v2247 = vadd.f32 %v2245, %v2246
        %2248 = vadd.xlane.f32.xlu0 %v2247
        %v2249 = vpop.xlane.xlu0 %2248
        %v2250 = vmul.f32 %v2249, %v892
        %v2251 = vadd.f32 %v2250, 1e-05
        %v2252 = vrsqrt.pop %v2251
        %v2253 = vmul.f32 %v2252, %v2251
        %v2254 = vmul.f32 %v2253, %v2252
        %v2255 = vmul.f32 0.5, %v2254
        %v2256 = vsub.f32 1.5, %v2255
        %v2257 = vmul.f32 %v2252, %v2256
        %vm2258 = vweird.f32 %v2251
        %vm2259 = vweird.f32 %v2252
        %vm2260 = vmor %vm2258, %vm2259
        %v2261 = vsel %vm2260, %v2252, %v2257
        %v2262 = vmul.f32 %v2243, %v2261
        %v2263 = vmul.f32 %v2244, %v2261
        %v2265 = vperm.slane %v2237, 0
        %v2266 = vperm.slane %v2237, 1
        %v2269 = vmul.f32 %v2262, %v2265
        %v2270 = vmul.f32 %v2263, %v2266
        %v2272 = vperm.slane %v2238, 0
        %v2273 = vperm.slane %v2238, 1
        %v2276 = vadd.f32 %v2269, %v2272
        %v2277 = vadd.f32 %v2270, %v2273
        %v2278 = vld [vmem:[%s743] sm:$0xff]
        %v2279 = vld [vmem:[%s743 + $0x8] sm:$0xff]
        %v2280 = vld [vmem:[%s743 + $0x10] sm:$0xff]
        %v2281 = vld [vmem:[%s743 + $0x18] sm:$0xff]
        %v2282 = vld [vmem:[%s743 + $0x20] sm:$0xff]
        %v2283 = vld [vmem:[%s743 + $0x28] sm:$0xff]
        %v2284 = vld [vmem:[%s743 + $0x30] sm:$0xff]
        %v2285 = vld [vmem:[%s743 + $0x38] sm:$0xff]
        %v2286 = vld [vmem:[%s743 + $0x40] sm:$0xff]
        %v2287 = vld [vmem:[%s743 + $0x48] sm:$0xff]
        %v2288 = vld [vmem:[%s743 + $0x50] sm:$0xff]
        %v2289 = vld [vmem:[%s743 + $0x58] sm:$0xff]
        %v2290 = vld [vmem:[%s743 + $0x60] sm:$0xff]
        %v2291 = vld [vmem:[%s743 + $0x68] sm:$0xff]
        %v2292 = vld [vmem:[%s743 + $0x70] sm:$0xff]
        %v2293 = vld [vmem:[%s743 + $0x78] sm:$0xff]
        %v2294 = vld [vmem:[%s743 + $0x80] sm:$0xff]
        %v2295 = vld [vmem:[%s743 + $0x88] sm:$0xff]
        %v2296 = vld [vmem:[%s743 + $0x90] sm:$0xff]
        %v2297 = vld [vmem:[%s743 + $0x98] sm:$0xff]
        %v2298 = vld [vmem:[%s743 + $0xa0] sm:$0xff]
        %v2299 = vld [vmem:[%s743 + $0xa8] sm:$0xff]
        %v2300 = vld [vmem:[%s743 + $0xb0] sm:$0xff]
        %v2301 = vld [vmem:[%s743 + $0xb8] sm:$0xff]
        %v2302 = vld [vmem:[%s743 + $0xc0] sm:$0xff]
        %v2303 = vld [vmem:[%s743 + $0xc8] sm:$0xff]
        %v2304 = vld [vmem:[%s743 + $0xd0] sm:$0xff]
        %v2305 = vld [vmem:[%s743 + $0xd8] sm:$0xff]
        %v2306 = vld [vmem:[%s743 + $0xe0] sm:$0xff]
        %v2307 = vld [vmem:[%s743 + $0xe8] sm:$0xff]
        %v2308 = vld [vmem:[%s743 + $0xf0] sm:$0xff]
        %v2309 = vld [vmem:[%s743 + $0xf8] sm:$0xff]
        %v2310 = vld [vmem:[%s743 + $0x100] sm:$0xff]
        %v2311 = vld [vmem:[%s743 + $0x108] sm:$0xff]
        %v2312 = vld [vmem:[%s743 + $0x110] sm:$0xff]
        %v2313 = vld [vmem:[%s743 + $0x118] sm:$0xff]
        %v2314 = vld [vmem:[%s743 + $0x120] sm:$0xff]
        %v2315 = vld [vmem:[%s743 + $0x128] sm:$0xff]
        %v2316 = vld [vmem:[%s743 + $0x130] sm:$0xff]
        %v2317 = vld [vmem:[%s743 + $0x138] sm:$0xff]
        %v2318 = vld [vmem:[%s743 + $0x140] sm:$0xff]
        %v2319 = vld [vmem:[%s743 + $0x148] sm:$0xff]
        %v2320 = vld [vmem:[%s743 + $0x150] sm:$0xff]
        %v2321 = vld [vmem:[%s743 + $0x158] sm:$0xff]
        %v2322 = vld [vmem:[%s743 + $0x160] sm:$0xff]
        %v2323 = vld [vmem:[%s743 + $0x168] sm:$0xff]
        %v2324 = vld [vmem:[%s743 + $0x170] sm:$0xff]
        %v2325 = vld [vmem:[%s743 + $0x178] sm:$0xff]
        %v2326 = vld [vmem:[%s743 + $0x180] sm:$0xff]
        %v2327 = vld [vmem:[%s743 + $0x188] sm:$0xff]
        %v2328 = vld [vmem:[%s743 + $0x190] sm:$0xff]
        %v2329 = vld [vmem:[%s743 + $0x198] sm:$0xff]
        %v2330 = vld [vmem:[%s743 + $0x1a0] sm:$0xff]
        %v2331 = vld [vmem:[%s743 + $0x1a8] sm:$0xff]
        %v2332 = vld [vmem:[%s743 + $0x1b0] sm:$0xff]
        %v2333 = vld [vmem:[%s743 + $0x1b8] sm:$0xff]
        %v2334 = vld [vmem:[%s743 + $0x1c0] sm:$0xff]
        %v2335 = vld [vmem:[%s743 + $0x1c8] sm:$0xff]
        %v2336 = vld [vmem:[%s743 + $0x1d0] sm:$0xff]
        %v2337 = vld [vmem:[%s743 + $0x1d8] sm:$0xff]
        %v2338 = vld [vmem:[%s743 + $0x1e0] sm:$0xff]
        %v2339 = vld [vmem:[%s743 + $0x1e8] sm:$0xff]
        %v2340 = vld [vmem:[%s743 + $0x1f0] sm:$0xff]
        %v2341 = vld [vmem:[%s743 + $0x1f8] sm:$0xff]
        %v2342 = vld [vmem:[%s743 + $0x200] sm:$0xff]
        %v2343 = vld [vmem:[%s743 + $0x208] sm:$0xff]
        %v2344 = vld [vmem:[%s743 + $0x210] sm:$0xff]
        %v2345 = vld [vmem:[%s743 + $0x218] sm:$0xff]
        %v2346 = vld [vmem:[%s743 + $0x220] sm:$0xff]
        %v2347 = vld [vmem:[%s743 + $0x228] sm:$0xff]
        %v2348 = vld [vmem:[%s743 + $0x230] sm:$0xff]
        %v2349 = vld [vmem:[%s743 + $0x238] sm:$0xff]
        %v2350 = vld [vmem:[%s743 + $0x240] sm:$0xff]
        %v2351 = vld [vmem:[%s743 + $0x248] sm:$0xff]
        %v2352 = vld [vmem:[%s743 + $0x250] sm:$0xff]
        %v2353 = vld [vmem:[%s743 + $0x258] sm:$0xff]
        %v2354 = vld [vmem:[%s743 + $0x260] sm:$0xff]
        %v2355 = vld [vmem:[%s743 + $0x268] sm:$0xff]
        %v2356 = vld [vmem:[%s743 + $0x270] sm:$0xff]
        %v2357 = vld [vmem:[%s743 + $0x278] sm:$0xff]
        %v2358 = vld [vmem:[%s743 + $0x280] sm:$0xff]
        %v2359 = vld [vmem:[%s743 + $0x288] sm:$0xff]
        %v2360 = vld [vmem:[%s743 + $0x290] sm:$0xff]
        %v2361 = vld [vmem:[%s743 + $0x298] sm:$0xff]
        %v2362 = vld [vmem:[%s743 + $0x2a0] sm:$0xff]
        %v2363 = vld [vmem:[%s743 + $0x2a8] sm:$0xff]
        %v2364 = vld [vmem:[%s743 + $0x2b0] sm:$0xff]
        %v2365 = vld [vmem:[%s743 + $0x2b8] sm:$0xff]
        %v2366 = vld [vmem:[%s743 + $0x2c0] sm:$0xff]
        %v2367 = vld [vmem:[%s743 + $0x2c8] sm:$0xff]
        %v2368 = vld [vmem:[%s743 + $0x2d0] sm:$0xff]
        %v2369 = vld [vmem:[%s743 + $0x2d8] sm:$0xff]
        %v2370 = vld [vmem:[%s743 + $0x2e0] sm:$0xff]
        %v2371 = vld [vmem:[%s743 + $0x2e8] sm:$0xff]
        %v2372 = vld [vmem:[%s743 + $0x2f0] sm:$0xff]
        %v2373 = vld [vmem:[%s743 + $0x2f8] sm:$0xff]
        %v2374 = vld [vmem:[%s743 + $0x300] sm:$0xff]
        %v2375 = vld [vmem:[%s743 + $0x308] sm:$0xff]
        %v2376 = vld [vmem:[%s743 + $0x310] sm:$0xff]
        %v2377 = vld [vmem:[%s743 + $0x318] sm:$0xff]
        %v2378 = vld [vmem:[%s743 + $0x320] sm:$0xff]
        %v2379 = vld [vmem:[%s743 + $0x328] sm:$0xff]
        %v2380 = vld [vmem:[%s743 + $0x330] sm:$0xff]
        %v2381 = vld [vmem:[%s743 + $0x338] sm:$0xff]
        %v2382 = vld [vmem:[%s743 + $0x340] sm:$0xff]
        %v2383 = vld [vmem:[%s743 + $0x348] sm:$0xff]
        %v2384 = vld [vmem:[%s743 + $0x350] sm:$0xff]
        %v2385 = vld [vmem:[%s743 + $0x358] sm:$0xff]
        %v2386 = vld [vmem:[%s743 + $0x360] sm:$0xff]
        %v2387 = vld [vmem:[%s743 + $0x368] sm:$0xff]
        %v2388 = vld [vmem:[%s743 + $0x370] sm:$0xff]
        %v2389 = vld [vmem:[%s743 + $0x378] sm:$0xff]
        %v2390 = vld [vmem:[%s743 + $0x380] sm:$0xff]
        %v2391 = vld [vmem:[%s743 + $0x388] sm:$0xff]
        %v2392 = vld [vmem:[%s743 + $0x390] sm:$0xff]
        %v2393 = vld [vmem:[%s743 + $0x398] sm:$0xff]
        %v2394 = vld [vmem:[%s743 + $0x3a0] sm:$0xff]
        %v2395 = vld [vmem:[%s743 + $0x3a8] sm:$0xff]
        %v2396 = vld [vmem:[%s743 + $0x3b0] sm:$0xff]
        %v2397 = vld [vmem:[%s743 + $0x3b8] sm:$0xff]
        %v2398 = vld [vmem:[%s743 + $0x3c0] sm:$0xff]
        %v2399 = vld [vmem:[%s743 + $0x3c8] sm:$0xff]
        %v2400 = vld [vmem:[%s743 + $0x3d0] sm:$0xff]
        %v2401 = vld [vmem:[%s743 + $0x3d8] sm:$0xff]
        %v2402 = vld [vmem:[%s743 + $0x3e0] sm:$0xff]
        %v2403 = vld [vmem:[%s743 + $0x3e8] sm:$0xff]
        %v2404 = vld [vmem:[%s743 + $0x3f0] sm:$0xff]
        %v2405 = vld [vmem:[%s743 + $0x3f8] sm:$0xff]
        %v2406 = vpack.c.bf16 %v2276, %v2276
        %v2407 = vpack.c.bf16 %v2277, %v2277
        %v2408 = vld [vmem:[%s753] sm:$0xff]
        %v2410 = vperm.slane %v2408, 0
        %v2411 = vperm.slane %v2408, 1
        %v2412 = vperm.slane %v2408, 2
        %v2413 = vperm.slane %v2408, 3
        %v2414 = vperm.slane %v2408, 4
        %v2415 = vperm.slane %v2408, 5
        %v2416 = vperm.slane %v2408, 6
        %v2417 = vperm.slane %v2408, 7
        %v2554 = vunpack.c.l.b16 %v2278
        %v2555 = vunpack.c.h.b16 %v2278
        %v2556 = vunpack.c.l.b16 %v2279
        %v2557 = vunpack.c.h.b16 %v2279
        %v2558 = vunpack.c.l.b16 %v2280
        %v2559 = vunpack.c.h.b16 %v2280
        %v2560 = vunpack.c.l.b16 %v2281
        %v2561 = vunpack.c.h.b16 %v2281
        %v2562 = vunpack.c.l.b16 %v2282
        %v2563 = vunpack.c.h.b16 %v2282
        %v2564 = vunpack.c.l.b16 %v2283
        %v2565 = vunpack.c.h.b16 %v2283
        %v2566 = vunpack.c.l.b16 %v2284
        %v2567 = vunpack.c.h.b16 %v2284
        %v2568 = vunpack.c.l.b16 %v2285
        %v2569 = vunpack.c.h.b16 %v2285
        %v2570 = vunpack.c.l.b16 %v2286
        %v2571 = vunpack.c.h.b16 %v2286
        %v2572 = vunpack.c.l.b16 %v2287
        %v2573 = vunpack.c.h.b16 %v2287
        %v2574 = vunpack.c.l.b16 %v2288
        %v2575 = vunpack.c.h.b16 %v2288
        %v2576 = vunpack.c.l.b16 %v2289
        %v2577 = vunpack.c.h.b16 %v2289
        %v2578 = vunpack.c.l.b16 %v2290
        %v2579 = vunpack.c.h.b16 %v2290
        %v2580 = vunpack.c.l.b16 %v2291
        %v2581 = vunpack.c.h.b16 %v2291
        %v2582 = vunpack.c.l.b16 %v2292
        %v2583 = vunpack.c.h.b16 %v2292
        %v2584 = vunpack.c.l.b16 %v2293
        %v2585 = vunpack.c.h.b16 %v2293
        %v2586 = vunpack.c.l.b16 %v2294
        %v2587 = vunpack.c.h.b16 %v2294
        %v2588 = vunpack.c.l.b16 %v2295
        %v2589 = vunpack.c.h.b16 %v2295
        %v2590 = vunpack.c.l.b16 %v2296
        %v2591 = vunpack.c.h.b16 %v2296
        %v2592 = vunpack.c.l.b16 %v2297
        %v2593 = vunpack.c.h.b16 %v2297
        %v2594 = vunpack.c.l.b16 %v2298
        %v2595 = vunpack.c.h.b16 %v2298
        %v2596 = vunpack.c.l.b16 %v2299
        %v2597 = vunpack.c.h.b16 %v2299
        %v2598 = vunpack.c.l.b16 %v2300
        %v2599 = vunpack.c.h.b16 %v2300
        %v2600 = vunpack.c.l.b16 %v2301
        %v2601 = vunpack.c.h.b16 %v2301
        %v2602 = vunpack.c.l.b16 %v2302
        %v2603 = vunpack.c.h.b16 %v2302
        %v2604 = vunpack.c.l.b16 %v2303
        %v2605 = vunpack.c.h.b16 %v2303
        %v2606 = vunpack.c.l.b16 %v2304
        %v2607 = vunpack.c.h.b16 %v2304
        %v2608 = vunpack.c.l.b16 %v2305
        %v2609 = vunpack.c.h.b16 %v2305
        %v2610 = vunpack.c.l.b16 %v2306
        %v2611 = vunpack.c.h.b16 %v2306
        %v2612 = vunpack.c.l.b16 %v2307
        %v2613 = vunpack.c.h.b16 %v2307
        %v2614 = vunpack.c.l.b16 %v2308
        %v2615 = vunpack.c.h.b16 %v2308
        %v2616 = vunpack.c.l.b16 %v2309
        %v2617 = vunpack.c.h.b16 %v2309
        %v2618 = vunpack.c.l.b16 %v2310
        %v2619 = vunpack.c.h.b16 %v2310
        %v2620 = vunpack.c.l.b16 %v2311
        %v2621 = vunpack.c.h.b16 %v2311
        %v2622 = vunpack.c.l.b16 %v2312
        %v2623 = vunpack.c.h.b16 %v2312
        %v2624 = vunpack.c.l.b16 %v2313
        %v2625 = vunpack.c.h.b16 %v2313
        %v2626 = vunpack.c.l.b16 %v2314
        %v2627 = vunpack.c.h.b16 %v2314
        %v2628 = vunpack.c.l.b16 %v2315
        %v2629 = vunpack.c.h.b16 %v2315
        %v2630 = vunpack.c.l.b16 %v2316
        %v2631 = vunpack.c.h.b16 %v2316
        %v2632 = vunpack.c.l.b16 %v2317
        %v2633 = vunpack.c.h.b16 %v2317
        %v2634 = vunpack.c.l.b16 %v2318
        %v2635 = vunpack.c.h.b16 %v2318
        %v2636 = vunpack.c.l.b16 %v2319
        %v2637 = vunpack.c.h.b16 %v2319
        %v2638 = vunpack.c.l.b16 %v2320
        %v2639 = vunpack.c.h.b16 %v2320
        %v2640 = vunpack.c.l.b16 %v2321
        %v2641 = vunpack.c.h.b16 %v2321
        %v2642 = vunpack.c.l.b16 %v2322
        %v2643 = vunpack.c.h.b16 %v2322
        %v2644 = vunpack.c.l.b16 %v2323
        %v2645 = vunpack.c.h.b16 %v2323
        %v2646 = vunpack.c.l.b16 %v2324
        %v2647 = vunpack.c.h.b16 %v2324
        %v2648 = vunpack.c.l.b16 %v2325
        %v2649 = vunpack.c.h.b16 %v2325
        %v2650 = vunpack.c.l.b16 %v2326
        %v2651 = vunpack.c.h.b16 %v2326
        %v2652 = vunpack.c.l.b16 %v2327
        %v2653 = vunpack.c.h.b16 %v2327
        %v2654 = vunpack.c.l.b16 %v2328
        %v2655 = vunpack.c.h.b16 %v2328
        %v2656 = vunpack.c.l.b16 %v2329
        %v2657 = vunpack.c.h.b16 %v2329
        %v2658 = vunpack.c.l.b16 %v2330
        %v2659 = vunpack.c.h.b16 %v2330
        %v2660 = vunpack.c.l.b16 %v2331
        %v2661 = vunpack.c.h.b16 %v2331
        %v2662 = vunpack.c.l.b16 %v2332
        %v2663 = vunpack.c.h.b16 %v2332
        %v2664 = vunpack.c.l.b16 %v2333
        %v2665 = vunpack.c.h.b16 %v2333
        %v2666 = vunpack.c.l.b16 %v2334
        %v2667 = vunpack.c.h.b16 %v2334
        %v2668 = vunpack.c.l.b16 %v2335
        %v2669 = vunpack.c.h.b16 %v2335
        %v2670 = vunpack.c.l.b16 %v2336
        %v2671 = vunpack.c.h.b16 %v2336
        %v2672 = vunpack.c.l.b16 %v2337
        %v2673 = vunpack.c.h.b16 %v2337
        %v2674 = vunpack.c.l.b16 %v2338
        %v2675 = vunpack.c.h.b16 %v2338
        %v2676 = vunpack.c.l.b16 %v2339
        %v2677 = vunpack.c.h.b16 %v2339
        %v2678 = vunpack.c.l.b16 %v2340
        %v2679 = vunpack.c.h.b16 %v2340
        %v2680 = vunpack.c.l.b16 %v2341
        %v2681 = vunpack.c.h.b16 %v2341
        %v2682 = vunpack.c.l.b16 %v2342
        %v2683 = vunpack.c.h.b16 %v2342
        %v2684 = vunpack.c.l.b16 %v2343
        %v2685 = vunpack.c.h.b16 %v2343
        %v2686 = vunpack.c.l.b16 %v2344
        %v2687 = vunpack.c.h.b16 %v2344
        %v2688 = vunpack.c.l.b16 %v2345
        %v2689 = vunpack.c.h.b16 %v2345
        %v2690 = vunpack.c.l.b16 %v2346
        %v2691 = vunpack.c.h.b16 %v2346
        %v2692 = vunpack.c.l.b16 %v2347
        %v2693 = vunpack.c.h.b16 %v2347
        %v2694 = vunpack.c.l.b16 %v2348
        %v2695 = vunpack.c.h.b16 %v2348
        %v2696 = vunpack.c.l.b16 %v2349
        %v2697 = vunpack.c.h.b16 %v2349
        %v2698 = vunpack.c.l.b16 %v2350
        %v2699 = vunpack.c.h.b16 %v2350
        %v2700 = vunpack.c.l.b16 %v2351
        %v2701 = vunpack.c.h.b16 %v2351
        %v2702 = vunpack.c.l.b16 %v2352
        %v2703 = vunpack.c.h.b16 %v2352
        %v2704 = vunpack.c.l.b16 %v2353
        %v2705 = vunpack.c.h.b16 %v2353
        %v2706 = vunpack.c.l.b16 %v2354
        %v2707 = vunpack.c.h.b16 %v2354
        %v2708 = vunpack.c.l.b16 %v2355
        %v2709 = vunpack.c.h.b16 %v2355
        %v2710 = vunpack.c.l.b16 %v2356
        %v2711 = vunpack.c.h.b16 %v2356
        %v2712 = vunpack.c.l.b16 %v2357
        %v2713 = vunpack.c.h.b16 %v2357
        %v2714 = vunpack.c.l.b16 %v2358
        %v2715 = vunpack.c.h.b16 %v2358
        %v2716 = vunpack.c.l.b16 %v2359
        %v2717 = vunpack.c.h.b16 %v2359
        %v2718 = vunpack.c.l.b16 %v2360
        %v2719 = vunpack.c.h.b16 %v2360
        %v2720 = vunpack.c.l.b16 %v2361
        %v2721 = vunpack.c.h.b16 %v2361
        %v2722 = vunpack.c.l.b16 %v2362
        %v2723 = vunpack.c.h.b16 %v2362
        %v2724 = vunpack.c.l.b16 %v2363
        %v2725 = vunpack.c.h.b16 %v2363
        %v2726 = vunpack.c.l.b16 %v2364
        %v2727 = vunpack.c.h.b16 %v2364
        %v2728 = vunpack.c.l.b16 %v2365
        %v2729 = vunpack.c.h.b16 %v2365
        %v2730 = vunpack.c.l.b16 %v2366
        %v2731 = vunpack.c.h.b16 %v2366
        %v2732 = vunpack.c.l.b16 %v2367
        %v2733 = vunpack.c.h.b16 %v2367
        %v2734 = vunpack.c.l.b16 %v2368
        %v2735 = vunpack.c.h.b16 %v2368
        %v2736 = vunpack.c.l.b16 %v2369
        %v2737 = vunpack.c.h.b16 %v2369
        %v2738 = vunpack.c.l.b16 %v2370
        %v2739 = vunpack.c.h.b16 %v2370
        %v2740 = vunpack.c.l.b16 %v2371
        %v2741 = vunpack.c.h.b16 %v2371
        %v2742 = vunpack.c.l.b16 %v2372
        %v2743 = vunpack.c.h.b16 %v2372
        %v2744 = vunpack.c.l.b16 %v2373
        %v2745 = vunpack.c.h.b16 %v2373
        %v2746 = vunpack.c.l.b16 %v2374
        %v2747 = vunpack.c.h.b16 %v2374
        %v2748 = vunpack.c.l.b16 %v2375
        %v2749 = vunpack.c.h.b16 %v2375
        %v2750 = vunpack.c.l.b16 %v2376
        %v2751 = vunpack.c.h.b16 %v2376
        %v2752 = vunpack.c.l.b16 %v2377
        %v2753 = vunpack.c.h.b16 %v2377
        %v2754 = vunpack.c.l.b16 %v2378
        %v2755 = vunpack.c.h.b16 %v2378
        %v2756 = vunpack.c.l.b16 %v2379
        %v2757 = vunpack.c.h.b16 %v2379
        %v2758 = vunpack.c.l.b16 %v2380
        %v2759 = vunpack.c.h.b16 %v2380
        %v2760 = vunpack.c.l.b16 %v2381
        %v2761 = vunpack.c.h.b16 %v2381
        %v2762 = vunpack.c.l.b16 %v2382
        %v2763 = vunpack.c.h.b16 %v2382
        %v2764 = vunpack.c.l.b16 %v2383
        %v2765 = vunpack.c.h.b16 %v2383
        %v2766 = vunpack.c.l.b16 %v2384
        %v2767 = vunpack.c.h.b16 %v2384
        %v2768 = vunpack.c.l.b16 %v2385
        %v2769 = vunpack.c.h.b16 %v2385
        %v2770 = vunpack.c.l.b16 %v2386
        %v2771 = vunpack.c.h.b16 %v2386
        %v2772 = vunpack.c.l.b16 %v2387
        %v2773 = vunpack.c.h.b16 %v2387
        %v2774 = vunpack.c.l.b16 %v2388
        %v2775 = vunpack.c.h.b16 %v2388
        %v2776 = vunpack.c.l.b16 %v2389
        %v2777 = vunpack.c.h.b16 %v2389
        %v2778 = vunpack.c.l.b16 %v2390
        %v2779 = vunpack.c.h.b16 %v2390
        %v2780 = vunpack.c.l.b16 %v2391
        %v2781 = vunpack.c.h.b16 %v2391
        %v2782 = vunpack.c.l.b16 %v2392
        %v2783 = vunpack.c.h.b16 %v2392
        %v2784 = vunpack.c.l.b16 %v2393
        %v2785 = vunpack.c.h.b16 %v2393
        %v2786 = vunpack.c.l.b16 %v2394
        %v2787 = vunpack.c.h.b16 %v2394
        %v2788 = vunpack.c.l.b16 %v2395
        %v2789 = vunpack.c.h.b16 %v2395
        %v2790 = vunpack.c.l.b16 %v2396
        %v2791 = vunpack.c.h.b16 %v2396
        %v2792 = vunpack.c.l.b16 %v2397
        %v2793 = vunpack.c.h.b16 %v2397
        %v2794 = vunpack.c.l.b16 %v2398
        %v2795 = vunpack.c.h.b16 %v2398
        %v2796 = vunpack.c.l.b16 %v2399
        %v2797 = vunpack.c.h.b16 %v2399
        %v2798 = vunpack.c.l.b16 %v2400
        %v2799 = vunpack.c.h.b16 %v2400
        %v2800 = vunpack.c.l.b16 %v2401
        %v2801 = vunpack.c.h.b16 %v2401
        %v2802 = vunpack.c.l.b16 %v2402
        %v2803 = vunpack.c.h.b16 %v2402
        %v2804 = vunpack.c.l.b16 %v2403
        %v2805 = vunpack.c.h.b16 %v2403
        %v2806 = vunpack.c.l.b16 %v2404
        %v2807 = vunpack.c.h.b16 %v2404
        %v2808 = vunpack.c.l.b16 %v2405
        %v2809 = vunpack.c.h.b16 %v2405
        %v2810 = vpack.c.b16 %v2562, %v2554
        %v2811 = vpack.c.b16 %v2563, %v2555
        %v2812 = vpack.c.b16 %v2564, %v2556
        %v2813 = vpack.c.b16 %v2565, %v2557
        %v2814 = vpack.c.b16 %v2566, %v2558
        %v2815 = vpack.c.b16 %v2567, %v2559
        %v2816 = vpack.c.b16 %v2568, %v2560
        %v2817 = vpack.c.b16 %v2569, %v2561
        %v2818 = vpack.c.b16 %v2578, %v2570
        %v2819 = vpack.c.b16 %v2579, %v2571
        %v2820 = vpack.c.b16 %v2580, %v2572
        %v2821 = vpack.c.b16 %v2581, %v2573
        %v2822 = vpack.c.b16 %v2582, %v2574
        %v2823 = vpack.c.b16 %v2583, %v2575
        %v2824 = vpack.c.b16 %v2584, %v2576
        %v2825 = vpack.c.b16 %v2585, %v2577
        %v2826 = vpack.c.b16 %v2594, %v2586
        %v2827 = vpack.c.b16 %v2595, %v2587
        %v2828 = vpack.c.b16 %v2596, %v2588
        %v2829 = vpack.c.b16 %v2597, %v2589
        %v2830 = vpack.c.b16 %v2598, %v2590
        %v2831 = vpack.c.b16 %v2599, %v2591
        %v2832 = vpack.c.b16 %v2600, %v2592
        %v2833 = vpack.c.b16 %v2601, %v2593
        %v2834 = vpack.c.b16 %v2610, %v2602
        %v2835 = vpack.c.b16 %v2611, %v2603
        %v2836 = vpack.c.b16 %v2612, %v2604
        %v2837 = vpack.c.b16 %v2613, %v2605
        %v2838 = vpack.c.b16 %v2614, %v2606
        %v2839 = vpack.c.b16 %v2615, %v2607
        %v2840 = vpack.c.b16 %v2616, %v2608
        %v2841 = vpack.c.b16 %v2617, %v2609
        %v2842 = vpack.c.b16 %v2626, %v2618
        %v2843 = vpack.c.b16 %v2627, %v2619
        %v2844 = vpack.c.b16 %v2628, %v2620
        %v2845 = vpack.c.b16 %v2629, %v2621
        %v2846 = vpack.c.b16 %v2630, %v2622
        %v2847 = vpack.c.b16 %v2631, %v2623
        %v2848 = vpack.c.b16 %v2632, %v2624
        %v2849 = vpack.c.b16 %v2633, %v2625
        %v2850 = vpack.c.b16 %v2642, %v2634
        %v2851 = vpack.c.b16 %v2643, %v2635
        %v2852 = vpack.c.b16 %v2644, %v2636
        %v2853 = vpack.c.b16 %v2645, %v2637
        %v2854 = vpack.c.b16 %v2646, %v2638
        %v2855 = vpack.c.b16 %v2647, %v2639
        %v2856 = vpack.c.b16 %v2648, %v2640
        %v2857 = vpack.c.b16 %v2649, %v2641
        %v2858 = vpack.c.b16 %v2658, %v2650
        %v2859 = vpack.c.b16 %v2659, %v2651
        %v2860 = vpack.c.b16 %v2660, %v2652
        %v2861 = vpack.c.b16 %v2661, %v2653
        %v2862 = vpack.c.b16 %v2662, %v2654
        %v2863 = vpack.c.b16 %v2663, %v2655
        %v2864 = vpack.c.b16 %v2664, %v2656
        %v2865 = vpack.c.b16 %v2665, %v2657
        %v2866 = vpack.c.b16 %v2674, %v2666
        %v2867 = vpack.c.b16 %v2675, %v2667
        %v2868 = vpack.c.b16 %v2676, %v2668
        %v2869 = vpack.c.b16 %v2677, %v2669
        %v2870 = vpack.c.b16 %v2678, %v2670
        %v2871 = vpack.c.b16 %v2679, %v2671
        %v2872 = vpack.c.b16 %v2680, %v2672
        %v2873 = vpack.c.b16 %v2681, %v2673
        %v2874 = vpack.c.b16 %v2690, %v2682
        %v2875 = vpack.c.b16 %v2691, %v2683
        %v2876 = vpack.c.b16 %v2692, %v2684
        %v2877 = vpack.c.b16 %v2693, %v2685
        %v2878 = vpack.c.b16 %v2694, %v2686
        %v2879 = vpack.c.b16 %v2695, %v2687
        %v2880 = vpack.c.b16 %v2696, %v2688
        %v2881 = vpack.c.b16 %v2697, %v2689
        %v2882 = vpack.c.b16 %v2706, %v2698
        %v2883 = vpack.c.b16 %v2707, %v2699
        %v2884 = vpack.c.b16 %v2708, %v2700
        %v2885 = vpack.c.b16 %v2709, %v2701
        %v2886 = vpack.c.b16 %v2710, %v2702
        %v2887 = vpack.c.b16 %v2711, %v2703
        %v2888 = vpack.c.b16 %v2712, %v2704
        %v2889 = vpack.c.b16 %v2713, %v2705
        %v2890 = vpack.c.b16 %v2722, %v2714
        %v2891 = vpack.c.b16 %v2723, %v2715
        %v2892 = vpack.c.b16 %v2724, %v2716
        %v2893 = vpack.c.b16 %v2725, %v2717
        %v2894 = vpack.c.b16 %v2726, %v2718
        %v2895 = vpack.c.b16 %v2727, %v2719
        %v2896 = vpack.c.b16 %v2728, %v2720
        %v2897 = vpack.c.b16 %v2729, %v2721
        %v2898 = vpack.c.b16 %v2738, %v2730
        %v2899 = vpack.c.b16 %v2739, %v2731
        %v2900 = vpack.c.b16 %v2740, %v2732
        %v2901 = vpack.c.b16 %v2741, %v2733
        %v2902 = vpack.c.b16 %v2742, %v2734
        %v2903 = vpack.c.b16 %v2743, %v2735
        %v2904 = vpack.c.b16 %v2744, %v2736
        %v2905 = vpack.c.b16 %v2745, %v2737
        %v2906 = vpack.c.b16 %v2754, %v2746
        %v2907 = vpack.c.b16 %v2755, %v2747
        %v2908 = vpack.c.b16 %v2756, %v2748
        %v2909 = vpack.c.b16 %v2757, %v2749
        %v2910 = vpack.c.b16 %v2758, %v2750
        %v2911 = vpack.c.b16 %v2759, %v2751
        %v2912 = vpack.c.b16 %v2760, %v2752
        %v2913 = vpack.c.b16 %v2761, %v2753
        %v2914 = vpack.c.b16 %v2770, %v2762
        %v2915 = vpack.c.b16 %v2771, %v2763
        %v2916 = vpack.c.b16 %v2772, %v2764
        %v2917 = vpack.c.b16 %v2773, %v2765
        %v2918 = vpack.c.b16 %v2774, %v2766
        %v2919 = vpack.c.b16 %v2775, %v2767
        %v2920 = vpack.c.b16 %v2776, %v2768
        %v2921 = vpack.c.b16 %v2777, %v2769
        %v2922 = vpack.c.b16 %v2786, %v2778
        %v2923 = vpack.c.b16 %v2787, %v2779
        %v2924 = vpack.c.b16 %v2788, %v2780
        %v2925 = vpack.c.b16 %v2789, %v2781
        %v2926 = vpack.c.b16 %v2790, %v2782
        %v2927 = vpack.c.b16 %v2791, %v2783
        %v2928 = vpack.c.b16 %v2792, %v2784
        %v2929 = vpack.c.b16 %v2793, %v2785
        %v2930 = vpack.c.b16 %v2802, %v2794
        %v2931 = vpack.c.b16 %v2803, %v2795
        %v2932 = vpack.c.b16 %v2804, %v2796
        %v2933 = vpack.c.b16 %v2805, %v2797
        %v2934 = vpack.c.b16 %v2806, %v2798
        %v2935 = vpack.c.b16 %v2807, %v2799
        %v2936 = vpack.c.b16 %v2808, %v2800
        %v2937 = vpack.c.b16 %v2809, %v2801
        %3066 = vmatpush.bf16.msra.mxu0 %v2866
        %3067 = vmatpush.bf16.msra.mxu0 %v2858
        %3068 = vmatpush.bf16.msra.mxu0 %v2850
        %3069 = vmatpush.bf16.msra.mxu0 %v2842
        %3070 = vmatpush.bf16.msra.mxu0 %v2834
        %3071 = vmatpush.bf16.msra.mxu0 %v2826
        %3072 = vmatpush.bf16.msra.mxu0 %v2818
        %3073 = vmatpush.bf16.msra.mxu0 %v2810
        %3074 = vmatmul.bf16.gmra.mxu0 %v2406
        %v3075 = vpop.f32.mrf.mxu0
        %v3076 = vadd.f32 %v2410, %v3075
        %v3077 = vpop.f32.mrf.mxu0
        %3078 = vdwg.mxu0
        %3079 = vmatpush.bf16.msra.mxu0 %v2930
        %3080 = vmatpush.bf16.msra.mxu0 %v2922
        %3081 = vmatpush.bf16.msra.mxu0 %v2914
        %3082 = vmatpush.bf16.msra.mxu0 %v2906
        %3083 = vmatpush.bf16.msra.mxu0 %v2898
        %3084 = vmatpush.bf16.msra.mxu0 %v2890
        %3085 = vmatpush.bf16.msra.mxu0 %v2882
        %3086 = vmatpush.bf16.msra.mxu0 %v2874
        %3087 = vmatmul.bf16.gmra.mxu0 %v2407
        %v3088 = vpop.f32.mrf.mxu0
        %v3089 = vadd.f32 %v3076, %v3088
        %v3090 = vpop.f32.mrf.mxu0
        %3091 = vdwg.mxu0
        %3092 = vmatpush.bf16.msra.mxu0 %v2867
        %3093 = vmatpush.bf16.msra.mxu0 %v2859
        %3094 = vmatpush.bf16.msra.mxu0 %v2851
        %3095 = vmatpush.bf16.msra.mxu0 %v2843
        %3096 = vmatpush.bf16.msra.mxu0 %v2835
        %3097 = vmatpush.bf16.msra.mxu0 %v2827
        %3098 = vmatpush.bf16.msra.mxu0 %v2819
        %3099 = vmatpush.bf16.msra.mxu0 %v2811
        %3100 = vmatmul.bf16.gmra.mxu0 %v2406
        %v3101 = vpop.f32.mrf.mxu0
        %v3102 = vadd.f32 %v2411, %v3101
        %v3103 = vpop.f32.mrf.mxu0
        %3104 = vdwg.mxu0
        %3105 = vmatpush.bf16.msra.mxu0 %v2931
        %3106 = vmatpush.bf16.msra.mxu0 %v2923
        %3107 = vmatpush.bf16.msra.mxu0 %v2915
        %3108 = vmatpush.bf16.msra.mxu0 %v2907
        %3109 = vmatpush.bf16.msra.mxu0 %v2899
        %3110 = vmatpush.bf16.msra.mxu0 %v2891
        %3111 = vmatpush.bf16.msra.mxu0 %v2883
        %3112 = vmatpush.bf16.msra.mxu0 %v2875
        %3113 = vmatmul.bf16.gmra.mxu0 %v2407
        %v3114 = vpop.f32.mrf.mxu0
        %v3115 = vadd.f32 %v3102, %v3114
        %v3116 = vpop.f32.mrf.mxu0
        %3117 = vdwg.mxu0
        %3118 = vmatpush.bf16.msra.mxu0 %v2868
        %3119 = vmatpush.bf16.msra.mxu0 %v2860
        %3120 = vmatpush.bf16.msra.mxu0 %v2852
        %3121 = vmatpush.bf16.msra.mxu0 %v2844
        %3122 = vmatpush.bf16.msra.mxu0 %v2836
        %3123 = vmatpush.bf16.msra.mxu0 %v2828
        %3124 = vmatpush.bf16.msra.mxu0 %v2820
        %3125 = vmatpush.bf16.msra.mxu0 %v2812
        %3126 = vmatmul.bf16.gmra.mxu0 %v2406
        %v3127 = vpop.f32.mrf.mxu0
        %v3128 = vadd.f32 %v2412, %v3127
        %v3129 = vpop.f32.mrf.mxu0
        %3130 = vdwg.mxu0
        %3131 = vmatpush.bf16.msra.mxu0 %v2932
        %3132 = vmatpush.bf16.msra.mxu0 %v2924
        %3133 = vmatpush.bf16.msra.mxu0 %v2916
        %3134 = vmatpush.bf16.msra.mxu0 %v2908
        %3135 = vmatpush.bf16.msra.mxu0 %v2900
        %3136 = vmatpush.bf16.msra.mxu0 %v2892
        %3137 = vmatpush.bf16.msra.mxu0 %v2884
        %3138 = vmatpush.bf16.msra.mxu0 %v2876
        %3139 = vmatmul.bf16.gmra.mxu0 %v2407
        %v3140 = vpop.f32.mrf.mxu0
        %v3141 = vadd.f32 %v3128, %v3140
        %v3142 = vpop.f32.mrf.mxu0
        %3143 = vdwg.mxu0
        %3144 = vmatpush.bf16.msra.mxu0 %v2869
        %3145 = vmatpush.bf16.msra.mxu0 %v2861
        %3146 = vmatpush.bf16.msra.mxu0 %v2853
        %3147 = vmatpush.bf16.msra.mxu0 %v2845
        %3148 = vmatpush.bf16.msra.mxu0 %v2837
        %3149 = vmatpush.bf16.msra.mxu0 %v2829
        %3150 = vmatpush.bf16.msra.mxu0 %v2821
        %3151 = vmatpush.bf16.msra.mxu0 %v2813
        %3152 = vmatmul.bf16.gmra.mxu0 %v2406
        %v3153 = vpop.f32.mrf.mxu0
        %v3154 = vadd.f32 %v2413, %v3153
        %v3155 = vpop.f32.mrf.mxu0
        %3156 = vdwg.mxu0
        %3157 = vmatpush.bf16.msra.mxu0 %v2933
        %3158 = vmatpush.bf16.msra.mxu0 %v2925
        %3159 = vmatpush.bf16.msra.mxu0 %v2917
        %3160 = vmatpush.bf16.msra.mxu0 %v2909
        %3161 = vmatpush.bf16.msra.mxu0 %v2901
        %3162 = vmatpush.bf16.msra.mxu0 %v2893
        %3163 = vmatpush.bf16.msra.mxu0 %v2885
        %3164 = vmatpush.bf16.msra.mxu0 %v2877
        %3165 = vmatmul.bf16.gmra.mxu0 %v2407
        %v3166 = vpop.f32.mrf.mxu0
        %v3167 = vadd.f32 %v3154, %v3166
        %v3168 = vpop.f32.mrf.mxu0
        %3169 = vdwg.mxu0
        %3170 = vmatpush.bf16.msra.mxu0 %v2870
        %3171 = vmatpush.bf16.msra.mxu0 %v2862
        %3172 = vmatpush.bf16.msra.mxu0 %v2854
        %3173 = vmatpush.bf16.msra.mxu0 %v2846
        %3174 = vmatpush.bf16.msra.mxu0 %v2838
        %3175 = vmatpush.bf16.msra.mxu0 %v2830
        %3176 = vmatpush.bf16.msra.mxu0 %v2822
        %3177 = vmatpush.bf16.msra.mxu0 %v2814
        %3178 = vmatmul.bf16.gmra.mxu0 %v2406
        %v3179 = vpop.f32.mrf.mxu0
        %v3180 = vadd.f32 %v2414, %v3179
        %v3181 = vpop.f32.mrf.mxu0
        %3182 = vdwg.mxu0
        %3183 = vmatpush.bf16.msra.mxu0 %v2934
        %3184 = vmatpush.bf16.msra.mxu0 %v2926
        %3185 = vmatpush.bf16.msra.mxu0 %v2918
        %3186 = vmatpush.bf16.msra.mxu0 %v2910
        %3187 = vmatpush.bf16.msra.mxu0 %v2902
        %3188 = vmatpush.bf16.msra.mxu0 %v2894
        %3189 = vmatpush.bf16.msra.mxu0 %v2886
        %3190 = vmatpush.bf16.msra.mxu0 %v2878
        %3191 = vmatmul.bf16.gmra.mxu0 %v2407
        %v3192 = vpop.f32.mrf.mxu0
        %v3193 = vadd.f32 %v3180, %v3192
        %v3194 = vpop.f32.mrf.mxu0
        %3195 = vdwg.mxu0
        %3196 = vmatpush.bf16.msra.mxu0 %v2871
        %3197 = vmatpush.bf16.msra.mxu0 %v2863
        %3198 = vmatpush.bf16.msra.mxu0 %v2855
        %3199 = vmatpush.bf16.msra.mxu0 %v2847
        %3200 = vmatpush.bf16.msra.mxu0 %v2839
        %3201 = vmatpush.bf16.msra.mxu0 %v2831
        %3202 = vmatpush.bf16.msra.mxu0 %v2823
        %3203 = vmatpush.bf16.msra.mxu0 %v2815
        %3204 = vmatmul.bf16.gmra.mxu0 %v2406
        %v3205 = vpop.f32.mrf.mxu0
        %v3206 = vadd.f32 %v2415, %v3205
        %v3207 = vpop.f32.mrf.mxu0
        %3208 = vdwg.mxu0
        %3209 = vmatpush.bf16.msra.mxu0 %v2935
        %3210 = vmatpush.bf16.msra.mxu0 %v2927
        %3211 = vmatpush.bf16.msra.mxu0 %v2919
        %3212 = vmatpush.bf16.msra.mxu0 %v2911
        %3213 = vmatpush.bf16.msra.mxu0 %v2903
        %3214 = vmatpush.bf16.msra.mxu0 %v2895
        %3215 = vmatpush.bf16.msra.mxu0 %v2887
        %3216 = vmatpush.bf16.msra.mxu0 %v2879
        %3217 = vmatmul.bf16.gmra.mxu0 %v2407
        %v3218 = vpop.f32.mrf.mxu0
        %v3219 = vadd.f32 %v3206, %v3218
        %v3220 = vpop.f32.mrf.mxu0
        %3221 = vdwg.mxu0
        %3222 = vmatpush.bf16.msra.mxu0 %v2872
        %3223 = vmatpush.bf16.msra.mxu0 %v2864
        %3224 = vmatpush.bf16.msra.mxu0 %v2856
        %3225 = vmatpush.bf16.msra.mxu0 %v2848
        %3226 = vmatpush.bf16.msra.mxu0 %v2840
        %3227 = vmatpush.bf16.msra.mxu0 %v2832
        %3228 = vmatpush.bf16.msra.mxu0 %v2824
        %3229 = vmatpush.bf16.msra.mxu0 %v2816
        %3230 = vmatmul.bf16.gmra.mxu0 %v2406
        %v3231 = vpop.f32.mrf.mxu0
        %v3232 = vadd.f32 %v2416, %v3231
        %v3233 = vpop.f32.mrf.mxu0
        %3234 = vdwg.mxu0
        %3235 = vmatpush.bf16.msra.mxu0 %v2936
        %3236 = vmatpush.bf16.msra.mxu0 %v2928
        %3237 = vmatpush.bf16.msra.mxu0 %v2920
        %3238 = vmatpush.bf16.msra.mxu0 %v2912
        %3239 = vmatpush.bf16.msra.mxu0 %v2904
        %3240 = vmatpush.bf16.msra.mxu0 %v2896
        %3241 = vmatpush.bf16.msra.mxu0 %v2888
        %3242 = vmatpush.bf16.msra.mxu0 %v2880
        %3243 = vmatmul.bf16.gmra.mxu0 %v2407
        %v3244 = vpop.f32.mrf.mxu0
        %v3245 = vadd.f32 %v3232, %v3244
        %v3246 = vpop.f32.mrf.mxu0
        %3247 = vdwg.mxu0
        %3248 = vmatpush.bf16.msra.mxu0 %v2873
        %3249 = vmatpush.bf16.msra.mxu0 %v2865
        %3250 = vmatpush.bf16.msra.mxu0 %v2857
        %3251 = vmatpush.bf16.msra.mxu0 %v2849
        %3252 = vmatpush.bf16.msra.mxu0 %v2841
        %3253 = vmatpush.bf16.msra.mxu0 %v2833
        %3254 = vmatpush.bf16.msra.mxu0 %v2825
        %3255 = vmatpush.bf16.msra.mxu0 %v2817
        %3256 = vmatmul.bf16.gmra.mxu0 %v2406
        %v3257 = vpop.f32.mrf.mxu0
        %v3258 = vadd.f32 %v2417, %v3257
        %v3259 = vpop.f32.mrf.mxu0
        %3260 = vdwg.mxu0
        %3261 = vmatpush.bf16.msra.mxu0 %v2937
        %3262 = vmatpush.bf16.msra.mxu0 %v2929
        %3263 = vmatpush.bf16.msra.mxu0 %v2921
        %3264 = vmatpush.bf16.msra.mxu0 %v2913
        %3265 = vmatpush.bf16.msra.mxu0 %v2905
        %3266 = vmatpush.bf16.msra.mxu0 %v2897
        %3267 = vmatpush.bf16.msra.mxu0 %v2889
        %3268 = vmatpush.bf16.msra.mxu0 %v2881
        %3269 = vmatmul.bf16.gmra.mxu0 %v2407
        %v3270 = vpop.f32.mrf.mxu0
        %v3271 = vadd.f32 %v3258, %v3270
        %v3272 = vpop.f32.mrf.mxu0
        %3273 = vdwg.mxu0
        %v3274 = vmax.f32 %v3089, 0.0
        %v3275 = vmax.f32 %v3115, 0.0
        %v3276 = vmax.f32 %v3141, 0.0
        %v3277 = vmax.f32 %v3167, 0.0
        %v3278 = vmax.f32 %v3193, 0.0
        %v3279 = vmax.f32 %v3219, 0.0
        %v3280 = vmax.f32 %v3245, 0.0
        %v3281 = vmax.f32 %v3271, 0.0
        %v3282 = vld [vmem:[%s763] sm:$0xff]
        %v3283 = vld [vmem:[%s763 + $0x8] sm:$0xff]
        %v3284 = vld [vmem:[%s763 + $0x10] sm:$0xff]
        %v3285 = vld [vmem:[%s763 + $0x18] sm:$0xff]
        %v3286 = vld [vmem:[%s763 + $0x20] sm:$0xff]
        %v3287 = vld [vmem:[%s763 + $0x28] sm:$0xff]
        %v3288 = vld [vmem:[%s763 + $0x30] sm:$0xff]
        %v3289 = vld [vmem:[%s763 + $0x38] sm:$0xff]
        %v3290 = vld [vmem:[%s763 + $0x40] sm:$0xff]
        %v3291 = vld [vmem:[%s763 + $0x48] sm:$0xff]
        %v3292 = vld [vmem:[%s763 + $0x50] sm:$0xff]
        %v3293 = vld [vmem:[%s763 + $0x58] sm:$0xff]
        %v3294 = vld [vmem:[%s763 + $0x60] sm:$0xff]
        %v3295 = vld [vmem:[%s763 + $0x68] sm:$0xff]
        %v3296 = vld [vmem:[%s763 + $0x70] sm:$0xff]
        %v3297 = vld [vmem:[%s763 + $0x78] sm:$0xff]
        %v3298 = vld [vmem:[%s763 + $0x80] sm:$0xff]
        %v3299 = vld [vmem:[%s763 + $0x88] sm:$0xff]
        %v3300 = vld [vmem:[%s763 + $0x90] sm:$0xff]
        %v3301 = vld [vmem:[%s763 + $0x98] sm:$0xff]
        %v3302 = vld [vmem:[%s763 + $0xa0] sm:$0xff]
        %v3303 = vld [vmem:[%s763 + $0xa8] sm:$0xff]
        %v3304 = vld [vmem:[%s763 + $0xb0] sm:$0xff]
        %v3305 = vld [vmem:[%s763 + $0xb8] sm:$0xff]
        %v3306 = vld [vmem:[%s763 + $0xc0] sm:$0xff]
        %v3307 = vld [vmem:[%s763 + $0xc8] sm:$0xff]
        %v3308 = vld [vmem:[%s763 + $0xd0] sm:$0xff]
        %v3309 = vld [vmem:[%s763 + $0xd8] sm:$0xff]
        %v3310 = vld [vmem:[%s763 + $0xe0] sm:$0xff]
        %v3311 = vld [vmem:[%s763 + $0xe8] sm:$0xff]
        %v3312 = vld [vmem:[%s763 + $0xf0] sm:$0xff]
        %v3313 = vld [vmem:[%s763 + $0xf8] sm:$0xff]
        %v3314 = vld [vmem:[%s763 + $0x100] sm:$0xff]
        %v3315 = vld [vmem:[%s763 + $0x108] sm:$0xff]
        %v3316 = vld [vmem:[%s763 + $0x110] sm:$0xff]
        %v3317 = vld [vmem:[%s763 + $0x118] sm:$0xff]
        %v3318 = vld [vmem:[%s763 + $0x120] sm:$0xff]
        %v3319 = vld [vmem:[%s763 + $0x128] sm:$0xff]
        %v3320 = vld [vmem:[%s763 + $0x130] sm:$0xff]
        %v3321 = vld [vmem:[%s763 + $0x138] sm:$0xff]
        %v3322 = vld [vmem:[%s763 + $0x140] sm:$0xff]
        %v3323 = vld [vmem:[%s763 + $0x148] sm:$0xff]
        %v3324 = vld [vmem:[%s763 + $0x150] sm:$0xff]
        %v3325 = vld [vmem:[%s763 + $0x158] sm:$0xff]
        %v3326 = vld [vmem:[%s763 + $0x160] sm:$0xff]
        %v3327 = vld [vmem:[%s763 + $0x168] sm:$0xff]
        %v3328 = vld [vmem:[%s763 + $0x170] sm:$0xff]
        %v3329 = vld [vmem:[%s763 + $0x178] sm:$0xff]
        %v3330 = vld [vmem:[%s763 + $0x180] sm:$0xff]
        %v3331 = vld [vmem:[%s763 + $0x188] sm:$0xff]
        %v3332 = vld [vmem:[%s763 + $0x190] sm:$0xff]
        %v3333 = vld [vmem:[%s763 + $0x198] sm:$0xff]
        %v3334 = vld [vmem:[%s763 + $0x1a0] sm:$0xff]
        %v3335 = vld [vmem:[%s763 + $0x1a8] sm:$0xff]
        %v3336 = vld [vmem:[%s763 + $0x1b0] sm:$0xff]
        %v3337 = vld [vmem:[%s763 + $0x1b8] sm:$0xff]
        %v3338 = vld [vmem:[%s763 + $0x1c0] sm:$0xff]
        %v3339 = vld [vmem:[%s763 + $0x1c8] sm:$0xff]
        %v3340 = vld [vmem:[%s763 + $0x1d0] sm:$0xff]
        %v3341 = vld [vmem:[%s763 + $0x1d8] sm:$0xff]
        %v3342 = vld [vmem:[%s763 + $0x1e0] sm:$0xff]
        %v3343 = vld [vmem:[%s763 + $0x1e8] sm:$0xff]
        %v3344 = vld [vmem:[%s763 + $0x1f0] sm:$0xff]
        %v3345 = vld [vmem:[%s763 + $0x1f8] sm:$0xff]
        %v3346 = vld [vmem:[%s763 + $0x200] sm:$0xff]
        %v3347 = vld [vmem:[%s763 + $0x208] sm:$0xff]
        %v3348 = vld [vmem:[%s763 + $0x210] sm:$0xff]
        %v3349 = vld [vmem:[%s763 + $0x218] sm:$0xff]
        %v3350 = vld [vmem:[%s763 + $0x220] sm:$0xff]
        %v3351 = vld [vmem:[%s763 + $0x228] sm:$0xff]
        %v3352 = vld [vmem:[%s763 + $0x230] sm:$0xff]
        %v3353 = vld [vmem:[%s763 + $0x238] sm:$0xff]
        %v3354 = vld [vmem:[%s763 + $0x240] sm:$0xff]
        %v3355 = vld [vmem:[%s763 + $0x248] sm:$0xff]
        %v3356 = vld [vmem:[%s763 + $0x250] sm:$0xff]
        %v3357 = vld [vmem:[%s763 + $0x258] sm:$0xff]
        %v3358 = vld [vmem:[%s763 + $0x260] sm:$0xff]
        %v3359 = vld [vmem:[%s763 + $0x268] sm:$0xff]
        %v3360 = vld [vmem:[%s763 + $0x270] sm:$0xff]
        %v3361 = vld [vmem:[%s763 + $0x278] sm:$0xff]
        %v3362 = vld [vmem:[%s763 + $0x280] sm:$0xff]
        %v3363 = vld [vmem:[%s763 + $0x288] sm:$0xff]
        %v3364 = vld [vmem:[%s763 + $0x290] sm:$0xff]
        %v3365 = vld [vmem:[%s763 + $0x298] sm:$0xff]
        %v3366 = vld [vmem:[%s763 + $0x2a0] sm:$0xff]
        %v3367 = vld [vmem:[%s763 + $0x2a8] sm:$0xff]
        %v3368 = vld [vmem:[%s763 + $0x2b0] sm:$0xff]
        %v3369 = vld [vmem:[%s763 + $0x2b8] sm:$0xff]
        %v3370 = vld [vmem:[%s763 + $0x2c0] sm:$0xff]
        %v3371 = vld [vmem:[%s763 + $0x2c8] sm:$0xff]
        %v3372 = vld [vmem:[%s763 + $0x2d0] sm:$0xff]
        %v3373 = vld [vmem:[%s763 + $0x2d8] sm:$0xff]
        %v3374 = vld [vmem:[%s763 + $0x2e0] sm:$0xff]
        %v3375 = vld [vmem:[%s763 + $0x2e8] sm:$0xff]
        %v3376 = vld [vmem:[%s763 + $0x2f0] sm:$0xff]
        %v3377 = vld [vmem:[%s763 + $0x2f8] sm:$0xff]
        %v3378 = vld [vmem:[%s763 + $0x300] sm:$0xff]
        %v3379 = vld [vmem:[%s763 + $0x308] sm:$0xff]
        %v3380 = vld [vmem:[%s763 + $0x310] sm:$0xff]
        %v3381 = vld [vmem:[%s763 + $0x318] sm:$0xff]
        %v3382 = vld [vmem:[%s763 + $0x320] sm:$0xff]
        %v3383 = vld [vmem:[%s763 + $0x328] sm:$0xff]
        %v3384 = vld [vmem:[%s763 + $0x330] sm:$0xff]
        %v3385 = vld [vmem:[%s763 + $0x338] sm:$0xff]
        %v3386 = vld [vmem:[%s763 + $0x340] sm:$0xff]
        %v3387 = vld [vmem:[%s763 + $0x348] sm:$0xff]
        %v3388 = vld [vmem:[%s763 + $0x350] sm:$0xff]
        %v3389 = vld [vmem:[%s763 + $0x358] sm:$0xff]
        %v3390 = vld [vmem:[%s763 + $0x360] sm:$0xff]
        %v3391 = vld [vmem:[%s763 + $0x368] sm:$0xff]
        %v3392 = vld [vmem:[%s763 + $0x370] sm:$0xff]
        %v3393 = vld [vmem:[%s763 + $0x378] sm:$0xff]
        %v3394 = vld [vmem:[%s763 + $0x380] sm:$0xff]
        %v3395 = vld [vmem:[%s763 + $0x388] sm:$0xff]
        %v3396 = vld [vmem:[%s763 + $0x390] sm:$0xff]
        %v3397 = vld [vmem:[%s763 + $0x398] sm:$0xff]
        %v3398 = vld [vmem:[%s763 + $0x3a0] sm:$0xff]
        %v3399 = vld [vmem:[%s763 + $0x3a8] sm:$0xff]
        %v3400 = vld [vmem:[%s763 + $0x3b0] sm:$0xff]
        %v3401 = vld [vmem:[%s763 + $0x3b8] sm:$0xff]
        %v3402 = vld [vmem:[%s763 + $0x3c0] sm:$0xff]
        %v3403 = vld [vmem:[%s763 + $0x3c8] sm:$0xff]
        %v3404 = vld [vmem:[%s763 + $0x3d0] sm:$0xff]
        %v3405 = vld [vmem:[%s763 + $0x3d8] sm:$0xff]
        %v3406 = vld [vmem:[%s763 + $0x3e0] sm:$0xff]
        %v3407 = vld [vmem:[%s763 + $0x3e8] sm:$0xff]
        %v3408 = vld [vmem:[%s763 + $0x3f0] sm:$0xff]
        %v3409 = vld [vmem:[%s763 + $0x3f8] sm:$0xff]
        %v3410 = vpack.c.bf16 %v3274, %v3274
        %v3411 = vpack.c.bf16 %v3275, %v3275
        %v3412 = vpack.c.bf16 %v3276, %v3276
        %v3413 = vpack.c.bf16 %v3277, %v3277
        %v3414 = vpack.c.bf16 %v3278, %v3278
        %v3415 = vpack.c.bf16 %v3279, %v3279
        %v3416 = vpack.c.bf16 %v3280, %v3280
        %v3417 = vpack.c.bf16 %v3281, %v3281
        %v3418 = vld [vmem:[%s773] sm:$0x3]
        %v3420 = vperm.slane %v3418, 0
        %v3421 = vperm.slane %v3418, 1
        %v3552 = vunpack.c.l.b16 %v3282
        %v3553 = vunpack.c.h.b16 %v3282
        %v3554 = vunpack.c.l.b16 %v3283
        %v3555 = vunpack.c.h.b16 %v3283
        %v3556 = vunpack.c.l.b16 %v3284
        %v3557 = vunpack.c.h.b16 %v3284
        %v3558 = vunpack.c.l.b16 %v3285
        %v3559 = vunpack.c.h.b16 %v3285
        %v3560 = vunpack.c.l.b16 %v3286
        %v3561 = vunpack.c.h.b16 %v3286
        %v3562 = vunpack.c.l.b16 %v3287
        %v3563 = vunpack.c.h.b16 %v3287
        %v3564 = vunpack.c.l.b16 %v3288
        %v3565 = vunpack.c.h.b16 %v3288
        %v3566 = vunpack.c.l.b16 %v3289
        %v3567 = vunpack.c.h.b16 %v3289
        %v3568 = vunpack.c.l.b16 %v3290
        %v3569 = vunpack.c.h.b16 %v3290
        %v3570 = vunpack.c.l.b16 %v3291
        %v3571 = vunpack.c.h.b16 %v3291
        %v3572 = vunpack.c.l.b16 %v3292
        %v3573 = vunpack.c.h.b16 %v3292
        %v3574 = vunpack.c.l.b16 %v3293
        %v3575 = vunpack.c.h.b16 %v3293
        %v3576 = vunpack.c.l.b16 %v3294
        %v3577 = vunpack.c.h.b16 %v3294
        %v3578 = vunpack.c.l.b16 %v3295
        %v3579 = vunpack.c.h.b16 %v3295
        %v3580 = vunpack.c.l.b16 %v3296
        %v3581 = vunpack.c.h.b16 %v3296
        %v3582 = vunpack.c.l.b16 %v3297
        %v3583 = vunpack.c.h.b16 %v3297
        %v3584 = vunpack.c.l.b16 %v3298
        %v3585 = vunpack.c.h.b16 %v3298
        %v3586 = vunpack.c.l.b16 %v3299
        %v3587 = vunpack.c.h.b16 %v3299
        %v3588 = vunpack.c.l.b16 %v3300
        %v3589 = vunpack.c.h.b16 %v3300
        %v3590 = vunpack.c.l.b16 %v3301
        %v3591 = vunpack.c.h.b16 %v3301
        %v3592 = vunpack.c.l.b16 %v3302
        %v3593 = vunpack.c.h.b16 %v3302
        %v3594 = vunpack.c.l.b16 %v3303
        %v3595 = vunpack.c.h.b16 %v3303
        %v3596 = vunpack.c.l.b16 %v3304
        %v3597 = vunpack.c.h.b16 %v3304
        %v3598 = vunpack.c.l.b16 %v3305
        %v3599 = vunpack.c.h.b16 %v3305
        %v3600 = vunpack.c.l.b16 %v3306
        %v3601 = vunpack.c.h.b16 %v3306
        %v3602 = vunpack.c.l.b16 %v3307
        %v3603 = vunpack.c.h.b16 %v3307
        %v3604 = vunpack.c.l.b16 %v3308
        %v3605 = vunpack.c.h.b16 %v3308
        %v3606 = vunpack.c.l.b16 %v3309
        %v3607 = vunpack.c.h.b16 %v3309
        %v3608 = vunpack.c.l.b16 %v3310
        %v3609 = vunpack.c.h.b16 %v3310
        %v3610 = vunpack.c.l.b16 %v3311
        %v3611 = vunpack.c.h.b16 %v3311
        %v3612 = vunpack.c.l.b16 %v3312
        %v3613 = vunpack.c.h.b16 %v3312
        %v3614 = vunpack.c.l.b16 %v3313
        %v3615 = vunpack.c.h.b16 %v3313
        %v3616 = vunpack.c.l.b16 %v3314
        %v3617 = vunpack.c.h.b16 %v3314
        %v3618 = vunpack.c.l.b16 %v3315
        %v3619 = vunpack.c.h.b16 %v3315
        %v3620 = vunpack.c.l.b16 %v3316
        %v3621 = vunpack.c.h.b16 %v3316
        %v3622 = vunpack.c.l.b16 %v3317
        %v3623 = vunpack.c.h.b16 %v3317
        %v3624 = vunpack.c.l.b16 %v3318
        %v3625 = vunpack.c.h.b16 %v3318
        %v3626 = vunpack.c.l.b16 %v3319
        %v3627 = vunpack.c.h.b16 %v3319
        %v3628 = vunpack.c.l.b16 %v3320
        %v3629 = vunpack.c.h.b16 %v3320
        %v3630 = vunpack.c.l.b16 %v3321
        %v3631 = vunpack.c.h.b16 %v3321
        %v3632 = vunpack.c.l.b16 %v3322
        %v3633 = vunpack.c.h.b16 %v3322
        %v3634 = vunpack.c.l.b16 %v3323
        %v3635 = vunpack.c.h.b16 %v3323
        %v3636 = vunpack.c.l.b16 %v3324
        %v3637 = vunpack.c.h.b16 %v3324
        %v3638 = vunpack.c.l.b16 %v3325
        %v3639 = vunpack.c.h.b16 %v3325
        %v3640 = vunpack.c.l.b16 %v3326
        %v3641 = vunpack.c.h.b16 %v3326
        %v3642 = vunpack.c.l.b16 %v3327
        %v3643 = vunpack.c.h.b16 %v3327
        %v3644 = vunpack.c.l.b16 %v3328
        %v3645 = vunpack.c.h.b16 %v3328
        %v3646 = vunpack.c.l.b16 %v3329
        %v3647 = vunpack.c.h.b16 %v3329
        %v3648 = vunpack.c.l.b16 %v3330
        %v3649 = vunpack.c.h.b16 %v3330
        %v3650 = vunpack.c.l.b16 %v3331
        %v3651 = vunpack.c.h.b16 %v3331
        %v3652 = vunpack.c.l.b16 %v3332
        %v3653 = vunpack.c.h.b16 %v3332
        %v3654 = vunpack.c.l.b16 %v3333
        %v3655 = vunpack.c.h.b16 %v3333
        %v3656 = vunpack.c.l.b16 %v3334
        %v3657 = vunpack.c.h.b16 %v3334
        %v3658 = vunpack.c.l.b16 %v3335
        %v3659 = vunpack.c.h.b16 %v3335
        %v3660 = vunpack.c.l.b16 %v3336
        %v3661 = vunpack.c.h.b16 %v3336
        %v3662 = vunpack.c.l.b16 %v3337
        %v3663 = vunpack.c.h.b16 %v3337
        %v3664 = vunpack.c.l.b16 %v3338
        %v3665 = vunpack.c.h.b16 %v3338
        %v3666 = vunpack.c.l.b16 %v3339
        %v3667 = vunpack.c.h.b16 %v3339
        %v3668 = vunpack.c.l.b16 %v3340
        %v3669 = vunpack.c.h.b16 %v3340
        %v3670 = vunpack.c.l.b16 %v3341
        %v3671 = vunpack.c.h.b16 %v3341
        %v3672 = vunpack.c.l.b16 %v3342
        %v3673 = vunpack.c.h.b16 %v3342
        %v3674 = vunpack.c.l.b16 %v3343
        %v3675 = vunpack.c.h.b16 %v3343
        %v3676 = vunpack.c.l.b16 %v3344
        %v3677 = vunpack.c.h.b16 %v3344
        %v3678 = vunpack.c.l.b16 %v3345
        %v3679 = vunpack.c.h.b16 %v3345
        %v3680 = vunpack.c.l.b16 %v3346
        %v3681 = vunpack.c.h.b16 %v3346
        %v3682 = vunpack.c.l.b16 %v3347
        %v3683 = vunpack.c.h.b16 %v3347
        %v3684 = vunpack.c.l.b16 %v3348
        %v3685 = vunpack.c.h.b16 %v3348
        %v3686 = vunpack.c.l.b16 %v3349
        %v3687 = vunpack.c.h.b16 %v3349
        %v3688 = vunpack.c.l.b16 %v3350
        %v3689 = vunpack.c.h.b16 %v3350
        %v3690 = vunpack.c.l.b16 %v3351
        %v3691 = vunpack.c.h.b16 %v3351
        %v3692 = vunpack.c.l.b16 %v3352
        %v3693 = vunpack.c.h.b16 %v3352
        %v3694 = vunpack.c.l.b16 %v3353
        %v3695 = vunpack.c.h.b16 %v3353
        %v3696 = vunpack.c.l.b16 %v3354
        %v3697 = vunpack.c.h.b16 %v3354
        %v3698 = vunpack.c.l.b16 %v3355
        %v3699 = vunpack.c.h.b16 %v3355
        %v3700 = vunpack.c.l.b16 %v3356
        %v3701 = vunpack.c.h.b16 %v3356
        %v3702 = vunpack.c.l.b16 %v3357
        %v3703 = vunpack.c.h.b16 %v3357
        %v3704 = vunpack.c.l.b16 %v3358
        %v3705 = vunpack.c.h.b16 %v3358
        %v3706 = vunpack.c.l.b16 %v3359
        %v3707 = vunpack.c.h.b16 %v3359
        %v3708 = vunpack.c.l.b16 %v3360
        %v3709 = vunpack.c.h.b16 %v3360
        %v3710 = vunpack.c.l.b16 %v3361
        %v3711 = vunpack.c.h.b16 %v3361
        %v3712 = vunpack.c.l.b16 %v3362
        %v3713 = vunpack.c.h.b16 %v3362
        %v3714 = vunpack.c.l.b16 %v3363
        %v3715 = vunpack.c.h.b16 %v3363
        %v3716 = vunpack.c.l.b16 %v3364
        %v3717 = vunpack.c.h.b16 %v3364
        %v3718 = vunpack.c.l.b16 %v3365
        %v3719 = vunpack.c.h.b16 %v3365
        %v3720 = vunpack.c.l.b16 %v3366
        %v3721 = vunpack.c.h.b16 %v3366
        %v3722 = vunpack.c.l.b16 %v3367
        %v3723 = vunpack.c.h.b16 %v3367
        %v3724 = vunpack.c.l.b16 %v3368
        %v3725 = vunpack.c.h.b16 %v3368
        %v3726 = vunpack.c.l.b16 %v3369
        %v3727 = vunpack.c.h.b16 %v3369
        %v3728 = vunpack.c.l.b16 %v3370
        %v3729 = vunpack.c.h.b16 %v3370
        %v3730 = vunpack.c.l.b16 %v3371
        %v3731 = vunpack.c.h.b16 %v3371
        %v3732 = vunpack.c.l.b16 %v3372
        %v3733 = vunpack.c.h.b16 %v3372
        %v3734 = vunpack.c.l.b16 %v3373
        %v3735 = vunpack.c.h.b16 %v3373
        %v3736 = vunpack.c.l.b16 %v3374
        %v3737 = vunpack.c.h.b16 %v3374
        %v3738 = vunpack.c.l.b16 %v3375
        %v3739 = vunpack.c.h.b16 %v3375
        %v3740 = vunpack.c.l.b16 %v3376
        %v3741 = vunpack.c.h.b16 %v3376
        %v3742 = vunpack.c.l.b16 %v3377
        %v3743 = vunpack.c.h.b16 %v3377
        %v3744 = vunpack.c.l.b16 %v3378
        %v3745 = vunpack.c.h.b16 %v3378
        %v3746 = vunpack.c.l.b16 %v3379
        %v3747 = vunpack.c.h.b16 %v3379
        %v3748 = vunpack.c.l.b16 %v3380
        %v3749 = vunpack.c.h.b16 %v3380
        %v3750 = vunpack.c.l.b16 %v3381
        %v3751 = vunpack.c.h.b16 %v3381
        %v3752 = vunpack.c.l.b16 %v3382
        %v3753 = vunpack.c.h.b16 %v3382
        %v3754 = vunpack.c.l.b16 %v3383
        %v3755 = vunpack.c.h.b16 %v3383
        %v3756 = vunpack.c.l.b16 %v3384
        %v3757 = vunpack.c.h.b16 %v3384
        %v3758 = vunpack.c.l.b16 %v3385
        %v3759 = vunpack.c.h.b16 %v3385
        %v3760 = vunpack.c.l.b16 %v3386
        %v3761 = vunpack.c.h.b16 %v3386
        %v3762 = vunpack.c.l.b16 %v3387
        %v3763 = vunpack.c.h.b16 %v3387
        %v3764 = vunpack.c.l.b16 %v3388
        %v3765 = vunpack.c.h.b16 %v3388
        %v3766 = vunpack.c.l.b16 %v3389
        %v3767 = vunpack.c.h.b16 %v3389
        %v3768 = vunpack.c.l.b16 %v3390
        %v3769 = vunpack.c.h.b16 %v3390
        %v3770 = vunpack.c.l.b16 %v3391
        %v3771 = vunpack.c.h.b16 %v3391
        %v3772 = vunpack.c.l.b16 %v3392
        %v3773 = vunpack.c.h.b16 %v3392
        %v3774 = vunpack.c.l.b16 %v3393
        %v3775 = vunpack.c.h.b16 %v3393
        %v3776 = vunpack.c.l.b16 %v3394
        %v3777 = vunpack.c.h.b16 %v3394
        %v3778 = vunpack.c.l.b16 %v3395
        %v3779 = vunpack.c.h.b16 %v3395
        %v3780 = vunpack.c.l.b16 %v3396
        %v3781 = vunpack.c.h.b16 %v3396
        %v3782 = vunpack.c.l.b16 %v3397
        %v3783 = vunpack.c.h.b16 %v3397
        %v3784 = vunpack.c.l.b16 %v3398
        %v3785 = vunpack.c.h.b16 %v3398
        %v3786 = vunpack.c.l.b16 %v3399
        %v3787 = vunpack.c.h.b16 %v3399
        %v3788 = vunpack.c.l.b16 %v3400
        %v3789 = vunpack.c.h.b16 %v3400
        %v3790 = vunpack.c.l.b16 %v3401
        %v3791 = vunpack.c.h.b16 %v3401
        %v3792 = vunpack.c.l.b16 %v3402
        %v3793 = vunpack.c.h.b16 %v3402
        %v3794 = vunpack.c.l.b16 %v3403
        %v3795 = vunpack.c.h.b16 %v3403
        %v3796 = vunpack.c.l.b16 %v3404
        %v3797 = vunpack.c.h.b16 %v3404
        %v3798 = vunpack.c.l.b16 %v3405
        %v3799 = vunpack.c.h.b16 %v3405
        %v3800 = vunpack.c.l.b16 %v3406
        %v3801 = vunpack.c.h.b16 %v3406
        %v3802 = vunpack.c.l.b16 %v3407
        %v3803 = vunpack.c.h.b16 %v3407
        %v3804 = vunpack.c.l.b16 %v3408
        %v3805 = vunpack.c.h.b16 %v3408
        %v3806 = vunpack.c.l.b16 %v3409
        %v3807 = vunpack.c.h.b16 %v3409
        %v3808 = vpack.c.b16 %v3554, %v3552
        %v3809 = vpack.c.b16 %v3555, %v3553
        %v3810 = vpack.c.b16 %v3558, %v3556
        %v3811 = vpack.c.b16 %v3559, %v3557
        %v3812 = vpack.c.b16 %v3562, %v3560
        %v3813 = vpack.c.b16 %v3563, %v3561
        %v3814 = vpack.c.b16 %v3566, %v3564
        %v3815 = vpack.c.b16 %v3567, %v3565
        %v3816 = vpack.c.b16 %v3570, %v3568
        %v3817 = vpack.c.b16 %v3571, %v3569
        %v3818 = vpack.c.b16 %v3574, %v3572
        %v3819 = vpack.c.b16 %v3575, %v3573
        %v3820 = vpack.c.b16 %v3578, %v3576
        %v3821 = vpack.c.b16 %v3579, %v3577
        %v3822 = vpack.c.b16 %v3582, %v3580
        %v3823 = vpack.c.b16 %v3583, %v3581
        %v3824 = vpack.c.b16 %v3586, %v3584
        %v3825 = vpack.c.b16 %v3587, %v3585
        %v3826 = vpack.c.b16 %v3590, %v3588
        %v3827 = vpack.c.b16 %v3591, %v3589
        %v3828 = vpack.c.b16 %v3594, %v3592
        %v3829 = vpack.c.b16 %v3595, %v3593
        %v3830 = vpack.c.b16 %v3598, %v3596
        %v3831 = vpack.c.b16 %v3599, %v3597
        %v3832 = vpack.c.b16 %v3602, %v3600
        %v3833 = vpack.c.b16 %v3603, %v3601
        %v3834 = vpack.c.b16 %v3606, %v3604
        %v3835 = vpack.c.b16 %v3607, %v3605
        %v3836 = vpack.c.b16 %v3610, %v3608
        %v3837 = vpack.c.b16 %v3611, %v3609
        %v3838 = vpack.c.b16 %v3614, %v3612
        %v3839 = vpack.c.b16 %v3615, %v3613
        %v3840 = vpack.c.b16 %v3618, %v3616
        %v3841 = vpack.c.b16 %v3619, %v3617
        %v3842 = vpack.c.b16 %v3622, %v3620
        %v3843 = vpack.c.b16 %v3623, %v3621
        %v3844 = vpack.c.b16 %v3626, %v3624
        %v3845 = vpack.c.b16 %v3627, %v3625
        %v3846 = vpack.c.b16 %v3630, %v3628
        %v3847 = vpack.c.b16 %v3631, %v3629
        %v3848 = vpack.c.b16 %v3634, %v3632
        %v3849 = vpack.c.b16 %v3635, %v3633
        %v3850 = vpack.c.b16 %v3638, %v3636
        %v3851 = vpack.c.b16 %v3639, %v3637
        %v3852 = vpack.c.b16 %v3642, %v3640
        %v3853 = vpack.c.b16 %v3643, %v3641
        %v3854 = vpack.c.b16 %v3646, %v3644
        %v3855 = vpack.c.b16 %v3647, %v3645
        %v3856 = vpack.c.b16 %v3650, %v3648
        %v3857 = vpack.c.b16 %v3651, %v3649
        %v3858 = vpack.c.b16 %v3654, %v3652
        %v3859 = vpack.c.b16 %v3655, %v3653
        %v3860 = vpack.c.b16 %v3658, %v3656
        %v3861 = vpack.c.b16 %v3659, %v3657
        %v3862 = vpack.c.b16 %v3662, %v3660
        %v3863 = vpack.c.b16 %v3663, %v3661
        %v3864 = vpack.c.b16 %v3666, %v3664
        %v3865 = vpack.c.b16 %v3667, %v3665
        %v3866 = vpack.c.b16 %v3670, %v3668
        %v3867 = vpack.c.b16 %v3671, %v3669
        %v3868 = vpack.c.b16 %v3674, %v3672
        %v3869 = vpack.c.b16 %v3675, %v3673
        %v3870 = vpack.c.b16 %v3678, %v3676
        %v3871 = vpack.c.b16 %v3679, %v3677
        %v3872 = vpack.c.b16 %v3682, %v3680
        %v3873 = vpack.c.b16 %v3683, %v3681
        %v3874 = vpack.c.b16 %v3686, %v3684
        %v3875 = vpack.c.b16 %v3687, %v3685
        %v3876 = vpack.c.b16 %v3690, %v3688
        %v3877 = vpack.c.b16 %v3691, %v3689
        %v3878 = vpack.c.b16 %v3694, %v3692
        %v3879 = vpack.c.b16 %v3695, %v3693
        %v3880 = vpack.c.b16 %v3698, %v3696
        %v3881 = vpack.c.b16 %v3699, %v3697
        %v3882 = vpack.c.b16 %v3702, %v3700
        %v3883 = vpack.c.b16 %v3703, %v3701
        %v3884 = vpack.c.b16 %v3706, %v3704
        %v3885 = vpack.c.b16 %v3707, %v3705
        %v3886 = vpack.c.b16 %v3710, %v3708
        %v3887 = vpack.c.b16 %v3711, %v3709
        %v3888 = vpack.c.b16 %v3714, %v3712
        %v3889 = vpack.c.b16 %v3715, %v3713
        %v3890 = vpack.c.b16 %v3718, %v3716
        %v3891 = vpack.c.b16 %v3719, %v3717
        %v3892 = vpack.c.b16 %v3722, %v3720
        %v3893 = vpack.c.b16 %v3723, %v3721
        %v3894 = vpack.c.b16 %v3726, %v3724
        %v3895 = vpack.c.b16 %v3727, %v3725
        %v3896 = vpack.c.b16 %v3730, %v3728
        %v3897 = vpack.c.b16 %v3731, %v3729
        %v3898 = vpack.c.b16 %v3734, %v3732
        %v3899 = vpack.c.b16 %v3735, %v3733
        %v3900 = vpack.c.b16 %v3738, %v3736
        %v3901 = vpack.c.b16 %v3739, %v3737
        %v3902 = vpack.c.b16 %v3742, %v3740
        %v3903 = vpack.c.b16 %v3743, %v3741
        %v3904 = vpack.c.b16 %v3746, %v3744
        %v3905 = vpack.c.b16 %v3747, %v3745
        %v3906 = vpack.c.b16 %v3750, %v3748
        %v3907 = vpack.c.b16 %v3751, %v3749
        %v3908 = vpack.c.b16 %v3754, %v3752
        %v3909 = vpack.c.b16 %v3755, %v3753
        %v3910 = vpack.c.b16 %v3758, %v3756
        %v3911 = vpack.c.b16 %v3759, %v3757
        %v3912 = vpack.c.b16 %v3762, %v3760
        %v3913 = vpack.c.b16 %v3763, %v3761
        %v3914 = vpack.c.b16 %v3766, %v3764
        %v3915 = vpack.c.b16 %v3767, %v3765
        %v3916 = vpack.c.b16 %v3770, %v3768
        %v3917 = vpack.c.b16 %v3771, %v3769
        %v3918 = vpack.c.b16 %v3774, %v3772
        %v3919 = vpack.c.b16 %v3775, %v3773
        %v3920 = vpack.c.b16 %v3778, %v3776
        %v3921 = vpack.c.b16 %v3779, %v3777
        %v3922 = vpack.c.b16 %v3782, %v3780
        %v3923 = vpack.c.b16 %v3783, %v3781
        %v3924 = vpack.c.b16 %v3786, %v3784
        %v3925 = vpack.c.b16 %v3787, %v3785
        %v3926 = vpack.c.b16 %v3790, %v3788
        %v3927 = vpack.c.b16 %v3791, %v3789
        %v3928 = vpack.c.b16 %v3794, %v3792
        %v3929 = vpack.c.b16 %v3795, %v3793
        %v3930 = vpack.c.b16 %v3798, %v3796
        %v3931 = vpack.c.b16 %v3799, %v3797
        %v3932 = vpack.c.b16 %v3802, %v3800
        %v3933 = vpack.c.b16 %v3803, %v3801
        %v3934 = vpack.c.b16 %v3806, %v3804
        %v3935 = vpack.c.b16 %v3807, %v3805
        %4064 = vmatpush.bf16.msra.mxu0 %v3822
        %4065 = vmatpush.bf16.msra.mxu0 %v3820
        %4066 = vmatpush.bf16.msra.mxu0 %v3818
        %4067 = vmatpush.bf16.msra.mxu0 %v3816
        %4068 = vmatpush.bf16.msra.mxu0 %v3814
        %4069 = vmatpush.bf16.msra.mxu0 %v3812
        %4070 = vmatpush.bf16.msra.mxu0 %v3810
        %4071 = vmatpush.bf16.msra.mxu0 %v3808
        %4072 = vmatmul.bf16.gmra.mxu0 %v3410
        %v4073 = vpop.f32.mrf.mxu0
        %v4074 = vadd.f32 %v3420, %v4073
        %v4075 = vpop.f32.mrf.mxu0
        %4076 = vdwg.mxu0
        %4077 = vmatpush.bf16.msra.mxu0 %v3838
        %4078 = vmatpush.bf16.msra.mxu0 %v3836
        %4079 = vmatpush.bf16.msra.mxu0 %v3834
        %4080 = vmatpush.bf16.msra.mxu0 %v3832
        %4081 = vmatpush.bf16.msra.mxu0 %v3830
        %4082 = vmatpush.bf16.msra.mxu0 %v3828
        %4083 = vmatpush.bf16.msra.mxu0 %v3826
        %4084 = vmatpush.bf16.msra.mxu0 %v3824
        %4085 = vmatmul.bf16.gmra.mxu0 %v3411
        %v4086 = vpop.f32.mrf.mxu0
        %v4087 = vadd.f32 %v4074, %v4086
        %v4088 = vpop.f32.mrf.mxu0
        %4089 = vdwg.mxu0
        %4090 = vmatpush.bf16.msra.mxu0 %v3854
        %4091 = vmatpush.bf16.msra.mxu0 %v3852
        %4092 = vmatpush.bf16.msra.mxu0 %v3850
        %4093 = vmatpush.bf16.msra.mxu0 %v3848
        %4094 = vmatpush.bf16.msra.mxu0 %v3846
        %4095 = vmatpush.bf16.msra.mxu0 %v3844
        %4096 = vmatpush.bf16.msra.mxu0 %v3842
        %4097 = vmatpush.bf16.msra.mxu0 %v3840
        %4098 = vmatmul.bf16.gmra.mxu0 %v3412
        %v4099 = vpop.f32.mrf.mxu0
        %v4100 = vadd.f32 %v4087, %v4099
        %v4101 = vpop.f32.mrf.mxu0
        %4102 = vdwg.mxu0
        %4103 = vmatpush.bf16.msra.mxu0 %v3870
        %4104 = vmatpush.bf16.msra.mxu0 %v3868
        %4105 = vmatpush.bf16.msra.mxu0 %v3866
        %4106 = vmatpush.bf16.msra.mxu0 %v3864
        %4107 = vmatpush.bf16.msra.mxu0 %v3862
        %4108 = vmatpush.bf16.msra.mxu0 %v3860
        %4109 = vmatpush.bf16.msra.mxu0 %v3858
        %4110 = vmatpush.bf16.msra.mxu0 %v3856
        %4111 = vmatmul.bf16.gmra.mxu0 %v3413
        %v4112 = vpop.f32.mrf.mxu0
        %v4113 = vadd.f32 %v4100, %v4112
        %v4114 = vpop.f32.mrf.mxu0
        %4115 = vdwg.mxu0
        %4116 = vmatpush.bf16.msra.mxu0 %v3886
        %4117 = vmatpush.bf16.msra.mxu0 %v3884
        %4118 = vmatpush.bf16.msra.mxu0 %v3882
        %4119 = vmatpush.bf16.msra.mxu0 %v3880
        %4120 = vmatpush.bf16.msra.mxu0 %v3878
        %4121 = vmatpush.bf16.msra.mxu0 %v3876
        %4122 = vmatpush.bf16.msra.mxu0 %v3874
        %4123 = vmatpush.bf16.msra.mxu0 %v3872
        %4124 = vmatmul.bf16.gmra.mxu0 %v3414
        %v4125 = vpop.f32.mrf.mxu0
        %v4126 = vadd.f32 %v4113, %v4125
        %v4127 = vpop.f32.mrf.mxu0
        %4128 = vdwg.mxu0
        %4129 = vmatpush.bf16.msra.mxu0 %v3902
        %4130 = vmatpush.bf16.msra.mxu0 %v3900
        %4131 = vmatpush.bf16.msra.mxu0 %v3898
        %4132 = vmatpush.bf16.msra.mxu0 %v3896
        %4133 = vmatpush.bf16.msra.mxu0 %v3894
        %4134 = vmatpush.bf16.msra.mxu0 %v3892
        %4135 = vmatpush.bf16.msra.mxu0 %v3890
        %4136 = vmatpush.bf16.msra.mxu0 %v3888
        %4137 = vmatmul.bf16.gmra.mxu0 %v3415
        %v4138 = vpop.f32.mrf.mxu0
        %v4139 = vadd.f32 %v4126, %v4138
        %v4140 = vpop.f32.mrf.mxu0
        %4141 = vdwg.mxu0
        %4142 = vmatpush.bf16.msra.mxu0 %v3918
        %4143 = vmatpush.bf16.msra.mxu0 %v3916
        %4144 = vmatpush.bf16.msra.mxu0 %v3914
        %4145 = vmatpush.bf16.msra.mxu0 %v3912
        %4146 = vmatpush.bf16.msra.mxu0 %v3910
        %4147 = vmatpush.bf16.msra.mxu0 %v3908
        %4148 = vmatpush.bf16.msra.mxu0 %v3906
        %4149 = vmatpush.bf16.msra.mxu0 %v3904
        %4150 = vmatmul.bf16.gmra.mxu0 %v3416
        %v4151 = vpop.f32.mrf.mxu0
        %v4152 = vadd.f32 %v4139, %v4151
        %v4153 = vpop.f32.mrf.mxu0
        %4154 = vdwg.mxu0
        %4155 = vmatpush.bf16.msra.mxu0 %v3934
        %4156 = vmatpush.bf16.msra.mxu0 %v3932
        %4157 = vmatpush.bf16.msra.mxu0 %v3930
        %4158 = vmatpush.bf16.msra.mxu0 %v3928
        %4159 = vmatpush.bf16.msra.mxu0 %v3926
        %4160 = vmatpush.bf16.msra.mxu0 %v3924
        %4161 = vmatpush.bf16.msra.mxu0 %v3922
        %4162 = vmatpush.bf16.msra.mxu0 %v3920
        %4163 = vmatmul.bf16.gmra.mxu0 %v3417
        %v4164 = vpop.f32.mrf.mxu0
        %v4165 = vadd.f32 %v4152, %v4164
        %v4166 = vpop.f32.mrf.mxu0
        %4167 = vdwg.mxu0
        %4168 = vmatpush.bf16.msra.mxu0 %v3823
        %4169 = vmatpush.bf16.msra.mxu0 %v3821
        %4170 = vmatpush.bf16.msra.mxu0 %v3819
        %4171 = vmatpush.bf16.msra.mxu0 %v3817
        %4172 = vmatpush.bf16.msra.mxu0 %v3815
        %4173 = vmatpush.bf16.msra.mxu0 %v3813
        %4174 = vmatpush.bf16.msra.mxu0 %v3811
        %4175 = vmatpush.bf16.msra.mxu0 %v3809
        %4176 = vmatmul.bf16.gmra.mxu0 %v3410
        %v4177 = vpop.f32.mrf.mxu0
        %v4178 = vadd.f32 %v3421, %v4177
        %v4179 = vpop.f32.mrf.mxu0
        %4180 = vdwg.mxu0
        %4181 = vmatpush.bf16.msra.mxu0 %v3839
        %4182 = vmatpush.bf16.msra.mxu0 %v3837
        %4183 = vmatpush.bf16.msra.mxu0 %v3835
        %4184 = vmatpush.bf16.msra.mxu0 %v3833
        %4185 = vmatpush.bf16.msra.mxu0 %v3831
        %4186 = vmatpush.bf16.msra.mxu0 %v3829
        %4187 = vmatpush.bf16.msra.mxu0 %v3827
        %4188 = vmatpush.bf16.msra.mxu0 %v3825
        %4189 = vmatmul.bf16.gmra.mxu0 %v3411
        %v4190 = vpop.f32.mrf.mxu0
        %v4191 = vadd.f32 %v4178, %v4190
        %v4192 = vpop.f32.mrf.mxu0
        %4193 = vdwg.mxu0
        %4194 = vmatpush.bf16.msra.mxu0 %v3855
        %4195 = vmatpush.bf16.msra.mxu0 %v3853
        %4196 = vmatpush.bf16.msra.mxu0 %v3851
        %4197 = vmatpush.bf16.msra.mxu0 %v3849
        %4198 = vmatpush.bf16.msra.mxu0 %v3847
        %4199 = vmatpush.bf16.msra.mxu0 %v3845
        %4200 = vmatpush.bf16.msra.mxu0 %v3843
        %4201 = vmatpush.bf16.msra.mxu0 %v3841
        %4202 = vmatmul.bf16.gmra.mxu0 %v3412
        %v4203 = vpop.f32.mrf.mxu0
        %v4204 = vadd.f32 %v4191, %v4203
        %v4205 = vpop.f32.mrf.mxu0
        %4206 = vdwg.mxu0
        %4207 = vmatpush.bf16.msra.mxu0 %v3871
        %4208 = vmatpush.bf16.msra.mxu0 %v3869
        %4209 = vmatpush.bf16.msra.mxu0 %v3867
        %4210 = vmatpush.bf16.msra.mxu0 %v3865
        %4211 = vmatpush.bf16.msra.mxu0 %v3863
        %4212 = vmatpush.bf16.msra.mxu0 %v3861
        %4213 = vmatpush.bf16.msra.mxu0 %v3859
        %4214 = vmatpush.bf16.msra.mxu0 %v3857
        %4215 = vmatmul.bf16.gmra.mxu0 %v3413
        %v4216 = vpop.f32.mrf.mxu0
        %v4217 = vadd.f32 %v4204, %v4216
        %v4218 = vpop.f32.mrf.mxu0
        %4219 = vdwg.mxu0
        %4220 = vmatpush.bf16.msra.mxu0 %v3887
        %4221 = vmatpush.bf16.msra.mxu0 %v3885
        %4222 = vmatpush.bf16.msra.mxu0 %v3883
        %4223 = vmatpush.bf16.msra.mxu0 %v3881
        %4224 = vmatpush.bf16.msra.mxu0 %v3879
        %4225 = vmatpush.bf16.msra.mxu0 %v3877
        %4226 = vmatpush.bf16.msra.mxu0 %v3875
        %4227 = vmatpush.bf16.msra.mxu0 %v3873
        %4228 = vmatmul.bf16.gmra.mxu0 %v3414
        %v4229 = vpop.f32.mrf.mxu0
        %v4230 = vadd.f32 %v4217, %v4229
        %v4231 = vpop.f32.mrf.mxu0
        %4232 = vdwg.mxu0
        %4233 = vmatpush.bf16.msra.mxu0 %v3903
        %4234 = vmatpush.bf16.msra.mxu0 %v3901
        %4235 = vmatpush.bf16.msra.mxu0 %v3899
        %4236 = vmatpush.bf16.msra.mxu0 %v3897
        %4237 = vmatpush.bf16.msra.mxu0 %v3895
        %4238 = vmatpush.bf16.msra.mxu0 %v3893
        %4239 = vmatpush.bf16.msra.mxu0 %v3891
        %4240 = vmatpush.bf16.msra.mxu0 %v3889
        %4241 = vmatmul.bf16.gmra.mxu0 %v3415
        %v4242 = vpop.f32.mrf.mxu0
        %v4243 = vadd.f32 %v4230, %v4242
        %v4244 = vpop.f32.mrf.mxu0
        %4245 = vdwg.mxu0
        %4246 = vmatpush.bf16.msra.mxu0 %v3919
        %4247 = vmatpush.bf16.msra.mxu0 %v3917
        %4248 = vmatpush.bf16.msra.mxu0 %v3915
        %4249 = vmatpush.bf16.msra.mxu0 %v3913
        %4250 = vmatpush.bf16.msra.mxu0 %v3911
        %4251 = vmatpush.bf16.msra.mxu0 %v3909
        %4252 = vmatpush.bf16.msra.mxu0 %v3907
        %4253 = vmatpush.bf16.msra.mxu0 %v3905
        %4254 = vmatmul.bf16.gmra.mxu0 %v3416
        %v4255 = vpop.f32.mrf.mxu0
        %v4256 = vadd.f32 %v4243, %v4255
        %v4257 = vpop.f32.mrf.mxu0
        %4258 = vdwg.mxu0
        %4259 = vmatpush.bf16.msra.mxu0 %v3935
        %4260 = vmatpush.bf16.msra.mxu0 %v3933
        %4261 = vmatpush.bf16.msra.mxu0 %v3931
        %4262 = vmatpush.bf16.msra.mxu0 %v3929
        %4263 = vmatpush.bf16.msra.mxu0 %v3927
        %4264 = vmatpush.bf16.msra.mxu0 %v3925
        %4265 = vmatpush.bf16.msra.mxu0 %v3923
        %4266 = vmatpush.bf16.msra.mxu0 %v3921
        %4267 = vmatmul.bf16.gmra.mxu0 %v3417
        %v4268 = vpop.f32.mrf.mxu0
        %v4269 = vadd.f32 %v4256, %v4268
        %v4270 = vpop.f32.mrf.mxu0
        %4271 = vdwg.mxu0
        %v4272 = vadd.f32 %v2235, %v4165
        %v4273 = vadd.f32 %v2236, %v4269
        %4274 = vst [vmem:[%s869] sm:$0xff] %v4272
        %4275 = vst [vmem:[%s869 + $0x8] sm:$0xff] %v4273
        %s4276 = sand.u32 %s379, 1
        %s4277 = scalar_lea.sflag [#allocation4], %s4276
        %s4278 = sand.u32 %s379, 1
        %s4279 = smul.addr %s4278, 16
        %s4280 = scalar_lea.vmem [#allocation22], %s4279
        // Predicated region
        $region121: #{tpu_custom_call.1} parent=67 // pred_check
          %p4281 = pneg %p389
        $region122: #{tpu_custom_call.1} parent=67 // pred_check_branch
          %4283 = sbr.rel (%p4281) target = $region124
        $region123: #{tpu_custom_call.1} parent=67 // pred_region
          %4285 = vsyncadd %s4277, 0
          %s4286 = smul.addr %s51, 2
          %s4287 = smul.addr %s4286, 8
          %s4288 = scalar_lea.hbm %s12, %s4287
          %s4290 = sshll.u32 %s4280, 4
          %s4291 = int_to_ptr.vmem [resolvable:$true] %s4290
          %s4292 = sshll.u32 %s4288, 4
          %s4293 = int_to_ptr.hbm [resolvable:$true] %s4292
          %4295 = dma.vmem_to_hbm [thread:$0]  %s4291, 256, %s4293, %s4277
        $region124: #{tpu_custom_call.1} parent=67 // pred_fallthru
          _
      $region68: #{tpu_custom_call.1} parent=5 // pred_fallthru
        _
      %p4296 = scmp.le.s32.totalorder 2, %s42
      // Predicated region
      $region125: #{tpu_custom_call.1} parent=5 // pred_check
        %p4297 = pneg %p4296
      $region126: #{tpu_custom_call.1} parent=5 // pred_check_branch
        %4299 = sbr.rel (%p4297) target = $region128
      $region127: #{tpu_custom_call.1} parent=5 // pred_region
        %s4300 = ssub.s32 %s42, 2
        // Predicated region
        $region129: #{tpu_custom_call.1} parent=127 // pred_check
          %p4301 = pneg %p395
        $region130: #{tpu_custom_call.1} parent=127 // pred_check_branch
          %4303 = sbr.rel (%p4301) target = $region132
        $region131: #{tpu_custom_call.1} parent=127 // pred_region
          %s4304 = sand.u32 %s380, 1
          %s4305 = scalar_lea.sflag [#allocation4], %s4304
          %s4306 = sand.u32 %s380, 1
          %s4307 = smul.addr %s4306, 16
          %s4308 = scalar_lea.vmem [#allocation22], %s4307
          %4310 = dma.done %s4305, 256
        $region132: #{tpu_custom_call.1} parent=127 // pred_fallthru
          _
      $region128: #{tpu_custom_call.1} parent=5 // pred_fallthru
        _
    $region6: #{tpu_custom_call.1} parent=1 // loop_footer
      %s46 = sadd.s32 1, %s42
    $region7: #{tpu_custom_call.1} parent=1 // loop_footer_branch
      %41 = sbr.rel target = $region3
    $region8: #{tpu_custom_call.1} parent=1 // loop_exit
      _
    %4311 = vsyncpa [#allocation3], 1
    %s4312 = scalar_lea.sflag [#allocation3], 1
    %4313 = vsyncpa %s4312, 1
    %4314 = vsyncpa [#allocation6], 1
    %s4315 = scalar_lea.sflag [#allocation6], 1
    %4316 = vsyncpa %s4315, 1
    %4317 = vsyncpa [#allocation9], 1
    %s4318 = scalar_lea.sflag [#allocation9], 1
    %4319 = vsyncpa %s4318, 1
    %4320 = vsyncpa [#allocation12], 1
    %s4321 = scalar_lea.sflag [#allocation12], 1
    %4322 = vsyncpa %s4321, 1
    %4323 = vsyncpa [#allocation15], 1
    %s4324 = scalar_lea.sflag [#allocation15], 1
    %4325 = vsyncpa %s4324, 1
    %4326 = vsyncpa [#allocation18], 1
    %s4327 = scalar_lea.sflag [#allocation18], 1
    %4328 = vsyncpa %s4327, 1
    %4329 = vsyncpa [#allocation21], 1
    %s4330 = scalar_lea.sflag [#allocation21], 1
    %4331 = vsyncpa %s4330, 1
    %4332 = vsyncpa [#allocation4], 1
    %s4333 = scalar_lea.sflag [#allocation4], 1
    %4334 = vsyncpa %s4333, 1

</llo_original>
